<compile_context>
chip_gen: v7x
topology: tpu7x:2x2x1
jax: 0.10.0
libtpu: 0.0.40
codegen_flags: <defaults>
</compile_context>

<pallas_src>
import functools

import jax
import jax.numpy as jnp
from jax.experimental import pallas as pl
from jax.experimental.pallas import tpu as pltpu


# Row indices of the packed per-layer small vectors (biases / LayerNorm params).
_BQ, _BK, _BV, _BO, _C1, _C2, _G1, _BE1, _G2, _BE2 = range(10)
_NV = 10


def _layer_norm(y, g, b, eps=1e-5):
    mu = jnp.mean(y, axis=-1, keepdims=True)
    var = jnp.mean((y - mu) ** 2, axis=-1, keepdims=True)
    return (y - mu) * jax.lax.rsqrt(var + eps) * g + b


def fused_stack_kernel(num_heads, x_ref,
                       wq_ref, wk_ref, wv_ref, wo_ref, w1_ref, w2_ref,
                       vec_ref, out_ref):
    """One (batch-tile bt, layer l) grid step of the fused transformer stack.

    The activation for batch tile bt stays resident in out_ref across the
    'arbitrary' layer axis (output block index constant in l); each step reads
    it, applies one TransformerBlock, and writes it back.  The batch tile is
    folded into the matmul row dimension (M = batch_tile * S).
    """
    layer = pl.program_id(1)

    # First layer: seed the resident activation with the embedded input.
    @pl.when(layer == 0)
    def _():
        out_ref[...] = x_ref[...]

    Bt, S, E = out_ref.shape
    H = num_heads
    M = Bt * S
    F = w1_ref.shape[1]

    # Packed small vectors: one (NV, max(E,F)) f32 block per layer -> 1 DMA.
    bq = vec_ref[_BQ:_BQ + 1, :E]
    bk = vec_ref[_BK:_BK + 1, :E]
    bv = vec_ref[_BV:_BV + 1, :E]
    bo = vec_ref[_BO:_BO + 1, :E]
    c1 = vec_ref[_C1:_C1 + 1, :F]
    c2 = vec_ref[_C2:_C2 + 1, :E]
    g1 = vec_ref[_G1:_G1 + 1, :E]
    be1 = vec_ref[_BE1:_BE1 + 1, :E]
    g2 = vec_ref[_G2:_G2 + 1, :E]
    be2 = vec_ref[_BE2:_BE2 + 1, :E]

    x = out_ref[...].reshape(M, E)          # f32 carry (residuals / LN stats in f32)
    xb = x.astype(jnp.bfloat16)

    # QKV projections on the batch-folded rows: bf16 MXU inputs, f32 accumulation.
    # The reference 1/sqrt(head_dim) score scale is folded into wq / bq at init.
    q = jnp.dot(xb, wq_ref[...], preferred_element_type=jnp.float32) + bq
    k = jnp.dot(xb, wk_ref[...], preferred_element_type=jnp.float32) + bk
    v = jnp.dot(xb, wv_ref[...], preferred_element_type=jnp.float32) + bv

    # Cast to bf16 immediately, then restore the per-sequence (Bt, S, E) layout.
    qh = q.astype(jnp.bfloat16).reshape(Bt, S, E)
    kh = k.astype(jnp.bfloat16).reshape(Bt, S, E)
    vh = v.astype(jnp.bfloat16).reshape(Bt, S, E)

    # Reference semantics: heads split the *sequence* axis (position i belongs
    # to head i % H) and the score contraction runs over the full embed dim.
    # For small S (S/H << 128) one masked (S, S) score matmul per sequence is
    # lane-denser than H block-diagonal (S/H, S/H) blocks.
    s = jnp.einsum('bqe,bke->bqk', qh, kh,
                   preferred_element_type=jnp.float32)          # (Bt, S, S)
    ri = jax.lax.broadcasted_iota(jnp.int32, (S, S), 0)
    ci = jax.lax.broadcasted_iota(jnp.int32, (S, S), 1)
    same_head = (ri % H) == (ci % H)
    s = jnp.where(same_head[None, :, :], s, jnp.float32(-1e30))

    m = jnp.max(s, axis=-1, keepdims=True)
    e = jnp.exp(s - m)
    p = e * pl.reciprocal(jnp.sum(e, axis=-1, keepdims=True), approx=True)
    ctx = jnp.einsum('bqk,bke->bqe', p.astype(jnp.bfloat16), vh,
                     preferred_element_type=jnp.float32)        # (Bt, S, E)

    attn_out = jnp.dot(ctx.reshape(M, E).astype(jnp.bfloat16), wo_ref[...],
                       preferred_element_type=jnp.float32) + bo

    # Residual + LayerNorm 1 (dropout == identity), f32 statistics.
    x1 = _layer_norm(x + attn_out, g1, be1)

    # FFN: Linear -> ReLU -> Linear.
    h = jnp.maximum(
        jnp.dot(x1.astype(jnp.bfloat16), w1_ref[...],
                preferred_element_type=jnp.float32) + c1, 0.0)
    ffn = jnp.dot(h.astype(jnp.bfloat16), w2_ref[...],
                  preferred_element_type=jnp.float32) + c2

    # Residual + LayerNorm 2 -> carry for the next layer.
    out_ref[...] = _layer_norm(x1 + ffn, g2, be2).reshape(Bt, S, E)


def _pick_batch_tile(batch, seq, target_rows=256, min_tiles=2):
    """Largest divisor of batch giving >= min_tiles grid iterations (megacore
    on v7x) while keeping the folded rows (tile*seq) near the MXU target."""
    best = 1
    for t in range(1, batch + 1):
        if batch % t:
            continue
        if batch >= min_tiles and batch // t < min_tiles:
            continue
        if t * seq > max(target_rows, seq):
            continue
        best = t
    return best


def _stack_vmem_limit(bt, seq, e, f, nv):
    """Scoped-VMEM cap derived from shapes; clamped to v7x's 64 MiB physical
    ceiling (v5e/v6e have 128 MiB and could go higher at production sizes)."""
    w_bytes = (4 * e * e + 2 * e * f) * 2            # per-layer bf16 matmul weights
    vec_bytes = nv * max(e, f) * 4
    act_bytes = bt * seq * e * 4
    score_bytes = bt * seq * seq * 4
    need = 2 * (w_bytes + vec_bytes + 2 * act_bytes)  # double-buffered operands
    need += 12 * act_bytes + 4 * score_bytes + (2 << 20)  # in-kernel temporaries
    return int(min(max(need, 32 << 20), 64 << 20))


def transformer_stack(x, p, num_heads):
    """Runs all layers of one stack (encoder or decoder) in a single pallas_call."""
    B, S, E = x.shape
    L, _, F = p['w1'].shape
    bt = _pick_batch_tile(B, S)
    kern = functools.partial(fused_stack_kernel, num_heads)

    def wspec(name):
        _, a, c = p[name].shape
        return pl.BlockSpec((None, a, c), lambda b, l: (l, 0, 0))

    mats = ('wq', 'wk', 'wv', 'wo', 'w1', 'w2')
    in_specs = [pl.BlockSpec((bt, S, E), lambda b, l: (b, 0, 0))]
    in_specs += [wspec(n) for n in mats]
    in_specs += [wspec('vecs')]

    return pl.pallas_call(
        kern,
        out_shape=jax.ShapeDtypeStruct((B, S, E), jnp.float32),
        grid=(B // bt, L),
        in_specs=in_specs,
        out_specs=pl.BlockSpec((bt, S, E), lambda b, l: (b, 0, 0)),
        input_output_aliases={0: 0},
        compiler_params=pltpu.CompilerParams(
            dimension_semantics=("parallel", "arbitrary"),
            vmem_limit_bytes=_stack_vmem_limit(bt, S, E, F, _NV)),
    )(x, *[p[n] for n in mats], p['vecs'])


def out_proj_kernel(x_ref, w_ref, b_ref, o_ref, acc_ref):
    kk = pl.program_id(2)

    @pl.when(kk == 0)
    def _():
        acc_ref[...] = jnp.zeros_like(acc_ref)

    acc_ref[...] += jnp.dot(x_ref[...].astype(jnp.bfloat16), w_ref[...],
                            preferred_element_type=jnp.float32)

    @pl.when(kk == pl.num_programs(2) - 1)
    def _():
        o_ref[...] = acc_ref[...] + b_ref[...]


def out_proj(x2d, w, b, *, tm=128, tn=256, tk=512):
    """Final vocab projection on flattened (B*S, E) rows: lane-dense 256-wide
    vocab tiles, >= 2 row tiles (megacore), and a K-split f32 accumulator."""
    M, E = x2d.shape
    V = w.shape[1]
    tm, tn, tk = min(tm, M), min(tn, V), min(tk, E)
    return pl.pallas_call(
        out_proj_kernel,
        out_shape=jax.ShapeDtypeStruct((M, V), jnp.float32),
        grid=(pl.cdiv(M, tm), pl.cdiv(V, tn), pl.cdiv(E, tk)),
        in_specs=[pl.BlockSpec((tm, tk), lambda i, j, k: (i, k)),
                  pl.BlockSpec((tk, tn), lambda i, j, k: (k, j)),
                  pl.BlockSpec((1, tn), lambda i, j, k: (0, j))],
        out_specs=pl.BlockSpec((tm, tn), lambda i, j, k: (i, j)),
        scratch_shapes=[pltpu.VMEM((tm, tn), jnp.float32)],
        compiler_params=pltpu.CompilerParams(
            dimension_semantics=("parallel", "parallel", "arbitrary")),
    )(x2d, w, b)


def init_params(key, num_layers, embed_dim, ffn_hidden_dim, vocab_size,
                max_len, num_heads):
    scale = float((embed_dim // num_heads) ** -0.5)
    keys = iter(jax.random.split(key, 64))

    def nrm(shape, std=0.02):
        return (std * jax.random.normal(next(keys), shape)).astype(jnp.float32)

    def stack_params():
        L, E, F = num_layers, embed_dim, ffn_hidden_dim
        fmax = max(E, F)

        def pad(v):
            return jnp.pad(v, ((0, 0), (0, fmax - v.shape[1])))

        rows = [None] * _NV
        rows[_BQ] = pad(nrm((L, E)) * scale)          # score scale folded in
        rows[_BK] = pad(nrm((L, E)))
        rows[_BV] = pad(nrm((L, E)))
        rows[_BO] = pad(nrm((L, E)))
        rows[_C1] = pad(nrm((L, F)))
        rows[_C2] = pad(nrm((L, E)))
        rows[_G1] = pad(jnp.ones((L, E), jnp.float32))
        rows[_BE1] = pad(jnp.zeros((L, E), jnp.float32))
        rows[_G2] = pad(jnp.ones((L, E), jnp.float32))
        rows[_BE2] = pad(jnp.zeros((L, E), jnp.float32))
        vecs = jnp.stack(rows, axis=1)                # (L, NV, max(E,F)) f32

        return {
            # matmul weights stored bf16 (MXU-native, half the DMA bytes);
            # 1/sqrt(head_dim) folded into wq.
            'wq': (nrm((L, E, E)) * scale).astype(jnp.bfloat16),
            'wk': nrm((L, E, E)).astype(jnp.bfloat16),
            'wv': nrm((L, E, E)).astype(jnp.bfloat16),
            'wo': nrm((L, E, E)).astype(jnp.bfloat16),
            'w1': nrm((L, E, F)).astype(jnp.bfloat16),
            'w2': nrm((L, F, E)).astype(jnp.bfloat16),
            'vecs': vecs,
        }

    return {
        'embedding': nrm((vocab_size, embed_dim), std=1.0),
        'pos': nrm((max_len, embed_dim), std=1.0),
        'enc': stack_params(),
        'dec': stack_params(),
        'wout': nrm((embed_dim, vocab_size)).astype(jnp.bfloat16),
        'bout': nrm((1, vocab_size)),
    }


def transformer_forward(params, src, tgt, num_heads):
    B, src_len = src.shape
    _, tgt_len = tgt.shape
    emb, pos = params['embedding'], params['pos']

    # Glue: embedding gather + positional encoding (dropout == identity).
    s = emb[src] + pos[:src_len][None, :, :]
    t = emb[tgt] + pos[:tgt_len][None, :, :]

    s = transformer_stack(s, params['enc'], num_heads)
    t = transformer_stack(t, params['dec'], num_heads)
    # NOTE: faithful to the reference: the decoder stack never reads the
    # encoder output `s` (no cross-attention in the PyTorch module).
    del s

    logits = out_proj(t.reshape(B * tgt_len, -1), params['wout'], params['bout'])
    return logits.reshape(B, tgt_len, -1)


if __name__ == "__main__":
    # Small but lane/sublane-aligned shapes: E, F, V multiples of 128; batch
    # large enough that folded matmul rows (batch_tile*S) reach 128 and the
    # leading parallel grid axes have >= 2 iterations (megacore-friendly).
    num_layers, embed_dim, num_heads, ffn_hidden = 2, 128, 4, 256
    vocab_size, max_len = 256, 64
    batch, src_len, tgt_len = 8, 32, 32

    key = jax.random.PRNGKey(0)
    pkey, skey, tkey = jax.random.split(key, 3)
    params = init_params(pkey, num_layers, embed_dim, ffn_hidden,
                         vocab_size, max_len, num_heads)

    src = jax.random.randint(skey, (batch, src_len), 0, vocab_size, dtype=jnp.int32)
    tgt = jax.random.randint(tkey, (batch, tgt_len), 0, vocab_size, dtype=jnp.int32)

    fwd = jax.jit(transformer_forward, static_argnums=3)
    logits = fwd(params, src, tgt, num_heads)
    jax.block_until_ready(logits)
    assert logits.shape == (batch, tgt_len, vocab_size), logits.shape
    assert bool(jnp.all(jnp.isfinite(logits)))
    print("KERNEL_OK")
</pallas_src>

<mosaic_0001>
module attributes {stable_mosaic.version = 11 : i64} {
  func.func @out_proj_kernel(%arg0: i32, %arg1: i32, %arg2: i32, %arg3: memref<128x128xf32, #tpu.memory_space<vmem>>, %arg4: memref<128x256xbf16, #tpu.memory_space<vmem>>, %arg5: memref<1x256xf32, #tpu.memory_space<vmem>>, %arg6: memref<128x256xf32, #tpu.memory_space<vmem>>, %arg7: memref<128x256xf32, #tpu.memory_space<vmem>>) attributes {dimension_semantics = [#tpu.dimension_semantics<parallel>, #tpu.dimension_semantics<parallel>, #tpu.dimension_semantics<arbitrary>], iteration_bounds = array<i64: 2, 1, 1>, scalar_prefetch = 0 : i64, scratch_operands = 1 : i64, tpu.core_type = #tpu.core_type<tc>, window_params = [{transform_indices = @transform_0, window_bounds = array<i64: 128, 128>}, {transform_indices = @transform_1, window_bounds = array<i64: 128, 256>}, {transform_indices = @transform_2, window_bounds = array<i64: 1, 256>}, {transform_indices = @transform_3, window_bounds = array<i64: 128, 256>}]} {
    %c0_i32 = arith.constant 0 : i32
    %0 = arith.cmpi eq, %arg2, %c0_i32 : i32
    %1 = arith.extui %0 : i1 to i32
    %c0_i32_0 = arith.constant 0 : i32
    %2 = arith.cmpi ne, %1, %c0_i32_0 : i32
    scf.if %2 {
      %cst_10 = arith.constant 0.000000e+00 : f32
      %13 = vector.broadcast %cst_10 : f32 to vector<128x256xf32>
      %c0_11 = arith.constant 0 : index
      %c0_12 = arith.constant 0 : index
      %14 = vector.load %arg7[%c0_11, %c0_12] : memref<128x256xf32, #tpu.memory_space<vmem>>, vector<128x256xf32>
      tpu.vector_store %arg7[%c0_11, %c0_12], %13 {strides = array<i32>} : memref<128x256xf32, #tpu.memory_space<vmem>>, vector<128x256xf32>,
    } else {
    }
    %c0 = arith.constant 0 : index
    %c0_1 = arith.constant 0 : index
    %3 = vector.load %arg7[%c0, %c0_1] : memref<128x256xf32, #tpu.memory_space<vmem>>, vector<128x256xf32>
    %c0_2 = arith.constant 0 : index
    %c0_3 = arith.constant 0 : index
    %4 = vector.load %arg3[%c0_2, %c0_3] : memref<128x128xf32, #tpu.memory_space<vmem>>, vector<128x128xf32>
    %5 = arith.truncf %4 : vector<128x128xf32> to vector<128x128xbf16>
    %c0_4 = arith.constant 0 : index
    %c0_5 = arith.constant 0 : index
    %6 = vector.load %arg4[%c0_4, %c0_5] : memref<128x256xbf16, #tpu.memory_space<vmem>>, vector<128x256xbf16>
    %cst = arith.constant dense<0.000000e+00> : vector<128x256xf32>
    %7 = tpu.matmul %5, %6, %cst {dimension_numbers = #tpu.dot_dimension_numbers<[1], [0], [0], [1], [0, 0, 1, 1], [], []>} : vector<128x128xbf16>, vector<128x256xbf16>, vector<128x256xf32> -> vector<128x256xf32>
    %8 = arith.addf %3, %7 : vector<128x256xf32>
    %c0_6 = arith.constant 0 : index
    %c0_7 = arith.constant 0 : index
    %9 = vector.load %arg7[%c0_6, %c0_7] : memref<128x256xf32, #tpu.memory_space<vmem>>, vector<128x256xf32>
    tpu.vector_store %arg7[%c0_6, %c0_7], %8 {strides = array<i32>} : memref<128x256xf32, #tpu.memory_space<vmem>>, vector<128x256xf32>,
    %c0_i32_8 = arith.constant 0 : i32
    %10 = arith.cmpi eq, %arg2, %c0_i32_8 : i32
    %11 = arith.extui %10 : i1 to i32
    %c0_i32_9 = arith.constant 0 : i32
    %12 = arith.cmpi ne, %11, %c0_i32_9 : i32
    scf.if %12 {
      %c0_10 = arith.constant 0 : index
      %c0_11 = arith.constant 0 : index
      %13 = vector.load %arg7[%c0_10, %c0_11] : memref<128x256xf32, #tpu.memory_space<vmem>>, vector<128x256xf32>
      %c0_12 = arith.constant 0 : index
      %c0_13 = arith.constant 0 : index
      %14 = vector.load %arg5[%c0_12, %c0_13] : memref<1x256xf32, #tpu.memory_space<vmem>>, vector<1x256xf32>
      %15 = vector.broadcast %14 : vector<1x256xf32> to vector<128x256xf32>
      %16 = arith.addf %13, %15 : vector<128x256xf32>
      %c0_14 = arith.constant 0 : index
      %c0_15 = arith.constant 0 : index
      %17 = vector.load %arg6[%c0_14, %c0_15] : memref<128x256xf32, #tpu.memory_space<vmem>>, vector<128x256xf32>
      tpu.vector_store %arg6[%c0_14, %c0_15], %16 {strides = array<i32>} : memref<128x256xf32, #tpu.memory_space<vmem>>, vector<128x256xf32>,
    } else {
    }
    return
  }
  func.func @transform_0(%arg0: i32, %arg1: i32, %arg2: i32) -> (i32, i32) {
    %c0_i32 = arith.constant 0 : i32
    return %arg0, %arg2 : i32, i32
  }
  func.func @transform_1(%arg0: i32, %arg1: i32, %arg2: i32) -> (i32, i32) {
    %c0_i32 = arith.constant 0 : i32
    return %arg2, %arg1 : i32, i32
  }
  func.func @transform_2(%arg0: i32, %arg1: i32, %arg2: i32) -> (i32, i32) {
    %c0_i32 = arith.constant 0 : i32
    %c0_i32_0 = arith.constant 0 : i32
    return %c0_i32, %arg1 : i32, i32
  }
  func.func @transform_3(%arg0: i32, %arg1: i32, %arg2: i32) -> (i32, i32) {
    %c0_i32 = arith.constant 0 : i32
    return %arg0, %arg1 : i32, i32
  }
}

module attributes {stable_mosaic.version = 11 : i64} {
  func.func @fused_stack_kernel(%arg0: i32, %arg1: i32, %arg2: memref<4x32x128xf32, #tpu.memory_space<vmem>>, %arg3: memref<1x128x128xbf16, #tpu.memory_space<vmem>>, %arg4: memref<1x128x128xbf16, #tpu.memory_space<vmem>>, %arg5: memref<1x128x128xbf16, #tpu.memory_space<vmem>>, %arg6: memref<1x128x128xbf16, #tpu.memory_space<vmem>>, %arg7: memref<1x128x256xbf16, #tpu.memory_space<vmem>>, %arg8: memref<1x256x128xbf16, #tpu.memory_space<vmem>>, %arg9: memref<1x10x256xf32, #tpu.memory_space<vmem>>, %arg10: memref<4x32x128xf32, #tpu.memory_space<vmem>>) attributes {dimension_semantics = [#tpu.dimension_semantics<parallel>, #tpu.dimension_semantics<arbitrary>], iteration_bounds = array<i64: 2, 2>, scalar_prefetch = 0 : i64, scratch_operands = 0 : i64, tpu.core_type = #tpu.core_type<tc>, window_params = [{transform_indices = @transform_0, window_bounds = array<i64: 4, 32, 128>}, {transform_indices = @transform_1, window_bounds = array<i64: 1, 128, 128>}, {transform_indices = @transform_2, window_bounds = array<i64: 1, 128, 128>}, {transform_indices = @transform_3, window_bounds = array<i64: 1, 128, 128>}, {transform_indices = @transform_4, window_bounds = array<i64: 1, 128, 128>}, {transform_indices = @transform_5, window_bounds = array<i64: 1, 128, 256>}, {transform_indices = @transform_6, window_bounds = array<i64: 1, 256, 128>}, {transform_indices = @transform_7, window_bounds = array<i64: 1, 10, 256>}, {transform_indices = @transform_8, window_bounds = array<i64: 4, 32, 128>}]} {
    %c0_i32 = arith.constant 0 : i32
    %0 = arith.cmpi eq, %arg1, %c0_i32 : i32
    %1 = arith.extui %0 : i1 to i32
    %c0_i32_0 = arith.constant 0 : i32
    %2 = arith.cmpi ne, %1, %c0_i32_0 : i32
    scf.if %2 {
      %c0_76 = arith.constant 0 : index
      %c0_77 = arith.constant 0 : index
      %c0_78 = arith.constant 0 : index
      %169 = vector.load %arg2[%c0_76, %c0_77, %c0_78] : memref<4x32x128xf32, #tpu.memory_space<vmem>>, vector<4x32x128xf32>
      %c0_79 = arith.constant 0 : index
      %c0_80 = arith.constant 0 : index
      %c0_81 = arith.constant 0 : index
      %170 = vector.load %arg10[%c0_79, %c0_80, %c0_81] : memref<4x32x128xf32, #tpu.memory_space<vmem>>, vector<4x32x128xf32>
      tpu.vector_store %arg10[%c0_79, %c0_80, %c0_81], %169 {strides = array<i32>} : memref<4x32x128xf32, #tpu.memory_space<vmem>>, vector<4x32x128xf32>,
    } else {
    }
    %c0 = arith.constant 0 : index
    %c0_1 = arith.constant 0 : index
    %c0_2 = arith.constant 0 : index
    %3 = vector.load %arg9[%c0, %c0_1, %c0_2] : memref<1x10x256xf32, #tpu.memory_space<vmem>>, vector<1x1x128xf32>
    %4 = vector.shape_cast %3 : vector<1x1x128xf32> to vector<1x128xf32>
    %c0_3 = arith.constant 0 : index
    %c1 = arith.constant 1 : index
    %c0_4 = arith.constant 0 : index
    %5 = vector.load %arg9[%c0_3, %c1, %c0_4] : memref<1x10x256xf32, #tpu.memory_space<vmem>>, vector<1x1x128xf32>
    %6 = vector.shape_cast %5 : vector<1x1x128xf32> to vector<1x128xf32>
    %c0_5 = arith.constant 0 : index
    %c2 = arith.constant 2 : index
    %c0_6 = arith.constant 0 : index
    %7 = vector.load %arg9[%c0_5, %c2, %c0_6] : memref<1x10x256xf32, #tpu.memory_space<vmem>>, vector<1x1x128xf32>
    %8 = vector.shape_cast %7 : vector<1x1x128xf32> to vector<1x128xf32>
    %c0_7 = arith.constant 0 : index
    %c3 = arith.constant 3 : index
    %c0_8 = arith.constant 0 : index
    %9 = vector.load %arg9[%c0_7, %c3, %c0_8] : memref<1x10x256xf32, #tpu.memory_space<vmem>>, vector<1x1x128xf32>
    %10 = vector.shape_cast %9 : vector<1x1x128xf32> to vector<1x128xf32>
    %c0_9 = arith.constant 0 : index
    %c4 = arith.constant 4 : index
    %c0_10 = arith.constant 0 : index
    %11 = vector.load %arg9[%c0_9, %c4, %c0_10] : memref<1x10x256xf32, #tpu.memory_space<vmem>>, vector<1x1x256xf32>
    %12 = vector.shape_cast %11 : vector<1x1x256xf32> to vector<1x256xf32>
    %c0_11 = arith.constant 0 : index
    %c5 = arith.constant 5 : index
    %c0_12 = arith.constant 0 : index
    %13 = vector.load %arg9[%c0_11, %c5, %c0_12] : memref<1x10x256xf32, #tpu.memory_space<vmem>>, vector<1x1x128xf32>
    %14 = vector.shape_cast %13 : vector<1x1x128xf32> to vector<1x128xf32>
    %c0_13 = arith.constant 0 : index
    %c6 = arith.constant 6 : index
    %c0_14 = arith.constant 0 : index
    %15 = vector.load %arg9[%c0_13, %c6, %c0_14] : memref<1x10x256xf32, #tpu.memory_space<vmem>>, vector<1x1x128xf32>
    %16 = vector.shape_cast %15 : vector<1x1x128xf32> to vector<1x128xf32>
    %c0_15 = arith.constant 0 : index
    %c7 = arith.constant 7 : index
    %c0_16 = arith.constant 0 : index
    %17 = vector.load %arg9[%c0_15, %c7, %c0_16] : memref<1x10x256xf32, #tpu.memory_space<vmem>>, vector<1x1x128xf32>
    %18 = vector.shape_cast %17 : vector<1x1x128xf32> to vector<1x128xf32>
    %c0_17 = arith.constant 0 : index
    %c8 = arith.constant 8 : index
    %c0_18 = arith.constant 0 : index
    %19 = vector.load %arg9[%c0_17, %c8, %c0_18] : memref<1x10x256xf32, #tpu.memory_space<vmem>>, vector<1x1x128xf32>
    %20 = vector.shape_cast %19 : vector<1x1x128xf32> to vector<1x128xf32>
    %c0_19 = arith.constant 0 : index
    %c9 = arith.constant 9 : index
    %c0_20 = arith.constant 0 : index
    %21 = vector.load %arg9[%c0_19, %c9, %c0_20] : memref<1x10x256xf32, #tpu.memory_space<vmem>>, vector<1x1x128xf32>
    %22 = vector.shape_cast %21 : vector<1x1x128xf32> to vector<1x128xf32>
    %c0_21 = arith.constant 0 : index
    %c0_22 = arith.constant 0 : index
    %c0_23 = arith.constant 0 : index
    %23 = vector.load %arg10[%c0_21, %c0_22, %c0_23] : memref<4x32x128xf32, #tpu.memory_space<vmem>>, vector<4x32x128xf32>
    %24 = vector.shape_cast %23 : vector<4x32x128xf32> to vector<128x128xf32>
    %25 = arith.truncf %24 : vector<128x128xf32> to vector<128x128xbf16>
    %c0_24 = arith.constant 0 : index
    %c0_25 = arith.constant 0 : index
    %c0_26 = arith.constant 0 : index
    %26 = vector.load %arg3[%c0_24, %c0_25, %c0_26] : memref<1x128x128xbf16, #tpu.memory_space<vmem>>, vector<1x128x128xbf16>
    %27 = vector.shape_cast %26 : vector<1x128x128xbf16> to vector<128x128xbf16>
    %cst = arith.constant dense<0.000000e+00> : vector<128x128xf32>
    %28 = tpu.matmul %25, %27, %cst {dimension_numbers = #tpu.dot_dimension_numbers<[1], [0], [0], [1], [0, 0, 1, 1], [], []>} : vector<128x128xbf16>, vector<128x128xbf16>, vector<128x128xf32> -> vector<128x128xf32>
    %29 = vector.broadcast %4 : vector<1x128xf32> to vector<128x128xf32>
    %30 = arith.addf %28, %29 : vector<128x128xf32>
    %c0_27 = arith.constant 0 : index
    %c0_28 = arith.constant 0 : index
    %c0_29 = arith.constant 0 : index
    %31 = vector.load %arg4[%c0_27, %c0_28, %c0_29] : memref<1x128x128xbf16, #tpu.memory_space<vmem>>, vector<1x128x128xbf16>
    %32 = vector.shape_cast %31 : vector<1x128x128xbf16> to vector<128x128xbf16>
    %cst_30 = arith.constant dense<0.000000e+00> : vector<128x128xf32>
    %33 = tpu.matmul %25, %32, %cst_30 {dimension_numbers = #tpu.dot_dimension_numbers<[1], [0], [0], [1], [0, 0, 1, 1], [], []>} : vector<128x128xbf16>, vector<128x128xbf16>, vector<128x128xf32> -> vector<128x128xf32>
    %34 = vector.broadcast %6 : vector<1x128xf32> to vector<128x128xf32>
    %35 = arith.addf %33, %34 : vector<128x128xf32>
    %c0_31 = arith.constant 0 : index
    %c0_32 = arith.constant 0 : index
    %c0_33 = arith.constant 0 : index
    %36 = vector.load %arg5[%c0_31, %c0_32, %c0_33] : memref<1x128x128xbf16, #tpu.memory_space<vmem>>, vector<1x128x128xbf16>
    %37 = vector.shape_cast %36 : vector<1x128x128xbf16> to vector<128x128xbf16>
    %cst_34 = arith.constant dense<0.000000e+00> : vector<128x128xf32>
    %38 = tpu.matmul %25, %37, %cst_34 {dimension_numbers = #tpu.dot_dimension_numbers<[1], [0], [0], [1], [0, 0, 1, 1], [], []>} : vector<128x128xbf16>, vector<128x128xbf16>, vector<128x128xf32> -> vector<128x128xf32>
    %39 = vector.broadcast %8 : vector<1x128xf32> to vector<128x128xf32>
    %40 = arith.addf %38, %39 : vector<128x128xf32>
    %41 = arith.truncf %30 : vector<128x128xf32> to vector<128x128xbf16>
    %42 = vector.shape_cast %41 : vector<128x128xbf16> to vector<4x32x128xbf16>
    %43 = arith.truncf %35 : vector<128x128xf32> to vector<128x128xbf16>
    %44 = vector.shape_cast %43 : vector<128x128xbf16> to vector<4x32x128xbf16>
    %45 = arith.truncf %40 : vector<128x128xf32> to vector<128x128xbf16>
    %46 = vector.shape_cast %45 : vector<128x128xbf16> to vector<4x32x128xbf16>
    "tpu.trace_start"() <{level = 10 : i32, message = "bqe,bke->bqk"}> : () -> ()
    %cst_35 = arith.constant dense<0.000000e+00> : vector<4x32x32xf32>
    %47 = tpu.matmul %42, %44, %cst_35 {dimension_numbers = #tpu.dot_dimension_numbers<[2], [2], [1], [1], [0, 0, 0, 1, 1, 1], [0], [0]>} : vector<4x32x128xbf16>, vector<4x32x128xbf16>, vector<4x32x32xf32> -> vector<4x32x32xf32>
    "tpu.trace_stop"() : () -> ()
    %48 = tpu.iota {dimensions = array<i32: 0>} : vector<32x32xi32>
    %49 = tpu.iota {dimensions = array<i32: 1>} : vector<32x32xi32>
    %c4_i32 = arith.constant 4 : i32
    %c0_i32_36 = arith.constant 0 : i32
    %50 = arith.cmpi eq, %c4_i32, %c0_i32_36 : i32
    %c1_i32 = arith.constant 1 : i32
    %51 = arith.select %50, %c1_i32, %c4_i32 : i32
    %52 = vector.broadcast %51 : i32 to vector<32x32xi32>
    %53 = arith.remsi %48, %52 : vector<32x32xi32>
    %c0_i32_37 = arith.constant 0 : i32
    %54 = vector.broadcast %c0_i32_37 : i32 to vector<32x32xi32>
    %55 = arith.cmpi ne, %53, %54 : vector<32x32xi32>
    %c0_i32_38 = arith.constant 0 : i32
    %56 = vector.broadcast %c0_i32_38 : i32 to vector<32x32xi32>
    %57 = arith.cmpi slt, %53, %56 : vector<32x32xi32>
    %c0_i32_39 = arith.constant 0 : i32
    %58 = arith.cmpi slt, %51, %c0_i32_39 : i32
    %59 = vector.broadcast %58 : i1 to vector<32x32xi1>
    %60 = vector.broadcast %59 : vector<32x32xi1> to vector<32x32xi1>
    %61 = arith.xori %57, %60 : vector<32x32xi1>
    %62 = arith.andi %61, %55 : vector<32x32xi1>
    %63 = vector.broadcast %51 : i32 to vector<32x32xi32>
    %64 = arith.addi %53, %63 : vector<32x32xi32>
    %65 = arith.select %62, %64, %53 : vector<32x32xi1>, vector<32x32xi32>
    %c4_i32_40 = arith.constant 4 : i32
    %c0_i32_41 = arith.constant 0 : i32
    %66 = arith.cmpi eq, %c4_i32_40, %c0_i32_41 : i32
    %c1_i32_42 = arith.constant 1 : i32
    %67 = arith.select %66, %c1_i32_42, %c4_i32_40 : i32
    %68 = vector.broadcast %67 : i32 to vector<32x32xi32>
    %69 = arith.remsi %49, %68 : vector<32x32xi32>
    %c0_i32_43 = arith.constant 0 : i32
    %70 = vector.broadcast %c0_i32_43 : i32 to vector<32x32xi32>
    %71 = arith.cmpi ne, %69, %70 : vector<32x32xi32>
    %c0_i32_44 = arith.constant 0 : i32
    %72 = vector.broadcast %c0_i32_44 : i32 to vector<32x32xi32>
    %73 = arith.cmpi slt, %69, %72 : vector<32x32xi32>
    %c0_i32_45 = arith.constant 0 : i32
    %74 = arith.cmpi slt, %67, %c0_i32_45 : i32
    %75 = vector.broadcast %74 : i1 to vector<32x32xi1>
    %76 = vector.broadcast %75 : vector<32x32xi1> to vector<32x32xi1>
    %77 = arith.xori %73, %76 : vector<32x32xi1>
    %78 = arith.andi %77, %71 : vector<32x32xi1>
    %79 = vector.broadcast %67 : i32 to vector<32x32xi32>
    %80 = arith.addi %69, %79 : vector<32x32xi32>
    %81 = arith.select %78, %80, %69 : vector<32x32xi1>, vector<32x32xi32>
    %82 = arith.cmpi eq, %65, %81 : vector<32x32xi32>
    %83 = vector.shape_cast %82 : vector<32x32xi1> to vector<1x32x32xi1>
    %cst_46 = arith.constant -1.000000e+30 : f32
    %84 = vector.shape_cast %83 : vector<1x32x32xi1> to vector<1x32x32xi1>
    %85 = vector.broadcast %84 : vector<1x32x32xi1> to vector<4x32x32xi1>
    %86 = vector.broadcast %cst_46 : f32 to vector<4x32x32xf32>
    %87 = arith.select %85, %47, %86 : vector<4x32x32xi1>, vector<4x32x32xf32>
    %cst_47 = arith.constant dense<0xFF800000> : vector<4x32xf32>
    %88 = vector.multi_reduction <maximumf>, %87, %cst_47 [2] : vector<4x32x32xf32> to vector<4x32xf32>
    %89 = vector.shape_cast %88 : vector<4x32xf32> to vector<4x32x1xf32>
    %90 = vector.broadcast %89 : vector<4x32x1xf32> to vector<4x32x32xf32>
    %91 = arith.subf %87, %90 : vector<4x32x32xf32>
    %92 = math.exp %91 : vector<4x32x32xf32>
    %cst_48 = arith.constant dense<0.000000e+00> : vector<4x32xf32>
    %93 = vector.multi_reduction <add>, %92, %cst_48 [2] : vector<4x32x32xf32> to vector<4x32xf32>
    %94 = vector.shape_cast %93 : vector<4x32xf32> to vector<4x32x1xf32>
    %95 = tpu.reciprocal %94 {approx = true} : vector<4x32x1xf32> -> vector<4x32x1xf32>
    %96 = vector.broadcast %95 : vector<4x32x1xf32> to vector<4x32x32xf32>
    %97 = arith.mulf %92, %96 : vector<4x32x32xf32>
    %98 = arith.truncf %97 : vector<4x32x32xf32> to vector<4x32x32xbf16>
    "tpu.trace_start"() <{level = 10 : i32, message = "bqk,bke->bqe"}> : () -> ()
    %cst_49 = arith.constant dense<0.000000e+00> : vector<4x32x128xf32>
    %99 = tpu.matmul %98, %46, %cst_49 {dimension_numbers = #tpu.dot_dimension_numbers<[2], [1], [1], [2], [0, 0, 0, 1, 1, 2], [0], [0]>} : vector<4x32x32xbf16>, vector<4x32x128xbf16>, vector<4x32x128xf32> -> vector<4x32x128xf32>
    "tpu.trace_stop"() : () -> ()
    %100 = vector.shape_cast %99 : vector<4x32x128xf32> to vector<128x128xf32>
    %101 = arith.truncf %100 : vector<128x128xf32> to vector<128x128xbf16>
    %c0_50 = arith.constant 0 : index
    %c0_51 = arith.constant 0 : index
    %c0_52 = arith.constant 0 : index
    %102 = vector.load %arg6[%c0_50, %c0_51, %c0_52] : memref<1x128x128xbf16, #tpu.memory_space<vmem>>, vector<1x128x128xbf16>
    %103 = vector.shape_cast %102 : vector<1x128x128xbf16> to vector<128x128xbf16>
    %cst_53 = arith.constant dense<0.000000e+00> : vector<128x128xf32>
    %104 = tpu.matmul %101, %103, %cst_53 {dimension_numbers = #tpu.dot_dimension_numbers<[1], [0], [0], [1], [0, 0, 1, 1], [], []>} : vector<128x128xbf16>, vector<128x128xbf16>, vector<128x128xf32> -> vector<128x128xf32>
    %105 = vector.broadcast %10 : vector<1x128xf32> to vector<128x128xf32>
    %106 = arith.addf %104, %105 : vector<128x128xf32>
    %107 = arith.addf %24, %106 : vector<128x128xf32>
    %cst_54 = arith.constant dense<0.000000e+00> : vector<128xf32>
    %108 = vector.multi_reduction <add>, %107, %cst_54 [1] : vector<128x128xf32> to vector<128xf32>
    %109 = vector.shape_cast %108 : vector<128xf32> to vector<128x1xf32>
    %cst_55 = arith.constant 1.280000e+02 : f32
    %110 = vector.broadcast %cst_55 : f32 to vector<128x1xf32>
    %111 = arith.divf %109, %110 : vector<128x1xf32>
    %112 = vector.broadcast %111 : vector<128x1xf32> to vector<128x128xf32>
    %113 = arith.subf %107, %112 : vector<128x128xf32>
    %114 = arith.mulf %113, %113 : vector<128x128xf32>
    %cst_56 = arith.constant dense<0.000000e+00> : vector<128xf32>
    %115 = vector.multi_reduction <add>, %114, %cst_56 [1] : vector<128x128xf32> to vector<128xf32>
    %116 = vector.shape_cast %115 : vector<128xf32> to vector<128x1xf32>
    %cst_57 = arith.constant 1.280000e+02 : f32
    %117 = vector.broadcast %cst_57 : f32 to vector<128x1xf32>
    %118 = arith.divf %116, %117 : vector<128x1xf32>
    %119 = vector.broadcast %111 : vector<128x1xf32> to vector<128x128xf32>
    %120 = arith.subf %107, %119 : vector<128x128xf32>
    %cst_58 = arith.constant 9.99999974E-6 : f32
    %121 = vector.broadcast %cst_58 : f32 to vector<128x1xf32>
    %122 = arith.addf %118, %121 : vector<128x1xf32>
    %123 = math.rsqrt %122 : vector<128x1xf32>
    %124 = vector.broadcast %123 : vector<128x1xf32> to vector<128x128xf32>
    %125 = arith.mulf %120, %124 : vector<128x128xf32>
    %126 = vector.broadcast %16 : vector<1x128xf32> to vector<128x128xf32>
    %127 = arith.mulf %125, %126 : vector<128x128xf32>
    %128 = vector.broadcast %18 : vector<1x128xf32> to vector<128x128xf32>
    %129 = arith.addf %127, %128 : vector<128x128xf32>
    %130 = arith.truncf %129 : vector<128x128xf32> to vector<128x128xbf16>
    %c0_59 = arith.constant 0 : index
    %c0_60 = arith.constant 0 : index
    %c0_61 = arith.constant 0 : index
    %131 = vector.load %arg7[%c0_59, %c0_60, %c0_61] : memref<1x128x256xbf16, #tpu.memory_space<vmem>>, vector<1x128x256xbf16>
    %132 = vector.shape_cast %131 : vector<1x128x256xbf16> to vector<128x256xbf16>
    %cst_62 = arith.constant dense<0.000000e+00> : vector<128x256xf32>
    %133 = tpu.matmul %130, %132, %cst_62 {dimension_numbers = #tpu.dot_dimension_numbers<[1], [0], [0], [1], [0, 0, 1, 1], [], []>} : vector<128x128xbf16>, vector<128x256xbf16>, vector<128x256xf32> -> vector<128x256xf32>
    %134 = vector.broadcast %12 : vector<1x256xf32> to vector<128x256xf32>
    %135 = arith.addf %133, %134 : vector<128x256xf32>
    %cst_63 = arith.constant 0.000000e+00 : f32
    %136 = vector.broadcast %cst_63 : f32 to vector<128x256xf32>
    %137 = arith.maximumf %135, %136 : vector<128x256xf32>
    %138 = arith.truncf %137 : vector<128x256xf32> to vector<128x256xbf16>
    %c0_64 = arith.constant 0 : index
    %c0_65 = arith.constant 0 : index
    %c0_66 = arith.constant 0 : index
    %139 = vector.load %arg8[%c0_64, %c0_65, %c0_66] : memref<1x256x128xbf16, #tpu.memory_space<vmem>>, vector<1x256x128xbf16>
    %140 = vector.shape_cast %139 : vector<1x256x128xbf16> to vector<256x128xbf16>
    %cst_67 = arith.constant dense<0.000000e+00> : vector<128x128xf32>
    %141 = tpu.matmul %138, %140, %cst_67 {dimension_numbers = #tpu.dot_dimension_numbers<[1], [0], [0], [1], [0, 0, 1, 1], [], []>} : vector<128x256xbf16>, vector<256x128xbf16>, vector<128x128xf32> -> vector<128x128xf32>
    %142 = vector.broadcast %14 : vector<1x128xf32> to vector<128x128xf32>
    %143 = arith.addf %141, %142 : vector<128x128xf32>
    %144 = arith.addf %129, %143 : vector<128x128xf32>
    %cst_68 = arith.constant dense<0.000000e+00> : vector<128xf32>
    %145 = vector.multi_reduction <add>, %144, %cst_68 [1] : vector<128x128xf32> to vector<128xf32>
    %146 = vector.shape_cast %145 : vector<128xf32> to vector<128x1xf32>
    %cst_69 = arith.constant 1.280000e+02 : f32
    %147 = vector.broadcast %cst_69 : f32 to vector<128x1xf32>
    %148 = arith.divf %146, %147 : vector<128x1xf32>
    %149 = vector.broadcast %148 : vector<128x1xf32> to vector<128x128xf32>
    %150 = arith.subf %144, %149 : vector<128x128xf32>
    %151 = arith.mulf %150, %150 : vector<128x128xf32>
    %cst_70 = arith.constant dense<0.000000e+00> : vector<128xf32>
    %152 = vector.multi_reduction <add>, %151, %cst_70 [1] : vector<128x128xf32> to vector<128xf32>
    %153 = vector.shape_cast %152 : vector<128xf32> to vector<128x1xf32>
    %cst_71 = arith.constant 1.280000e+02 : f32
    %154 = vector.broadcast %cst_71 : f32 to vector<128x1xf32>
    %155 = arith.divf %153, %154 : vector<128x1xf32>
    %156 = vector.broadcast %148 : vector<128x1xf32> to vector<128x128xf32>
    %157 = arith.subf %144, %156 : vector<128x128xf32>
    %cst_72 = arith.constant 9.99999974E-6 : f32
    %158 = vector.broadcast %cst_72 : f32 to vector<128x1xf32>
    %159 = arith.addf %155, %158 : vector<128x1xf32>
    %160 = math.rsqrt %159 : vector<128x1xf32>
    %161 = vector.broadcast %160 : vector<128x1xf32> to vector<128x128xf32>
    %162 = arith.mulf %157, %161 : vector<128x128xf32>
    %163 = vector.broadcast %20 : vector<1x128xf32> to vector<128x128xf32>
    %164 = arith.mulf %162, %163 : vector<128x128xf32>
    %165 = vector.broadcast %22 : vector<1x128xf32> to vector<128x128xf32>
    %166 = arith.addf %164, %165 : vector<128x128xf32>
    %167 = vector.shape_cast %166 : vector<128x128xf32> to vector<4x32x128xf32>
    %c0_73 = arith.constant 0 : index
    %c0_74 = arith.constant 0 : index
    %c0_75 = arith.constant 0 : index
    %168 = vector.load %arg10[%c0_73, %c0_74, %c0_75] : memref<4x32x128xf32, #tpu.memory_space<vmem>>, vector<4x32x128xf32>
    tpu.vector_store %arg10[%c0_73, %c0_74, %c0_75], %167 {strides = array<i32>} : memref<4x32x128xf32, #tpu.memory_space<vmem>>, vector<4x32x128xf32>,
    return
  }
  func.func @transform_0(%arg0: i32, %arg1: i32) -> (i32, i32, i32) {
    %c0_i32 = arith.constant 0 : i32
    %c0_i32_0 = arith.constant 0 : i32
    %c0_i32_1 = arith.constant 0 : i32
    return %arg0, %c0_i32, %c0_i32_0 : i32, i32, i32
  }
  func.func @transform_1(%arg0: i32, %arg1: i32) -> (i32, i32, i32) {
    %c0_i32 = arith.constant 0 : i32
    %c0_i32_0 = arith.constant 0 : i32
    %c0_i32_1 = arith.constant 0 : i32
    return %arg1, %c0_i32, %c0_i32_0 : i32, i32, i32
  }
  func.func @transform_2(%arg0: i32, %arg1: i32) -> (i32, i32, i32) {
    %c0_i32 = arith.constant 0 : i32
    %c0_i32_0 = arith.constant 0 : i32
    %c0_i32_1 = arith.constant 0 : i32
    return %arg1, %c0_i32, %c0_i32_0 : i32, i32, i32
  }
  func.func @transform_3(%arg0: i32, %arg1: i32) -> (i32, i32, i32) {
    %c0_i32 = arith.constant 0 : i32
    %c0_i32_0 = arith.constant 0 : i32
    %c0_i32_1 = arith.constant 0 : i32
    return %arg1, %c0_i32, %c0_i32_0 : i32, i32, i32
  }
  func.func @transform_4(%arg0: i32, %arg1: i32) -> (i32, i32, i32) {
    %c0_i32 = arith.constant 0 : i32
    %c0_i32_0 = arith.constant 0 : i32
    %c0_i32_1 = arith.constant 0 : i32
    return %arg1, %c0_i32, %c0_i32_0 : i32, i32, i32
  }
  func.func @transform_5(%arg0: i32, %arg1: i32) -> (i32, i32, i32) {
    %c0_i32 = arith.constant 0 : i32
    %c0_i32_0 = arith.constant 0 : i32
    %c0_i32_1 = arith.constant 0 : i32
    return %arg1, %c0_i32, %c0_i32_0 : i32, i32, i32
  }
  func.func @transform_6(%arg0: i32, %arg1: i32) -> (i32, i32, i32) {
    %c0_i32 = arith.constant 0 : i32
    %c0_i32_0 = arith.constant 0 : i32
    %c0_i32_1 = arith.constant 0 : i32
    return %arg1, %c0_i32, %c0_i32_0 : i32, i32, i32
  }
  func.func @transform_7(%arg0: i32, %arg1: i32) -> (i32, i32, i32) {
    %c0_i32 = arith.constant 0 : i32
    %c0_i32_0 = arith.constant 0 : i32
    %c0_i32_1 = arith.constant 0 : i32
    return %arg1, %c0_i32, %c0_i32_0 : i32, i32, i32
  }
  func.func @transform_8(%arg0: i32, %arg1: i32) -> (i32, i32, i32) {
    %c0_i32 = arith.constant 0 : i32
    %c0_i32_0 = arith.constant 0 : i32
    %c0_i32_1 = arith.constant 0 : i32
    return %arg0, %c0_i32, %c0_i32_0 : i32, i32, i32
  }
}

</mosaic_0001>

<llo_original>
// kernel: transformer_forward.3
$region0: #{transformer_forward.3}
  #allocation0 [shape = 'u32[]', space=smem, size = 0x4, offset = 0x4, fixed_abs, tag = 'smem constant byte address 0x4 - core index']
  #allocation1 [shape = 'u32[144,128]{1,0:T(1,128)}', space=vmem, size = 0x12000, scoped, tag = 'internal scratch']
  #allocation2 [shape = 'f32[128,256]{1,0:T(8,128)}', space=vmem, size = 0x20000, scoped, tag = 'scratch operand']
  %s0 = inlined_call_operand.vmem [shape: f32[256,128], index: 0, kind: input, shape index: {}]
  %s1 = inlined_call_operand.vmem [shape: bf16[128,256], index: 1, kind: input, shape index: {}]
  %s2 = inlined_call_operand.vmem [shape: f32[1,256], index: 2, kind: input, shape index: {}]
  %s3 = inlined_call_operand.hbm [shape: f32[256,256], index: 3, kind: output, shape index: {}]
  %s4 = sld [smem:[#allocation0]]
  $region53: #{transformer_forward.3} parent=0
    _
  %s6 = ssub.s32 1, %s4
  %s7 = scalar_select 0, %s6, %s4
  $region1: #{transformer_forward.3} parent=0
    #allocation3 [shape = 'u8[262144]{0}', space=vmem, size = 0x40000, scoped, tag = 'output window, operand 0']
    #allocation4 [shape = 's32[2]{0}', space=sflag, size = 0x8, scoped, tag = 'scoped memory for transformer_forward.3']
    %8 = vsyncpa [#allocation4], 0
    %s9 = scalar_lea.sflag [#allocation4], 1
    %10 = vsyncpa %s9, 0
    loop: start=0, step=1, limit=4
    $region2: #{transformer_forward.3} parent=1 // loop_pre_header
      _
    $region3: #{transformer_forward.3} parent=1 // loop_header
      %s12 = sphi 0, %s16
      %p13 = scmp.ge.s32.totalorder %s12, 4
      %s19 = sphi 0, %s38
      %s20 = sphi 0, %s34
      %s21 = sphi 0, %s30
      %s22 = sphi 0, %s19
      %s23 = sphi 0, %s20
      %s24 = sphi 0, %s21
      %s25 = sphi 0, %s22
      %s26 = sphi 0, %s23
      %s27 = sphi 0, %s24
      %s43 = sphi 0, %s45
      %s46 = sphi 0, %s43
      %s47 = sphi 0, %s46
      %s63 = sphi 0, %s47
      %s71 = sphi 0, %s73
      %s74 = sphi 0, %s71
      %s75 = sphi 0, %s74
      %s91 = sphi 0, %s75
      %s97 = sphi 0, %s99
      %s100 = sphi 0, %s97
      %s101 = sphi 0, %s100
      %s117 = sphi 0, %s101
      %s125 = sphi 0, %s127
      %s128 = sphi 0, %s125
      %s129 = sphi 0, %s128
      %s145 = sphi 0, %s129
    $region4: #{transformer_forward.3} parent=1 // loop_header_branch
      %15 = sbr.rel (%p13) target = $region8
    $region5: #{transformer_forward.3} parent=1 // loop_body
      %s17 = ssub.s32 %s12, 1
      %s18 = ssub.s32 %s12, 2
      %s28 = sadd.s32 1, %s21
      %p29 = scmp.ge.s32.totalorder %s28, 1
      %s30 = scalar_select %p29, 0, %s28
      %s31 = sadd.s32 1, %s20
      %s32 = scalar_select %p29, %s31, %s20
      %p33 = scmp.ge.s32.totalorder %s32, 1
      %s34 = scalar_select %p33, 0, %s32
      %s35 = sadd.s32 1, %s19
      %s36 = scalar_select %p33, %s35, %s19
      %p37 = scmp.ge.s32.totalorder %s36, 2
      %s38 = scalar_select %p37, 0, %s36
      %s39 = ssub.s32 %s19, %s38
      %s40 = ssub.s32 %s21, %s30
      %s41 = sor.u32 %s39, %s40
      %p42 = scmp.eq.s32.totalorder %s41, 0
      %s44 = sadd.s32 %s43, 1
      %s45 = scalar_select %p42, %s43, %s44
      %p48 = pneg %p42
      %p49 = scmp.eq.s32.totalorder %s12, 1
      %p50 = por %p48, %p49
      %p51 = scmp.ne.s32.totalorder %s43, %s46
      %p52 = scmp.eq.s32.totalorder %s12, 0
      %p53 = por %p51, %p52
      %p54 = scmp.ne.s32.totalorder %s43, %s46
      %p55 = scmp.eq.s32.totalorder %s17, 1
      %p56 = por %p54, %p55
      %p57 = scmp.ne.s32.totalorder %s46, %s47
      %p58 = scmp.eq.s32.totalorder %s17, 0
      %p59 = por %p57, %p58
      %p60 = scmp.ne.s32.totalorder %s46, %s47
      %p61 = scmp.eq.s32.totalorder %s18, 1
      %p62 = por %p60, %p61
      %p64 = scmp.ne.s32.totalorder %s47, %s63
      %p65 = scmp.eq.s32.totalorder %s18, 0
      %p66 = por %p64, %p65
      %s67 = ssub.s32 %s21, %s30
      %s68 = ssub.s32 %s20, %s34
      %s69 = sor.u32 %s67, %s68
      %p70 = scmp.eq.s32.totalorder %s69, 0
      %s72 = sadd.s32 %s71, 1
      %s73 = scalar_select %p70, %s71, %s72
      %p76 = pneg %p70
      %p77 = scmp.eq.s32.totalorder %s12, 1
      %p78 = por %p76, %p77
      %p79 = scmp.ne.s32.totalorder %s71, %s74
      %p80 = scmp.eq.s32.totalorder %s12, 0
      %p81 = por %p79, %p80
      %p82 = scmp.ne.s32.totalorder %s71, %s74
      %p83 = scmp.eq.s32.totalorder %s17, 1
      %p84 = por %p82, %p83
      %p85 = scmp.ne.s32.totalorder %s74, %s75
      %p86 = scmp.eq.s32.totalorder %s17, 0
      %p87 = por %p85, %p86
      %p88 = scmp.ne.s32.totalorder %s74, %s75
      %p89 = scmp.eq.s32.totalorder %s18, 1
      %p90 = por %p88, %p89
      %p92 = scmp.ne.s32.totalorder %s75, %s91
      %p93 = scmp.eq.s32.totalorder %s18, 0
      %p94 = por %p92, %p93
      %s95 = ssub.s32 %s20, %s34
      %p96 = scmp.eq.s32.totalorder %s95, 0
      %s98 = sadd.s32 %s97, 1
      %s99 = scalar_select %p96, %s97, %s98
      %p102 = pneg %p96
      %p103 = scmp.eq.s32.totalorder %s12, 1
      %p104 = por %p102, %p103
      %p105 = scmp.ne.s32.totalorder %s97, %s100
      %p106 = scmp.eq.s32.totalorder %s12, 0
      %p107 = por %p105, %p106
      %p108 = scmp.ne.s32.totalorder %s97, %s100
      %p109 = scmp.eq.s32.totalorder %s17, 1
      %p110 = por %p108, %p109
      %p111 = scmp.ne.s32.totalorder %s100, %s101
      %p112 = scmp.eq.s32.totalorder %s17, 0
      %p113 = por %p111, %p112
      %p114 = scmp.ne.s32.totalorder %s100, %s101
      %p115 = scmp.eq.s32.totalorder %s18, 1
      %p116 = por %p114, %p115
      %p118 = scmp.ne.s32.totalorder %s101, %s117
      %p119 = scmp.eq.s32.totalorder %s18, 0
      %p120 = por %p118, %p119
      %s121 = ssub.s32 %s19, %s38
      %s122 = ssub.s32 %s20, %s34
      %s123 = sor.u32 %s121, %s122
      %p124 = scmp.eq.s32.totalorder %s123, 0
      %s126 = sadd.s32 %s125, 1
      %s127 = scalar_select %p124, %s125, %s126
      %p130 = pneg %p124
      %p131 = scmp.eq.s32.totalorder %s12, 1
      %p132 = por %p130, %p131
      %p133 = scmp.ne.s32.totalorder %s125, %s128
      %p134 = scmp.eq.s32.totalorder %s12, 0
      %p135 = por %p133, %p134
      %p136 = scmp.ne.s32.totalorder %s125, %s128
      %p137 = scmp.eq.s32.totalorder %s17, 1
      %p138 = por %p136, %p137
      %p139 = scmp.ne.s32.totalorder %s128, %s129
      %p140 = scmp.eq.s32.totalorder %s17, 0
      %p141 = por %p139, %p140
      %p142 = scmp.ne.s32.totalorder %s128, %s129
      %p143 = scmp.eq.s32.totalorder %s18, 1
      %p144 = por %p142, %p143
      %p146 = scmp.ne.s32.totalorder %s129, %s145
      %p147 = scmp.eq.s32.totalorder %s18, 0
      %p148 = por %p146, %p147
      %p149 = scmp.le.s32.totalorder 1, %s12
      %p150 = scmp.lt.s32.totalorder %s12, 3
      %p151 = pnand %p149, %p150
      %p152 = pneg %p151
      // Predicated region
      $region9: #{transformer_forward.3} parent=5 // pred_check
        _
      $region10: #{transformer_forward.3} parent=5 // pred_check_branch
        %154 = sbr.rel (%p151) target = $region12
      $region11: #{transformer_forward.3} parent=5 // pred_region
        %s155 = ssub.s32 %s12, 1
        // Predicated region
        $region13: #{transformer_forward.3} parent=11 // pred_check
          %p156 = pneg %p87
        $region14: #{transformer_forward.3} parent=11 // pred_check_branch
          %158 = sbr.rel (%p156) target = $region16
        $region15: #{transformer_forward.3} parent=11 // pred_region
          %s159 = smul.u32 16, %s24
          %s160 = smul.u32 2, %s23
          %p161 = scmp.lt.s32.totalorder %s159, 15
          %s162 = scalar_select %p161, %s159, 15
          %p163 = scmp.lt.s32.totalorder %s160, 1
          %s164 = scalar_select %p163, %s160, 1
          %s165 = smul.addr %s162, 2
          %s166 = sadd.s32 %s164, %s165
          %s167 = smul.addr %s166, 4
          %s168 = scalar_lea.vmem %s1, %s167
          %s169 = smul.u32 16, %s24
          %s170 = smul.u32 2, %s23
        $region16: #{transformer_forward.3} parent=11 // pred_fallthru
          _
        // Predicated region
        $region17: #{transformer_forward.3} parent=11 // pred_check
          %p171 = pneg %p113
        $region18: #{transformer_forward.3} parent=11 // pred_check_branch
          %173 = sbr.rel (%p171) target = $region20
        $region19: #{transformer_forward.3} parent=11 // pred_region
          %s174 = smul.u32 2, %s23
          %p175 = scmp.lt.s32.totalorder %s174, 1
          %s176 = scalar_select %p175, %s174, 1
          %s177 = scalar_lea.vmem %s2, %s176
          %s178 = smul.u32 2, %s23
        $region20: #{transformer_forward.3} parent=11 // pred_fallthru
          _
      $region12: #{transformer_forward.3} parent=5 // pred_fallthru
        _
      %p179 = scmp.lt.s32.totalorder %s12, 2
      // Predicated region
      $region21: #{transformer_forward.3} parent=5 // pred_check
        %p180 = pneg %p179
      $region22: #{transformer_forward.3} parent=5 // pred_check_branch
        %182 = sbr.rel (%p180) target = $region24
      $region23: #{transformer_forward.3} parent=5 // pred_region
        // Predicated region
        $region25: #{transformer_forward.3} parent=23 // pred_check
          %p183 = pneg %p53
        $region26: #{transformer_forward.3} parent=23 // pred_check_branch
          %185 = sbr.rel (%p183) target = $region28
        $region27: #{transformer_forward.3} parent=23 // pred_region
          %s186 = smul.u32 16, %s19
          %p187 = scmp.lt.s32.totalorder %s186, 31
          %s188 = scalar_select %p187, %s186, 31
          %p189 = scmp.lt.s32.totalorder %s21, 0
          %s190 = scalar_select %p189, %s21, 0
          %s191 = sadd.s32 %s190, %s188
          %s192 = smul.addr %s191, 8
          %s193 = scalar_lea.vmem %s0, %s192
          %s194 = smul.u32 16, %s19
        $region28: #{transformer_forward.3} parent=23 // pred_fallthru
          _
      $region24: #{transformer_forward.3} parent=5 // pred_fallthru
        _
      %p195 = scmp.le.s32.totalorder 1, %s12
      %p196 = scmp.lt.s32.totalorder %s12, 3
      %p197 = pnand %p195, %p196
      %p198 = pneg %p197
      // Predicated region
      $region29: #{transformer_forward.3} parent=5 // pred_check
        _
      $region30: #{transformer_forward.3} parent=5 // pred_check_branch
        %200 = sbr.rel (%p197) target = $region32
      $region31: #{transformer_forward.3} parent=5 // pred_region
        %s201 = ssub.s32 %s12, 1
        %s202 = smul.u32 16, %s22
        %p203 = scmp.lt.s32.totalorder %s202, 31
        %s204 = scalar_select %p203, %s202, 31
        %p205 = scmp.lt.s32.totalorder %s24, 0
        %s206 = scalar_select %p205, %s24, 0
        %s207 = sadd.s32 %s206, %s204
        %s208 = smul.addr %s207, 8
        %s209 = scalar_lea.vmem %s0, %s208
        %p210 = pneg %p59
        %p211 = pneg %p56
        %s212 = smul.u32 16, %s24
        %s213 = smul.u32 2, %s23
        %p214 = scmp.lt.s32.totalorder %s212, 15
        %s215 = scalar_select %p214, %s212, 15
        %p216 = scmp.lt.s32.totalorder %s213, 1
        %s217 = scalar_select %p216, %s213, 1
        %s218 = smul.addr %s215, 2
        %s219 = sadd.s32 %s217, %s218
        %s220 = smul.addr %s219, 4
        %s221 = scalar_lea.vmem %s1, %s220
        %p222 = pneg %p87
        %p223 = pneg %p84
        %s224 = smul.u32 2, %s23
        %p225 = scmp.lt.s32.totalorder %s224, 1
        %s226 = scalar_select %p225, %s224, 1
        %s227 = scalar_lea.vmem %s2, %s226
        %p228 = pneg %p113
        %p229 = pneg %p110
        %p230 = pneg %p141
        %p231 = pneg %p138
        %s232 = sand.u32 %s128, 1
        %s233 = scalar_lea.sflag [#allocation4], %s232
        %s234 = sand.u32 %s128, 1
        %s235 = smul.addr %s234, 256
        %s236 = scalar_lea.vmem [#allocation3], %s235
        %s237 = smul.u32 16, %s22
        %p238 = scmp.lt.s32.totalorder %s237, 31
        %s239 = scalar_select %p238, %s237, 31
        %p240 = scmp.lt.s32.totalorder %s24, 0
        %s241 = scalar_select %p240, %s24, 0
        %s242 = sadd.s32 %s241, %s239
        %s243 = smul.addr %s242, 8
        %s244 = scalar_lea.vmem %s0, %s243
        %s245 = smul.u32 16, %s22
        %s246 = smul.u32 16, %s24
        %s247 = smul.u32 2, %s23
        %p248 = scmp.lt.s32.totalorder %s246, 15
        %s249 = scalar_select %p248, %s246, 15
        %p250 = scmp.lt.s32.totalorder %s247, 1
        %s251 = scalar_select %p250, %s247, 1
        %s252 = smul.addr %s249, 2
        %s253 = sadd.s32 %s251, %s252
        %s254 = smul.addr %s253, 4
        %s255 = scalar_lea.vmem %s1, %s254
        %s256 = smul.u32 16, %s24
        %s257 = smul.u32 2, %s23
        %s258 = smul.u32 2, %s23
        %p259 = scmp.lt.s32.totalorder %s258, 1
        %s260 = scalar_select %p259, %s258, 1
        %s261 = scalar_lea.vmem %s2, %s260
        %s262 = smul.u32 2, %s23
        %s263 = smul.u32 16, %s22
        %s264 = smul.u32 2, %s23
        %p266 = scmp.eq.s32.totalorder %s24, 0
        // Predicated region
        $region33: #{transformer_forward.3} parent=31 // pred_check
          %p267 = pneg %p266
        $region34: #{transformer_forward.3} parent=31 // pred_check_branch
          %269 = sbr.rel (%p267) target = $region36
        $region35: #{transformer_forward.3} parent=31 // pred_region
          %270 = vst [vmem:[#allocation2] sm:$0xff] 0.0
          %271 = vst [vmem:[#allocation2 + $0x8] sm:$0xff] 0.0
          %272 = vst [vmem:[#allocation2 + $0x10] sm:$0xff] 0.0
          %273 = vst [vmem:[#allocation2 + $0x18] sm:$0xff] 0.0
          %274 = vst [vmem:[#allocation2 + $0x20] sm:$0xff] 0.0
          %275 = vst [vmem:[#allocation2 + $0x28] sm:$0xff] 0.0
          %276 = vst [vmem:[#allocation2 + $0x30] sm:$0xff] 0.0
          %277 = vst [vmem:[#allocation2 + $0x38] sm:$0xff] 0.0
          %278 = vst [vmem:[#allocation2 + $0x40] sm:$0xff] 0.0
          %279 = vst [vmem:[#allocation2 + $0x48] sm:$0xff] 0.0
          %280 = vst [vmem:[#allocation2 + $0x50] sm:$0xff] 0.0
          %281 = vst [vmem:[#allocation2 + $0x58] sm:$0xff] 0.0
          %282 = vst [vmem:[#allocation2 + $0x60] sm:$0xff] 0.0
          %283 = vst [vmem:[#allocation2 + $0x68] sm:$0xff] 0.0
          %284 = vst [vmem:[#allocation2 + $0x70] sm:$0xff] 0.0
          %285 = vst [vmem:[#allocation2 + $0x78] sm:$0xff] 0.0
          %286 = vst [vmem:[#allocation2 + $0x80] sm:$0xff] 0.0
          %287 = vst [vmem:[#allocation2 + $0x88] sm:$0xff] 0.0
          %288 = vst [vmem:[#allocation2 + $0x90] sm:$0xff] 0.0
          %289 = vst [vmem:[#allocation2 + $0x98] sm:$0xff] 0.0
          %290 = vst [vmem:[#allocation2 + $0xa0] sm:$0xff] 0.0
          %291 = vst [vmem:[#allocation2 + $0xa8] sm:$0xff] 0.0
          %292 = vst [vmem:[#allocation2 + $0xb0] sm:$0xff] 0.0
          %293 = vst [vmem:[#allocation2 + $0xb8] sm:$0xff] 0.0
          %294 = vst [vmem:[#allocation2 + $0xc0] sm:$0xff] 0.0
          %295 = vst [vmem:[#allocation2 + $0xc8] sm:$0xff] 0.0
          %296 = vst [vmem:[#allocation2 + $0xd0] sm:$0xff] 0.0
          %297 = vst [vmem:[#allocation2 + $0xd8] sm:$0xff] 0.0
          %298 = vst [vmem:[#allocation2 + $0xe0] sm:$0xff] 0.0
          %299 = vst [vmem:[#allocation2 + $0xe8] sm:$0xff] 0.0
          %300 = vst [vmem:[#allocation2 + $0xf0] sm:$0xff] 0.0
          %301 = vst [vmem:[#allocation2 + $0xf8] sm:$0xff] 0.0
        $region36: #{transformer_forward.3} parent=31 // pred_fallthru
          _
        %v302 = vld [vmem:[#allocation2] sm:$0xff]
        %v303 = vld [vmem:[#allocation2 + $0x8] sm:$0xff]
        %v304 = vld [vmem:[#allocation2 + $0x10] sm:$0xff]
        %v305 = vld [vmem:[#allocation2 + $0x18] sm:$0xff]
        %v306 = vld [vmem:[#allocation2 + $0x20] sm:$0xff]
        %v307 = vld [vmem:[#allocation2 + $0x28] sm:$0xff]
        %v308 = vld [vmem:[#allocation2 + $0x30] sm:$0xff]
        %v309 = vld [vmem:[#allocation2 + $0x38] sm:$0xff]
        %v310 = vld [vmem:[#allocation2 + $0x40] sm:$0xff]
        %v311 = vld [vmem:[#allocation2 + $0x48] sm:$0xff]
        %v312 = vld [vmem:[#allocation2 + $0x50] sm:$0xff]
        %v313 = vld [vmem:[#allocation2 + $0x58] sm:$0xff]
        %v314 = vld [vmem:[#allocation2 + $0x60] sm:$0xff]
        %v315 = vld [vmem:[#allocation2 + $0x68] sm:$0xff]
        %v316 = vld [vmem:[#allocation2 + $0x70] sm:$0xff]
        %v317 = vld [vmem:[#allocation2 + $0x78] sm:$0xff]
        %v318 = vld [vmem:[#allocation2 + $0x80] sm:$0xff]
        %v319 = vld [vmem:[#allocation2 + $0x88] sm:$0xff]
        %v320 = vld [vmem:[#allocation2 + $0x90] sm:$0xff]
        %v321 = vld [vmem:[#allocation2 + $0x98] sm:$0xff]
        %v322 = vld [vmem:[#allocation2 + $0xa0] sm:$0xff]
        %v323 = vld [vmem:[#allocation2 + $0xa8] sm:$0xff]
        %v324 = vld [vmem:[#allocation2 + $0xb0] sm:$0xff]
        %v325 = vld [vmem:[#allocation2 + $0xb8] sm:$0xff]
        %v326 = vld [vmem:[#allocation2 + $0xc0] sm:$0xff]
        %v327 = vld [vmem:[#allocation2 + $0xc8] sm:$0xff]
        %v328 = vld [vmem:[#allocation2 + $0xd0] sm:$0xff]
        %v329 = vld [vmem:[#allocation2 + $0xd8] sm:$0xff]
        %v330 = vld [vmem:[#allocation2 + $0xe0] sm:$0xff]
        %v331 = vld [vmem:[#allocation2 + $0xe8] sm:$0xff]
        %v332 = vld [vmem:[#allocation2 + $0xf0] sm:$0xff]
        %v333 = vld [vmem:[#allocation2 + $0xf8] sm:$0xff]
        %v334 = vld [vmem:[%s244] sm:$0xff]
        %v335 = vld [vmem:[%s244 + $0x8] sm:$0xff]
        %v336 = vld [vmem:[%s244 + $0x10] sm:$0xff]
        %v337 = vld [vmem:[%s244 + $0x18] sm:$0xff]
        %v338 = vld [vmem:[%s244 + $0x20] sm:$0xff]
        %v339 = vld [vmem:[%s244 + $0x28] sm:$0xff]
        %v340 = vld [vmem:[%s244 + $0x30] sm:$0xff]
        %v341 = vld [vmem:[%s244 + $0x38] sm:$0xff]
        %v342 = vld [vmem:[%s244 + $0x40] sm:$0xff]
        %v343 = vld [vmem:[%s244 + $0x48] sm:$0xff]
        %v344 = vld [vmem:[%s244 + $0x50] sm:$0xff]
        %v345 = vld [vmem:[%s244 + $0x58] sm:$0xff]
        %v346 = vld [vmem:[%s244 + $0x60] sm:$0xff]
        %v347 = vld [vmem:[%s244 + $0x68] sm:$0xff]
        %v348 = vld [vmem:[%s244 + $0x70] sm:$0xff]
        %v349 = vld [vmem:[%s244 + $0x78] sm:$0xff]
        %v350 = vpack.c.bf16 %v335, %v334
        %v351 = vpack.c.bf16 %v337, %v336
        %v352 = vpack.c.bf16 %v339, %v338
        %v353 = vpack.c.bf16 %v341, %v340
        %v354 = vpack.c.bf16 %v343, %v342
        %v355 = vpack.c.bf16 %v345, %v344
        %v356 = vpack.c.bf16 %v347, %v346
        %v357 = vpack.c.bf16 %v349, %v348
        %v358 = vld [vmem:[%s255] sm:$0xff]
        %v359 = vld [vmem:[%s255 + $0x8] sm:$0xff]
        %v360 = vld [vmem:[%s255 + $0x10] sm:$0xff]
        %v361 = vld [vmem:[%s255 + $0x18] sm:$0xff]
        %v362 = vld [vmem:[%s255 + $0x20] sm:$0xff]
        %v363 = vld [vmem:[%s255 + $0x28] sm:$0xff]
        %v364 = vld [vmem:[%s255 + $0x30] sm:$0xff]
        %v365 = vld [vmem:[%s255 + $0x38] sm:$0xff]
        %v366 = vld [vmem:[%s255 + $0x40] sm:$0xff]
        %v367 = vld [vmem:[%s255 + $0x48] sm:$0xff]
        %v368 = vld [vmem:[%s255 + $0x50] sm:$0xff]
        %v369 = vld [vmem:[%s255 + $0x58] sm:$0xff]
        %v370 = vld [vmem:[%s255 + $0x60] sm:$0xff]
        %v371 = vld [vmem:[%s255 + $0x68] sm:$0xff]
        %v372 = vld [vmem:[%s255 + $0x70] sm:$0xff]
        %v373 = vld [vmem:[%s255 + $0x78] sm:$0xff]
        %v390 = vunpack.c.l.b16 %v358
        %v391 = vunpack.c.h.b16 %v358
        %v392 = vunpack.c.l.b16 %v359
        %v393 = vunpack.c.h.b16 %v359
        %v394 = vunpack.c.l.b16 %v360
        %v395 = vunpack.c.h.b16 %v360
        %v396 = vunpack.c.l.b16 %v361
        %v397 = vunpack.c.h.b16 %v361
        %v398 = vunpack.c.l.b16 %v362
        %v399 = vunpack.c.h.b16 %v362
        %v400 = vunpack.c.l.b16 %v363
        %v401 = vunpack.c.h.b16 %v363
        %v402 = vunpack.c.l.b16 %v364
        %v403 = vunpack.c.h.b16 %v364
        %v404 = vunpack.c.l.b16 %v365
        %v405 = vunpack.c.h.b16 %v365
        %v406 = vunpack.c.l.b16 %v366
        %v407 = vunpack.c.h.b16 %v366
        %v408 = vunpack.c.l.b16 %v367
        %v409 = vunpack.c.h.b16 %v367
        %v410 = vunpack.c.l.b16 %v368
        %v411 = vunpack.c.h.b16 %v368
        %v412 = vunpack.c.l.b16 %v369
        %v413 = vunpack.c.h.b16 %v369
        %v414 = vunpack.c.l.b16 %v370
        %v415 = vunpack.c.h.b16 %v370
        %v416 = vunpack.c.l.b16 %v371
        %v417 = vunpack.c.h.b16 %v371
        %v418 = vunpack.c.l.b16 %v372
        %v419 = vunpack.c.h.b16 %v372
        %v420 = vunpack.c.l.b16 %v373
        %v421 = vunpack.c.h.b16 %v373
        %v422 = vpack.c.b16 %v392, %v390
        %v423 = vpack.c.b16 %v393, %v391
        %v424 = vpack.c.b16 %v396, %v394
        %v425 = vpack.c.b16 %v397, %v395
        %v426 = vpack.c.b16 %v400, %v398
        %v427 = vpack.c.b16 %v401, %v399
        %v428 = vpack.c.b16 %v404, %v402
        %v429 = vpack.c.b16 %v405, %v403
        %v430 = vpack.c.b16 %v408, %v406
        %v431 = vpack.c.b16 %v409, %v407
        %v432 = vpack.c.b16 %v412, %v410
        %v433 = vpack.c.b16 %v413, %v411
        %v434 = vpack.c.b16 %v416, %v414
        %v435 = vpack.c.b16 %v417, %v415
        %v436 = vpack.c.b16 %v420, %v418
        %v437 = vpack.c.b16 %v421, %v419
        %454 = vmatprep.subr.bf16.mxu0 %v423
        %455 = vmatpush1.bf16.msra.mxu0 %v422
        %456 = vmatprep.subr.bf16.mxu0 %v425
        %457 = vmatpush1.bf16.msra.mxu0 %v424
        %458 = vmatprep.subr.bf16.mxu0 %v427
        %459 = vmatpush1.bf16.msra.mxu0 %v426
        %460 = vmatprep.subr.bf16.mxu0 %v429
        %461 = vmatpush1.bf16.msra.mxu0 %v428
        %462 = vmatprep.subr.bf16.mxu0 %v431
        %463 = vmatpush1.bf16.msra.mxu0 %v430
        %464 = vmatprep.subr.bf16.mxu0 %v433
        %465 = vmatpush1.bf16.msra.mxu0 %v432
        %466 = vmatprep.subr.bf16.mxu0 %v435
        %467 = vmatpush1.bf16.msra.mxu0 %v434
        %468 = vmatprep.subr.bf16.mxu0 %v437
        %469 = vmatpush1.bf16.msra.mxu0 %v436
        %470 = vmatprep.subr.bf16.mxu0 0
        %471 = vmatpush1.bf16.msra.mxu0 0
        %472 = vmatprep.subr.bf16.mxu0 0
        %473 = vmatpush1.bf16.msra.mxu0 0
        %474 = vmatprep.subr.bf16.mxu0 0
        %475 = vmatpush1.bf16.msra.mxu0 0
        %476 = vmatprep.subr.bf16.mxu0 0
        %477 = vmatpush1.bf16.msra.mxu0 0
        %478 = vmatprep.subr.bf16.mxu0 0
        %479 = vmatpush1.bf16.msra.mxu0 0
        %480 = vmatprep.subr.bf16.mxu0 0
        %481 = vmatpush1.bf16.msra.mxu0 0
        %482 = vmatprep.subr.bf16.mxu0 0
        %483 = vmatpush1.bf16.msra.mxu0 0
        %484 = vmatprep.subr.bf16.mxu0 0
        %485 = vmatpush1.bf16.msra.mxu0 0
        %486 = vmatprep.mubr.bf16.mxu0 0
        %487 = vmatmul.mubr.bf16.gmra.mrb[0].mxu0 %v350
        %v488 = vpop.f32.mrb[0].mxu0
        %v489 = vadd.f32 0.0, %v488
        %v490 = vpop.f32.mrb[0].mxu0
        %v491 = vadd.f32 0.0, %v490
        %v492 = vpop.f32.mrb[0].mxu0
        %v493 = vadd.f32 0.0, %v492
        %v494 = vpop.f32.mrb[0].mxu0
        %v495 = vadd.f32 0.0, %v494
        %496 = vmatprep.mubr.bf16.mxu0 0
        %497 = vmatmul.mubr.bf16.gmra.mrb[0].mxu0 %v351
        %v498 = vpop.f32.mrb[0].mxu0
        %v499 = vadd.f32 0.0, %v498
        %v500 = vpop.f32.mrb[0].mxu0
        %v501 = vadd.f32 0.0, %v500
        %v502 = vpop.f32.mrb[0].mxu0
        %v503 = vadd.f32 0.0, %v502
        %v504 = vpop.f32.mrb[0].mxu0
        %v505 = vadd.f32 0.0, %v504
        %506 = vmatprep.mubr.bf16.mxu0 0
        %507 = vmatmul.mubr.bf16.gmra.mrb[0].mxu0 %v352
        %v508 = vpop.f32.mrb[0].mxu0
        %v509 = vadd.f32 0.0, %v508
        %v510 = vpop.f32.mrb[0].mxu0
        %v511 = vadd.f32 0.0, %v510
        %v512 = vpop.f32.mrb[0].mxu0
        %v513 = vadd.f32 0.0, %v512
        %v514 = vpop.f32.mrb[0].mxu0
        %v515 = vadd.f32 0.0, %v514
        %516 = vmatprep.mubr.bf16.mxu0 0
        %517 = vmatmul.mubr.bf16.gmra.mrb[0].mxu0 %v353
        %v518 = vpop.f32.mrb[0].mxu0
        %v519 = vadd.f32 0.0, %v518
        %v520 = vpop.f32.mrb[0].mxu0
        %v521 = vadd.f32 0.0, %v520
        %v522 = vpop.f32.mrb[0].mxu0
        %v523 = vadd.f32 0.0, %v522
        %v524 = vpop.f32.mrb[0].mxu0
        %v525 = vadd.f32 0.0, %v524
        %526 = vmatprep.mubr.bf16.mxu0 0
        %527 = vmatmul.mubr.bf16.gmra.mrb[0].mxu0 %v354
        %v528 = vpop.f32.mrb[0].mxu0
        %v529 = vadd.f32 0.0, %v528
        %v530 = vpop.f32.mrb[0].mxu0
        %v531 = vadd.f32 0.0, %v530
        %v532 = vpop.f32.mrb[0].mxu0
        %v533 = vadd.f32 0.0, %v532
        %v534 = vpop.f32.mrb[0].mxu0
        %v535 = vadd.f32 0.0, %v534
        %536 = vmatprep.mubr.bf16.mxu0 0
        %537 = vmatmul.mubr.bf16.gmra.mrb[0].mxu0 %v355
        %v538 = vpop.f32.mrb[0].mxu0
        %v539 = vadd.f32 0.0, %v538
        %v540 = vpop.f32.mrb[0].mxu0
        %v541 = vadd.f32 0.0, %v540
        %v542 = vpop.f32.mrb[0].mxu0
        %v543 = vadd.f32 0.0, %v542
        %v544 = vpop.f32.mrb[0].mxu0
        %v545 = vadd.f32 0.0, %v544
        %546 = vmatprep.mubr.bf16.mxu0 0
        %547 = vmatmul.mubr.bf16.gmra.mrb[0].mxu0 %v356
        %v548 = vpop.f32.mrb[0].mxu0
        %v549 = vadd.f32 0.0, %v548
        %v550 = vpop.f32.mrb[0].mxu0
        %v551 = vadd.f32 0.0, %v550
        %v552 = vpop.f32.mrb[0].mxu0
        %v553 = vadd.f32 0.0, %v552
        %v554 = vpop.f32.mrb[0].mxu0
        %v555 = vadd.f32 0.0, %v554
        %556 = vmatprep.mubr.bf16.mxu0 0
        %557 = vmatmul.mubr.bf16.gmra.mrb[0].mxu0 %v357
        %v558 = vpop.f32.mrb[0].mxu0
        %v559 = vadd.f32 0.0, %v558
        %v560 = vpop.f32.mrb[0].mxu0
        %v561 = vadd.f32 0.0, %v560
        %v562 = vpop.f32.mrb[0].mxu0
        %v563 = vadd.f32 0.0, %v562
        %v564 = vpop.f32.mrb[0].mxu0
        %v565 = vadd.f32 0.0, %v564
        %566 = vdwg.mxu0
        %v567 = vadd.f32 %v302, %v489
        %v568 = vadd.f32 %v303, %v491
        %v569 = vadd.f32 %v304, %v493
        %v570 = vadd.f32 %v305, %v495
        %v571 = vadd.f32 %v306, %v499
        %v572 = vadd.f32 %v307, %v501
        %v573 = vadd.f32 %v308, %v503
        %v574 = vadd.f32 %v309, %v505
        %v575 = vadd.f32 %v310, %v509
        %v576 = vadd.f32 %v311, %v511
        %v577 = vadd.f32 %v312, %v513
        %v578 = vadd.f32 %v313, %v515
        %v579 = vadd.f32 %v314, %v519
        %v580 = vadd.f32 %v315, %v521
        %v581 = vadd.f32 %v316, %v523
        %v582 = vadd.f32 %v317, %v525
        %v583 = vadd.f32 %v318, %v529
        %v584 = vadd.f32 %v319, %v531
        %v585 = vadd.f32 %v320, %v533
        %v586 = vadd.f32 %v321, %v535
        %v587 = vadd.f32 %v322, %v539
        %v588 = vadd.f32 %v323, %v541
        %v589 = vadd.f32 %v324, %v543
        %v590 = vadd.f32 %v325, %v545
        %v591 = vadd.f32 %v326, %v549
        %v592 = vadd.f32 %v327, %v551
        %v593 = vadd.f32 %v328, %v553
        %v594 = vadd.f32 %v329, %v555
        %v595 = vadd.f32 %v330, %v559
        %v596 = vadd.f32 %v331, %v561
        %v597 = vadd.f32 %v332, %v563
        %v598 = vadd.f32 %v333, %v565
        %599 = vst [vmem:[#allocation2] sm:$0xff] %v567
        %600 = vst [vmem:[#allocation2 + $0x8] sm:$0xff] %v568
        %601 = vst [vmem:[#allocation2 + $0x10] sm:$0xff] %v569
        %602 = vst [vmem:[#allocation2 + $0x18] sm:$0xff] %v570
        %603 = vst [vmem:[#allocation2 + $0x20] sm:$0xff] %v571
        %604 = vst [vmem:[#allocation2 + $0x28] sm:$0xff] %v572
        %605 = vst [vmem:[#allocation2 + $0x30] sm:$0xff] %v573
        %606 = vst [vmem:[#allocation2 + $0x38] sm:$0xff] %v574
        %607 = vst [vmem:[#allocation2 + $0x40] sm:$0xff] %v575
        %608 = vst [vmem:[#allocation2 + $0x48] sm:$0xff] %v576
        %609 = vst [vmem:[#allocation2 + $0x50] sm:$0xff] %v577
        %610 = vst [vmem:[#allocation2 + $0x58] sm:$0xff] %v578
        %611 = vst [vmem:[#allocation2 + $0x60] sm:$0xff] %v579
        %612 = vst [vmem:[#allocation2 + $0x68] sm:$0xff] %v580
        %613 = vst [vmem:[#allocation2 + $0x70] sm:$0xff] %v581
        %614 = vst [vmem:[#allocation2 + $0x78] sm:$0xff] %v582
        %615 = vst [vmem:[#allocation2 + $0x80] sm:$0xff] %v583
        %616 = vst [vmem:[#allocation2 + $0x88] sm:$0xff] %v584
        %617 = vst [vmem:[#allocation2 + $0x90] sm:$0xff] %v585
        %618 = vst [vmem:[#allocation2 + $0x98] sm:$0xff] %v586
        %619 = vst [vmem:[#allocation2 + $0xa0] sm:$0xff] %v587
        %620 = vst [vmem:[#allocation2 + $0xa8] sm:$0xff] %v588
        %621 = vst [vmem:[#allocation2 + $0xb0] sm:$0xff] %v589
        %622 = vst [vmem:[#allocation2 + $0xb8] sm:$0xff] %v590
        %623 = vst [vmem:[#allocation2 + $0xc0] sm:$0xff] %v591
        %624 = vst [vmem:[#allocation2 + $0xc8] sm:$0xff] %v592
        %625 = vst [vmem:[#allocation2 + $0xd0] sm:$0xff] %v593
        %626 = vst [vmem:[#allocation2 + $0xd8] sm:$0xff] %v594
        %627 = vst [vmem:[#allocation2 + $0xe0] sm:$0xff] %v595
        %628 = vst [vmem:[#allocation2 + $0xe8] sm:$0xff] %v596
        %629 = vst [vmem:[#allocation2 + $0xf0] sm:$0xff] %v597
        %630 = vst [vmem:[#allocation2 + $0xf8] sm:$0xff] %v598
        // Predicated region
        $region37: #{transformer_forward.3} parent=31 // pred_check
          %p631 = pneg %p266
        $region38: #{transformer_forward.3} parent=31 // pred_check_branch
          %633 = sbr.rel (%p631) target = $region40
        $region39: #{transformer_forward.3} parent=31 // pred_region
          %v634 = vld [vmem:[#allocation2] sm:$0xff]
          %v635 = vld [vmem:[#allocation2 + $0x8] sm:$0xff]
          %v636 = vld [vmem:[#allocation2 + $0x10] sm:$0xff]
          %v637 = vld [vmem:[#allocation2 + $0x18] sm:$0xff]
          %v638 = vld [vmem:[#allocation2 + $0x20] sm:$0xff]
          %v639 = vld [vmem:[#allocation2 + $0x28] sm:$0xff]
          %v640 = vld [vmem:[#allocation2 + $0x30] sm:$0xff]
          %v641 = vld [vmem:[#allocation2 + $0x38] sm:$0xff]
          %v642 = vld [vmem:[#allocation2 + $0x40] sm:$0xff]
          %v643 = vld [vmem:[#allocation2 + $0x48] sm:$0xff]
          %v644 = vld [vmem:[#allocation2 + $0x50] sm:$0xff]
          %v645 = vld [vmem:[#allocation2 + $0x58] sm:$0xff]
          %v646 = vld [vmem:[#allocation2 + $0x60] sm:$0xff]
          %v647 = vld [vmem:[#allocation2 + $0x68] sm:$0xff]
          %v648 = vld [vmem:[#allocation2 + $0x70] sm:$0xff]
          %v649 = vld [vmem:[#allocation2 + $0x78] sm:$0xff]
          %v650 = vld [vmem:[#allocation2 + $0x80] sm:$0xff]
          %v651 = vld [vmem:[#allocation2 + $0x88] sm:$0xff]
          %v652 = vld [vmem:[#allocation2 + $0x90] sm:$0xff]
          %v653 = vld [vmem:[#allocation2 + $0x98] sm:$0xff]
          %v654 = vld [vmem:[#allocation2 + $0xa0] sm:$0xff]
          %v655 = vld [vmem:[#allocation2 + $0xa8] sm:$0xff]
          %v656 = vld [vmem:[#allocation2 + $0xb0] sm:$0xff]
          %v657 = vld [vmem:[#allocation2 + $0xb8] sm:$0xff]
          %v658 = vld [vmem:[#allocation2 + $0xc0] sm:$0xff]
          %v659 = vld [vmem:[#allocation2 + $0xc8] sm:$0xff]
          %v660 = vld [vmem:[#allocation2 + $0xd0] sm:$0xff]
          %v661 = vld [vmem:[#allocation2 + $0xd8] sm:$0xff]
          %v662 = vld [vmem:[#allocation2 + $0xe0] sm:$0xff]
          %v663 = vld [vmem:[#allocation2 + $0xe8] sm:$0xff]
          %v664 = vld [vmem:[#allocation2 + $0xf0] sm:$0xff]
          %v665 = vld [vmem:[#allocation2 + $0xf8] sm:$0xff]
          %v666 = vld [vmem:[%s261] sm:$0x3]
          %v668 = vlaneseq
          %v669 = vshrl.u32 %v668, 7
          %v670 = vsub.s32 0, %v669
          %v671 = vrot.slane %v666, %v670
          %v672 = vlaneseq
          %v673 = vshrl.u32 %v672, 7
          %v674 = vsub.s32 1, %v673
          %v675 = vrot.slane %v666, %v674
          %v678 = vadd.f32 %v634, %v671
          %v679 = vadd.f32 %v635, %v675
          %v680 = vadd.f32 %v636, %v671
          %v681 = vadd.f32 %v637, %v675
          %v682 = vadd.f32 %v638, %v671
          %v683 = vadd.f32 %v639, %v675
          %v684 = vadd.f32 %v640, %v671
          %v685 = vadd.f32 %v641, %v675
          %v686 = vadd.f32 %v642, %v671
          %v687 = vadd.f32 %v643, %v675
          %v688 = vadd.f32 %v644, %v671
          %v689 = vadd.f32 %v645, %v675
          %v690 = vadd.f32 %v646, %v671
          %v691 = vadd.f32 %v647, %v675
          %v692 = vadd.f32 %v648, %v671
          %v693 = vadd.f32 %v649, %v675
          %v694 = vadd.f32 %v650, %v671
          %v695 = vadd.f32 %v651, %v675
          %v696 = vadd.f32 %v652, %v671
          %v697 = vadd.f32 %v653, %v675
          %v698 = vadd.f32 %v654, %v671
          %v699 = vadd.f32 %v655, %v675
          %v700 = vadd.f32 %v656, %v671
          %v701 = vadd.f32 %v657, %v675
          %v702 = vadd.f32 %v658, %v671
          %v703 = vadd.f32 %v659, %v675
          %v704 = vadd.f32 %v660, %v671
          %v705 = vadd.f32 %v661, %v675
          %v706 = vadd.f32 %v662, %v671
          %v707 = vadd.f32 %v663, %v675
          %v708 = vadd.f32 %v664, %v671
          %v709 = vadd.f32 %v665, %v675
          %710 = vst [vmem:[%s236] sm:$0xff] %v678
          %711 = vst [vmem:[%s236 + $0x8] sm:$0xff] %v679
          %712 = vst [vmem:[%s236 + $0x10] sm:$0xff] %v680
          %713 = vst [vmem:[%s236 + $0x18] sm:$0xff] %v681
          %714 = vst [vmem:[%s236 + $0x20] sm:$0xff] %v682
          %715 = vst [vmem:[%s236 + $0x28] sm:$0xff] %v683
          %716 = vst [vmem:[%s236 + $0x30] sm:$0xff] %v684
          %717 = vst [vmem:[%s236 + $0x38] sm:$0xff] %v685
          %718 = vst [vmem:[%s236 + $0x40] sm:$0xff] %v686
          %719 = vst [vmem:[%s236 + $0x48] sm:$0xff] %v687
          %720 = vst [vmem:[%s236 + $0x50] sm:$0xff] %v688
          %721 = vst [vmem:[%s236 + $0x58] sm:$0xff] %v689
          %722 = vst [vmem:[%s236 + $0x60] sm:$0xff] %v690
          %723 = vst [vmem:[%s236 + $0x68] sm:$0xff] %v691
          %724 = vst [vmem:[%s236 + $0x70] sm:$0xff] %v692
          %725 = vst [vmem:[%s236 + $0x78] sm:$0xff] %v693
          %726 = vst [vmem:[%s236 + $0x80] sm:$0xff] %v694
          %727 = vst [vmem:[%s236 + $0x88] sm:$0xff] %v695
          %728 = vst [vmem:[%s236 + $0x90] sm:$0xff] %v696
          %729 = vst [vmem:[%s236 + $0x98] sm:$0xff] %v697
          %730 = vst [vmem:[%s236 + $0xa0] sm:$0xff] %v698
          %731 = vst [vmem:[%s236 + $0xa8] sm:$0xff] %v699
          %732 = vst [vmem:[%s236 + $0xb0] sm:$0xff] %v700
          %733 = vst [vmem:[%s236 + $0xb8] sm:$0xff] %v701
          %734 = vst [vmem:[%s236 + $0xc0] sm:$0xff] %v702
          %735 = vst [vmem:[%s236 + $0xc8] sm:$0xff] %v703
          %736 = vst [vmem:[%s236 + $0xd0] sm:$0xff] %v704
          %737 = vst [vmem:[%s236 + $0xd8] sm:$0xff] %v705
          %738 = vst [vmem:[%s236 + $0xe0] sm:$0xff] %v706
          %739 = vst [vmem:[%s236 + $0xe8] sm:$0xff] %v707
          %740 = vst [vmem:[%s236 + $0xf0] sm:$0xff] %v708
          %741 = vst [vmem:[%s236 + $0xf8] sm:$0xff] %v709
        $region40: #{transformer_forward.3} parent=31 // pred_fallthru
          _
        %s742 = sand.u32 %s128, 1
        %s743 = scalar_lea.sflag [#allocation4], %s742
        %s744 = sand.u32 %s128, 1
        %s745 = smul.addr %s744, 256
        %s746 = scalar_lea.vmem [#allocation3], %s745
        // Predicated region
        $region41: #{transformer_forward.3} parent=31 // pred_check
          %p747 = pneg %p138
        $region42: #{transformer_forward.3} parent=31 // pred_check_branch
          %749 = sbr.rel (%p747) target = $region44
        $region43: #{transformer_forward.3} parent=31 // pred_region
          %s750 = smul.u32 16, %s22
          %s751 = smul.u32 2, %s23
          %s753 = ssub.s32 4096, 4096
          %754 = vsyncadd %s743, %s753
          %s755 = smul.addr %s750, 2
          %s756 = sadd.s32 %s751, %s755
          %s757 = smul.addr %s756, 128
          %s758 = scalar_lea.hbm %s3, %s757
          %s759 = sshll.u32 %s746, 4
          %s760 = int_to_ptr.vmem [resolvable:$true] %s759
          %765 = dma.vmem_to_hbm [thread:$0]  %s760, 4096, %s758, %s743, 256, 256, 16
        $region44: #{transformer_forward.3} parent=31 // pred_fallthru
          _
      $region32: #{transformer_forward.3} parent=5 // pred_fallthru
        _
      %p766 = scmp.le.s32.totalorder 2, %s12
      // Predicated region
      $region45: #{transformer_forward.3} parent=5 // pred_check
        %p767 = pneg %p766
      $region46: #{transformer_forward.3} parent=5 // pred_check_branch
        %769 = sbr.rel (%p767) target = $region48
      $region47: #{transformer_forward.3} parent=5 // pred_region
        %s770 = ssub.s32 %s12, 2
        // Predicated region
        $region49: #{transformer_forward.3} parent=47 // pred_check
          %p771 = pneg %p144
        $region50: #{transformer_forward.3} parent=47 // pred_check_branch
          %773 = sbr.rel (%p771) target = $region52
        $region51: #{transformer_forward.3} parent=47 // pred_region
          %s774 = sand.u32 %s129, 1
          %s775 = scalar_lea.sflag [#allocation4], %s774
          %s776 = sand.u32 %s129, 1
          %s777 = smul.addr %s776, 256
          %s778 = scalar_lea.vmem [#allocation3], %s777
          %779 = dma.done %s775, 4096
        $region52: #{transformer_forward.3} parent=47 // pred_fallthru
          _
      $region48: #{transformer_forward.3} parent=5 // pred_fallthru
        _
    $region6: #{transformer_forward.3} parent=1 // loop_footer
      %s16 = sadd.s32 1, %s12
    $region7: #{transformer_forward.3} parent=1 // loop_footer_branch
      %11 = sbr.rel target = $region3
    $region8: #{transformer_forward.3} parent=1 // loop_exit
      _
    %780 = vsyncpa [#allocation4], 1
    %s781 = scalar_lea.sflag [#allocation4], 1
    %782 = vsyncpa %s781, 1

// kernel: transformer_forward.2
$region0: #{transformer_forward.2}
  #allocation0 [shape = 'u32[]', space=smem, size = 0x4, offset = 0x4, fixed_abs, tag = 'smem constant byte address 0x4 - core index']
  #allocation1 [shape = 'u32[144,128]{1,0:T(1,128)}', space=vmem, size = 0x12000, scoped, tag = 'internal scratch']
  %s0 = inlined_call_operand.vmem [shape: f32[8,32,128], index: 0, kind: input, shape index: {}, may-alias: {0,8}]
  %s1 = inlined_call_operand.vmem [shape: bf16[2,128,128], index: 1, kind: input, shape index: {}]
  %s2 = inlined_call_operand.vmem [shape: bf16[2,128,128], index: 2, kind: input, shape index: {}]
  %s3 = inlined_call_operand.vmem [shape: bf16[2,128,128], index: 3, kind: input, shape index: {}]
  %s4 = inlined_call_operand.vmem [shape: bf16[2,128,128], index: 4, kind: input, shape index: {}]
  %s5 = inlined_call_operand.vmem [shape: bf16[2,128,256], index: 5, kind: input, shape index: {}]
  %s6 = inlined_call_operand.vmem [shape: bf16[2,256,128], index: 6, kind: input, shape index: {}]
  %s7 = inlined_call_operand.vmem [shape: f32[2,10,256], index: 7, kind: input, shape index: {}]
  %s8 = inlined_call_operand.vmem [shape: f32[8,32,128], index: 8, kind: output, shape index: {}, may-alias: {0,8}]
  %s9 = sld [smem:[#allocation0]]
  $region69: #{transformer_forward.2} parent=0
    _
  %s11 = ssub.s32 1, %s9
  %s12 = scalar_select 0, %s11, %s9
  loop: start=0, step=1, limit=6
  $region2: #{transformer_forward.2} parent=0 // loop_pre_header
    _
  $region3: #{transformer_forward.2} parent=0 // loop_header
    %s14 = sphi 0, %s18
    %p15 = scmp.ge.s32.totalorder %s14, 6
    %s21 = sphi 0, %s33
    %s22 = sphi 0, %s29
    %s23 = sphi 0, %s21
    %s24 = sphi 0, %s22
    %s25 = sphi 0, %s23
    %s26 = sphi 0, %s24
    %s36 = sphi 0, %s38
    %s39 = sphi 0, %s36
    %s40 = sphi 0, %s39
    %s56 = sphi 0, %s40
    %s62 = sphi 0, %s64
    %s65 = sphi 0, %s62
    %s66 = sphi 0, %s65
    %s82 = sphi 0, %s66
    %s88 = sphi 0, %s90
    %s91 = sphi 0, %s88
    %s92 = sphi 0, %s91
    %s108 = sphi 0, %s92
    %s114 = sphi 0, %s116
    %s117 = sphi 0, %s114
    %s118 = sphi 0, %s117
    %s134 = sphi 0, %s118
    %s140 = sphi 0, %s142
    %s143 = sphi 0, %s140
    %s144 = sphi 0, %s143
    %s160 = sphi 0, %s144
    %s166 = sphi 0, %s168
    %s169 = sphi 0, %s166
    %s170 = sphi 0, %s169
    %s186 = sphi 0, %s170
    %s192 = sphi 0, %s194
    %s195 = sphi 0, %s192
    %s196 = sphi 0, %s195
    %s212 = sphi 0, %s196
    %s218 = sphi 0, %s220
    %s221 = sphi 0, %s218
    %s222 = sphi 0, %s221
    %s238 = sphi 0, %s222
    %s244 = sphi 0, %s246
    %s247 = sphi 0, %s244
    %s248 = sphi 0, %s247
    %s264 = sphi 0, %s248
  $region4: #{transformer_forward.2} parent=0 // loop_header_branch
    %17 = sbr.rel (%p15) target = $region8
  $region5: #{transformer_forward.2} parent=0 // loop_body
    %s19 = ssub.s32 %s14, 1
    %s20 = ssub.s32 %s14, 2
    %s27 = sadd.s32 1, %s22
    %p28 = scmp.ge.s32.totalorder %s27, 2
    %s29 = scalar_select %p28, 0, %s27
    %s30 = sadd.s32 1, %s21
    %s31 = scalar_select %p28, %s30, %s21
    %p32 = scmp.ge.s32.totalorder %s31, 2
    %s33 = scalar_select %p32, 0, %s31
    %s34 = ssub.s32 %s21, %s33
    %p35 = scmp.eq.s32.totalorder %s34, 0
    %s37 = sadd.s32 %s36, 1
    %s38 = scalar_select %p35, %s36, %s37
    %p41 = pneg %p35
    %p42 = scmp.eq.s32.totalorder %s14, 3
    %p43 = por %p41, %p42
    %p44 = scmp.ne.s32.totalorder %s36, %s39
    %p45 = scmp.eq.s32.totalorder %s14, 0
    %p46 = por %p44, %p45
    %p47 = scmp.ne.s32.totalorder %s36, %s39
    %p48 = scmp.eq.s32.totalorder %s19, 3
    %p49 = por %p47, %p48
    %p50 = scmp.ne.s32.totalorder %s39, %s40
    %p51 = scmp.eq.s32.totalorder %s19, 0
    %p52 = por %p50, %p51
    %p53 = scmp.ne.s32.totalorder %s39, %s40
    %p54 = scmp.eq.s32.totalorder %s20, 3
    %p55 = por %p53, %p54
    %p57 = scmp.ne.s32.totalorder %s40, %s56
    %p58 = scmp.eq.s32.totalorder %s20, 0
    %p59 = por %p57, %p58
    %s60 = ssub.s32 %s22, %s29
    %p61 = scmp.eq.s32.totalorder %s60, 0
    %s63 = sadd.s32 %s62, 1
    %s64 = scalar_select %p61, %s62, %s63
    %p67 = pneg %p61
    %p68 = scmp.eq.s32.totalorder %s14, 3
    %p69 = por %p67, %p68
    %p70 = scmp.ne.s32.totalorder %s62, %s65
    %p71 = scmp.eq.s32.totalorder %s14, 0
    %p72 = por %p70, %p71
    %p73 = scmp.ne.s32.totalorder %s62, %s65
    %p74 = scmp.eq.s32.totalorder %s19, 3
    %p75 = por %p73, %p74
    %p76 = scmp.ne.s32.totalorder %s65, %s66
    %p77 = scmp.eq.s32.totalorder %s19, 0
    %p78 = por %p76, %p77
    %p79 = scmp.ne.s32.totalorder %s65, %s66
    %p80 = scmp.eq.s32.totalorder %s20, 3
    %p81 = por %p79, %p80
    %p83 = scmp.ne.s32.totalorder %s66, %s82
    %p84 = scmp.eq.s32.totalorder %s20, 0
    %p85 = por %p83, %p84
    %s86 = ssub.s32 %s22, %s29
    %p87 = scmp.eq.s32.totalorder %s86, 0
    %s89 = sadd.s32 %s88, 1
    %s90 = scalar_select %p87, %s88, %s89
    %p93 = pneg %p87
    %p94 = scmp.eq.s32.totalorder %s14, 3
    %p95 = por %p93, %p94
    %p96 = scmp.ne.s32.totalorder %s88, %s91
    %p97 = scmp.eq.s32.totalorder %s14, 0
    %p98 = por %p96, %p97
    %p99 = scmp.ne.s32.totalorder %s88, %s91
    %p100 = scmp.eq.s32.totalorder %s19, 3
    %p101 = por %p99, %p100
    %p102 = scmp.ne.s32.totalorder %s91, %s92
    %p103 = scmp.eq.s32.totalorder %s19, 0
    %p104 = por %p102, %p103
    %p105 = scmp.ne.s32.totalorder %s91, %s92
    %p106 = scmp.eq.s32.totalorder %s20, 3
    %p107 = por %p105, %p106
    %p109 = scmp.ne.s32.totalorder %s92, %s108
    %p110 = scmp.eq.s32.totalorder %s20, 0
    %p111 = por %p109, %p110
    %s112 = ssub.s32 %s22, %s29
    %p113 = scmp.eq.s32.totalorder %s112, 0
    %s115 = sadd.s32 %s114, 1
    %s116 = scalar_select %p113, %s114, %s115
    %p119 = pneg %p113
    %p120 = scmp.eq.s32.totalorder %s14, 3
    %p121 = por %p119, %p120
    %p122 = scmp.ne.s32.totalorder %s114, %s117
    %p123 = scmp.eq.s32.totalorder %s14, 0
    %p124 = por %p122, %p123
    %p125 = scmp.ne.s32.totalorder %s114, %s117
    %p126 = scmp.eq.s32.totalorder %s19, 3
    %p127 = por %p125, %p126
    %p128 = scmp.ne.s32.totalorder %s117, %s118
    %p129 = scmp.eq.s32.totalorder %s19, 0
    %p130 = por %p128, %p129
    %p131 = scmp.ne.s32.totalorder %s117, %s118
    %p132 = scmp.eq.s32.totalorder %s20, 3
    %p133 = por %p131, %p132
    %p135 = scmp.ne.s32.totalorder %s118, %s134
    %p136 = scmp.eq.s32.totalorder %s20, 0
    %p137 = por %p135, %p136
    %s138 = ssub.s32 %s22, %s29
    %p139 = scmp.eq.s32.totalorder %s138, 0
    %s141 = sadd.s32 %s140, 1
    %s142 = scalar_select %p139, %s140, %s141
    %p145 = pneg %p139
    %p146 = scmp.eq.s32.totalorder %s14, 3
    %p147 = por %p145, %p146
    %p148 = scmp.ne.s32.totalorder %s140, %s143
    %p149 = scmp.eq.s32.totalorder %s14, 0
    %p150 = por %p148, %p149
    %p151 = scmp.ne.s32.totalorder %s140, %s143
    %p152 = scmp.eq.s32.totalorder %s19, 3
    %p153 = por %p151, %p152
    %p154 = scmp.ne.s32.totalorder %s143, %s144
    %p155 = scmp.eq.s32.totalorder %s19, 0
    %p156 = por %p154, %p155
    %p157 = scmp.ne.s32.totalorder %s143, %s144
    %p158 = scmp.eq.s32.totalorder %s20, 3
    %p159 = por %p157, %p158
    %p161 = scmp.ne.s32.totalorder %s144, %s160
    %p162 = scmp.eq.s32.totalorder %s20, 0
    %p163 = por %p161, %p162
    %s164 = ssub.s32 %s22, %s29
    %p165 = scmp.eq.s32.totalorder %s164, 0
    %s167 = sadd.s32 %s166, 1
    %s168 = scalar_select %p165, %s166, %s167
    %p171 = pneg %p165
    %p172 = scmp.eq.s32.totalorder %s14, 3
    %p173 = por %p171, %p172
    %p174 = scmp.ne.s32.totalorder %s166, %s169
    %p175 = scmp.eq.s32.totalorder %s14, 0
    %p176 = por %p174, %p175
    %p177 = scmp.ne.s32.totalorder %s166, %s169
    %p178 = scmp.eq.s32.totalorder %s19, 3
    %p179 = por %p177, %p178
    %p180 = scmp.ne.s32.totalorder %s169, %s170
    %p181 = scmp.eq.s32.totalorder %s19, 0
    %p182 = por %p180, %p181
    %p183 = scmp.ne.s32.totalorder %s169, %s170
    %p184 = scmp.eq.s32.totalorder %s20, 3
    %p185 = por %p183, %p184
    %p187 = scmp.ne.s32.totalorder %s170, %s186
    %p188 = scmp.eq.s32.totalorder %s20, 0
    %p189 = por %p187, %p188
    %s190 = ssub.s32 %s22, %s29
    %p191 = scmp.eq.s32.totalorder %s190, 0
    %s193 = sadd.s32 %s192, 1
    %s194 = scalar_select %p191, %s192, %s193
    %p197 = pneg %p191
    %p198 = scmp.eq.s32.totalorder %s14, 3
    %p199 = por %p197, %p198
    %p200 = scmp.ne.s32.totalorder %s192, %s195
    %p201 = scmp.eq.s32.totalorder %s14, 0
    %p202 = por %p200, %p201
    %p203 = scmp.ne.s32.totalorder %s192, %s195
    %p204 = scmp.eq.s32.totalorder %s19, 3
    %p205 = por %p203, %p204
    %p206 = scmp.ne.s32.totalorder %s195, %s196
    %p207 = scmp.eq.s32.totalorder %s19, 0
    %p208 = por %p206, %p207
    %p209 = scmp.ne.s32.totalorder %s195, %s196
    %p210 = scmp.eq.s32.totalorder %s20, 3
    %p211 = por %p209, %p210
    %p213 = scmp.ne.s32.totalorder %s196, %s212
    %p214 = scmp.eq.s32.totalorder %s20, 0
    %p215 = por %p213, %p214
    %s216 = ssub.s32 %s22, %s29
    %p217 = scmp.eq.s32.totalorder %s216, 0
    %s219 = sadd.s32 %s218, 1
    %s220 = scalar_select %p217, %s218, %s219
    %p223 = pneg %p217
    %p224 = scmp.eq.s32.totalorder %s14, 3
    %p225 = por %p223, %p224
    %p226 = scmp.ne.s32.totalorder %s218, %s221
    %p227 = scmp.eq.s32.totalorder %s14, 0
    %p228 = por %p226, %p227
    %p229 = scmp.ne.s32.totalorder %s218, %s221
    %p230 = scmp.eq.s32.totalorder %s19, 3
    %p231 = por %p229, %p230
    %p232 = scmp.ne.s32.totalorder %s221, %s222
    %p233 = scmp.eq.s32.totalorder %s19, 0
    %p234 = por %p232, %p233
    %p235 = scmp.ne.s32.totalorder %s221, %s222
    %p236 = scmp.eq.s32.totalorder %s20, 3
    %p237 = por %p235, %p236
    %p239 = scmp.ne.s32.totalorder %s222, %s238
    %p240 = scmp.eq.s32.totalorder %s20, 0
    %p241 = por %p239, %p240
    %s242 = ssub.s32 %s21, %s33
    %p243 = scmp.eq.s32.totalorder %s242, 0
    %s245 = sadd.s32 %s244, 1
    %s246 = scalar_select %p243, %s244, %s245
    %p249 = pneg %p243
    %p250 = scmp.eq.s32.totalorder %s14, 3
    %p251 = por %p249, %p250
    %p252 = scmp.ne.s32.totalorder %s244, %s247
    %p253 = scmp.eq.s32.totalorder %s14, 0
    %p254 = por %p252, %p253
    %p255 = scmp.ne.s32.totalorder %s244, %s247
    %p256 = scmp.eq.s32.totalorder %s19, 3
    %p257 = por %p255, %p256
    %p258 = scmp.ne.s32.totalorder %s247, %s248
    %p259 = scmp.eq.s32.totalorder %s19, 0
    %p260 = por %p258, %p259
    %p261 = scmp.ne.s32.totalorder %s247, %s248
    %p262 = scmp.eq.s32.totalorder %s20, 3
    %p263 = por %p261, %p262
    %p265 = scmp.ne.s32.totalorder %s248, %s264
    %p266 = scmp.eq.s32.totalorder %s20, 0
    %p267 = por %p265, %p266
    %p268 = scmp.le.s32.totalorder 1, %s14
    %p269 = scmp.lt.s32.totalorder %s14, 5
    %p270 = pnand %p268, %p269
    %p271 = pneg %p270
    // Predicated region
    $region9: #{transformer_forward.2} parent=5 // pred_check
      _
    $region10: #{transformer_forward.2} parent=5 // pred_check_branch
      %273 = sbr.rel (%p270) target = $region12
    $region11: #{transformer_forward.2} parent=5 // pred_region
      %s274 = ssub.s32 %s14, 1
    $region12: #{transformer_forward.2} parent=5 // pred_fallthru
      _
    %p275 = scmp.lt.s32.totalorder %s14, 4
    // Predicated region
    $region13: #{transformer_forward.2} parent=5 // pred_check
      %p276 = pneg %p275
    $region14: #{transformer_forward.2} parent=5 // pred_check_branch
      %278 = sbr.rel (%p276) target = $region16
    $region15: #{transformer_forward.2} parent=5 // pred_region
      // Predicated region
      $region17: #{transformer_forward.2} parent=15 // pred_check
        %p279 = pneg %p46
      $region18: #{transformer_forward.2} parent=15 // pred_check_branch
        %281 = sbr.rel (%p279) target = $region20
      $region19: #{transformer_forward.2} parent=15 // pred_region
        %s282 = smul.u32 4, %s21
        %p283 = scmp.lt.s32.totalorder %s282, 7
        %s284 = scalar_select %p283, %s282, 7
        %s285 = smul.addr %s284, 4
        %s286 = smul.addr %s285, 8
        %s287 = scalar_lea.vmem %s0, %s286
        %s288 = smul.u32 4, %s21
      $region20: #{transformer_forward.2} parent=15 // pred_fallthru
        _
      // Predicated region
      $region21: #{transformer_forward.2} parent=15 // pred_check
        %p289 = pneg %p72
      $region22: #{transformer_forward.2} parent=15 // pred_check_branch
        %291 = sbr.rel (%p289) target = $region24
      $region23: #{transformer_forward.2} parent=15 // pred_region
        %p292 = scmp.lt.s32.totalorder %s22, 1
        %s293 = scalar_select %p292, %s22, 1
        %s294 = smul.addr %s293, 16
        %s295 = smul.addr %s294, 4
        %s296 = scalar_lea.vmem %s1, %s295
      $region24: #{transformer_forward.2} parent=15 // pred_fallthru
        _
      // Predicated region
      $region25: #{transformer_forward.2} parent=15 // pred_check
        %p297 = pneg %p98
      $region26: #{transformer_forward.2} parent=15 // pred_check_branch
        %299 = sbr.rel (%p297) target = $region28
      $region27: #{transformer_forward.2} parent=15 // pred_region
        %p300 = scmp.lt.s32.totalorder %s22, 1
        %s301 = scalar_select %p300, %s22, 1
        %s302 = smul.addr %s301, 16
        %s303 = smul.addr %s302, 4
        %s304 = scalar_lea.vmem %s2, %s303
      $region28: #{transformer_forward.2} parent=15 // pred_fallthru
        _
      // Predicated region
      $region29: #{transformer_forward.2} parent=15 // pred_check
        %p305 = pneg %p124
      $region30: #{transformer_forward.2} parent=15 // pred_check_branch
        %307 = sbr.rel (%p305) target = $region32
      $region31: #{transformer_forward.2} parent=15 // pred_region
        %p308 = scmp.lt.s32.totalorder %s22, 1
        %s309 = scalar_select %p308, %s22, 1
        %s310 = smul.addr %s309, 16
        %s311 = smul.addr %s310, 4
        %s312 = scalar_lea.vmem %s3, %s311
      $region32: #{transformer_forward.2} parent=15 // pred_fallthru
        _
      // Predicated region
      $region33: #{transformer_forward.2} parent=15 // pred_check
        %p313 = pneg %p150
      $region34: #{transformer_forward.2} parent=15 // pred_check_branch
        %315 = sbr.rel (%p313) target = $region36
      $region35: #{transformer_forward.2} parent=15 // pred_region
        %p316 = scmp.lt.s32.totalorder %s22, 1
        %s317 = scalar_select %p316, %s22, 1
        %s318 = smul.addr %s317, 16
        %s319 = smul.addr %s318, 4
        %s320 = scalar_lea.vmem %s4, %s319
      $region36: #{transformer_forward.2} parent=15 // pred_fallthru
        _
      // Predicated region
      $region37: #{transformer_forward.2} parent=15 // pred_check
        %p321 = pneg %p176
      $region38: #{transformer_forward.2} parent=15 // pred_check_branch
        %323 = sbr.rel (%p321) target = $region40
      $region39: #{transformer_forward.2} parent=15 // pred_region
        %p324 = scmp.lt.s32.totalorder %s22, 1
        %s325 = scalar_select %p324, %s22, 1
        %s326 = smul.addr %s325, 32
        %s327 = smul.addr %s326, 4
        %s328 = scalar_lea.vmem %s5, %s327
      $region40: #{transformer_forward.2} parent=15 // pred_fallthru
        _
      // Predicated region
      $region41: #{transformer_forward.2} parent=15 // pred_check
        %p329 = pneg %p202
      $region42: #{transformer_forward.2} parent=15 // pred_check_branch
        %331 = sbr.rel (%p329) target = $region44
      $region43: #{transformer_forward.2} parent=15 // pred_region
        %p332 = scmp.lt.s32.totalorder %s22, 1
        %s333 = scalar_select %p332, %s22, 1
        %s334 = smul.addr %s333, 32
        %s335 = smul.addr %s334, 4
        %s336 = scalar_lea.vmem %s6, %s335
      $region44: #{transformer_forward.2} parent=15 // pred_fallthru
        _
      // Predicated region
      $region45: #{transformer_forward.2} parent=15 // pred_check
        %p337 = pneg %p228
      $region46: #{transformer_forward.2} parent=15 // pred_check_branch
        %339 = sbr.rel (%p337) target = $region48
      $region47: #{transformer_forward.2} parent=15 // pred_region
        %p340 = scmp.lt.s32.totalorder %s22, 1
        %s341 = scalar_select %p340, %s22, 1
        %s342 = smul.addr %s341, 4
        %s343 = smul.addr %s342, 8
        %s344 = scalar_lea.vmem %s7, %s343
      $region48: #{transformer_forward.2} parent=15 // pred_fallthru
        _
    $region16: #{transformer_forward.2} parent=5 // pred_fallthru
      _
    %p345 = scmp.le.s32.totalorder 1, %s14
    %p346 = scmp.lt.s32.totalorder %s14, 5
    %p347 = pnand %p345, %p346
    %p348 = pneg %p347
    // Predicated region
    $region49: #{transformer_forward.2} parent=5 // pred_check
      _
    $region50: #{transformer_forward.2} parent=5 // pred_check_branch
      %350 = sbr.rel (%p347) target = $region52
    $region51: #{transformer_forward.2} parent=5 // pred_region
      %s351 = ssub.s32 %s14, 1
      %s352 = smul.u32 4, %s23
      %p353 = scmp.lt.s32.totalorder %s352, 7
      %s354 = scalar_select %p353, %s352, 7
      %s355 = smul.addr %s354, 4
      %s356 = smul.addr %s355, 8
      %s357 = scalar_lea.vmem %s0, %s356
      %p358 = pneg %p52
      %p359 = pneg %p49
      %p360 = scmp.lt.s32.totalorder %s24, 1
      %s361 = scalar_select %p360, %s24, 1
      %s362 = smul.addr %s361, 16
      %s363 = smul.addr %s362, 4
      %s364 = scalar_lea.vmem %s1, %s363
      %p365 = pneg %p78
      %p366 = pneg %p75
      %p367 = scmp.lt.s32.totalorder %s24, 1
      %s368 = scalar_select %p367, %s24, 1
      %s369 = smul.addr %s368, 16
      %s370 = smul.addr %s369, 4
      %s371 = scalar_lea.vmem %s2, %s370
      %p372 = pneg %p104
      %p373 = pneg %p101
      %p374 = scmp.lt.s32.totalorder %s24, 1
      %s375 = scalar_select %p374, %s24, 1
      %s376 = smul.addr %s375, 16
      %s377 = smul.addr %s376, 4
      %s378 = scalar_lea.vmem %s3, %s377
      %p379 = pneg %p130
      %p380 = pneg %p127
      %p381 = scmp.lt.s32.totalorder %s24, 1
      %s382 = scalar_select %p381, %s24, 1
      %s383 = smul.addr %s382, 16
      %s384 = smul.addr %s383, 4
      %s385 = scalar_lea.vmem %s4, %s384
      %p386 = pneg %p156
      %p387 = pneg %p153
      %p388 = scmp.lt.s32.totalorder %s24, 1
      %s389 = scalar_select %p388, %s24, 1
      %s390 = smul.addr %s389, 32
      %s391 = smul.addr %s390, 4
      %s392 = scalar_lea.vmem %s5, %s391
      %p393 = pneg %p182
      %p394 = pneg %p179
      %p395 = scmp.lt.s32.totalorder %s24, 1
      %s396 = scalar_select %p395, %s24, 1
      %s397 = smul.addr %s396, 32
      %s398 = smul.addr %s397, 4
      %s399 = scalar_lea.vmem %s6, %s398
      %p400 = pneg %p208
      %p401 = pneg %p205
      %p402 = scmp.lt.s32.totalorder %s24, 1
      %s403 = scalar_select %p402, %s24, 1
      %s404 = smul.addr %s403, 4
      %s405 = smul.addr %s404, 8
      %s406 = scalar_lea.vmem %s7, %s405
      %p407 = pneg %p234
      %p408 = pneg %p231
      %p409 = pneg %p260
      %p410 = pneg %p257
      %s411 = smul.u32 4, %s23
      %p412 = scmp.lt.s32.totalorder %s411, 7
      %s413 = scalar_select %p412, %s411, 7
      %s414 = smul.addr %s413, 4
      %s415 = smul.addr %s414, 8
      %s416 = scalar_lea.vmem %s8, %s415
      %s417 = smul.u32 4, %s23
      %p418 = scmp.lt.s32.totalorder %s417, 7
      %s419 = scalar_select %p418, %s417, 7
      %s420 = smul.addr %s419, 4
      %s421 = smul.addr %s420, 8
      %s422 = scalar_lea.vmem %s0, %s421
      %s423 = smul.u32 4, %s23
      %p424 = scmp.lt.s32.totalorder %s24, 1
      %s425 = scalar_select %p424, %s24, 1
      %s426 = smul.addr %s425, 16
      %s427 = smul.addr %s426, 4
      %s428 = scalar_lea.vmem %s1, %s427
      %p429 = scmp.lt.s32.totalorder %s24, 1
      %s430 = scalar_select %p429, %s24, 1
      %s431 = smul.addr %s430, 16
      %s432 = smul.addr %s431, 4
      %s433 = scalar_lea.vmem %s2, %s432
      %p434 = scmp.lt.s32.totalorder %s24, 1
      %s435 = scalar_select %p434, %s24, 1
      %s436 = smul.addr %s435, 16
      %s437 = smul.addr %s436, 4
      %s438 = scalar_lea.vmem %s3, %s437
      %p439 = scmp.lt.s32.totalorder %s24, 1
      %s440 = scalar_select %p439, %s24, 1
      %s441 = smul.addr %s440, 16
      %s442 = smul.addr %s441, 4
      %s443 = scalar_lea.vmem %s4, %s442
      %p444 = scmp.lt.s32.totalorder %s24, 1
      %s445 = scalar_select %p444, %s24, 1
      %s446 = smul.addr %s445, 32
      %s447 = smul.addr %s446, 4
      %s448 = scalar_lea.vmem %s5, %s447
      %p449 = scmp.lt.s32.totalorder %s24, 1
      %s450 = scalar_select %p449, %s24, 1
      %s451 = smul.addr %s450, 32
      %s452 = smul.addr %s451, 4
      %s453 = scalar_lea.vmem %s6, %s452
      %p454 = scmp.lt.s32.totalorder %s24, 1
      %s455 = scalar_select %p454, %s24, 1
      %s456 = smul.addr %s455, 4
      %s457 = smul.addr %s456, 8
      %s458 = scalar_lea.vmem %s7, %s457
      %s459 = smul.u32 4, %s23
      %p460 = scmp.lt.s32.totalorder %s459, 7
      %s461 = scalar_select %p460, %s459, 7
      %s462 = smul.addr %s461, 4
      %s463 = smul.addr %s462, 8
      %s464 = scalar_lea.vmem %s8, %s463
      %s465 = smul.u32 4, %s23
      %p467 = scmp.eq.s32.totalorder %s24, 0
      // Predicated region
      $region53: #{transformer_forward.2} parent=51 // pred_check
        %p468 = pneg %p467
      $region54: #{transformer_forward.2} parent=51 // pred_check_branch
        %470 = sbr.rel (%p468) target = $region56
      $region55: #{transformer_forward.2} parent=51 // pred_region
        %v471 = vld [vmem:[%s422] sm:$0xff]
        %v472 = vld [vmem:[%s422 + $0x8] sm:$0xff]
        %v473 = vld [vmem:[%s422 + $0x10] sm:$0xff]
        %v474 = vld [vmem:[%s422 + $0x18] sm:$0xff]
        %v475 = vld [vmem:[%s422 + $0x20] sm:$0xff]
        %v476 = vld [vmem:[%s422 + $0x28] sm:$0xff]
        %v477 = vld [vmem:[%s422 + $0x30] sm:$0xff]
        %v478 = vld [vmem:[%s422 + $0x38] sm:$0xff]
        %v479 = vld [vmem:[%s422 + $0x40] sm:$0xff]
        %v480 = vld [vmem:[%s422 + $0x48] sm:$0xff]
        %v481 = vld [vmem:[%s422 + $0x50] sm:$0xff]
        %v482 = vld [vmem:[%s422 + $0x58] sm:$0xff]
        %v483 = vld [vmem:[%s422 + $0x60] sm:$0xff]
        %v484 = vld [vmem:[%s422 + $0x68] sm:$0xff]
        %v485 = vld [vmem:[%s422 + $0x70] sm:$0xff]
        %v486 = vld [vmem:[%s422 + $0x78] sm:$0xff]
        %487 = vst [vmem:[%s464] sm:$0xff] %v471
        %488 = vst [vmem:[%s464 + $0x8] sm:$0xff] %v472
        %489 = vst [vmem:[%s464 + $0x10] sm:$0xff] %v473
        %490 = vst [vmem:[%s464 + $0x18] sm:$0xff] %v474
        %491 = vst [vmem:[%s464 + $0x20] sm:$0xff] %v475
        %492 = vst [vmem:[%s464 + $0x28] sm:$0xff] %v476
        %493 = vst [vmem:[%s464 + $0x30] sm:$0xff] %v477
        %494 = vst [vmem:[%s464 + $0x38] sm:$0xff] %v478
        %495 = vst [vmem:[%s464 + $0x40] sm:$0xff] %v479
        %496 = vst [vmem:[%s464 + $0x48] sm:$0xff] %v480
        %497 = vst [vmem:[%s464 + $0x50] sm:$0xff] %v481
        %498 = vst [vmem:[%s464 + $0x58] sm:$0xff] %v482
        %499 = vst [vmem:[%s464 + $0x60] sm:$0xff] %v483
        %500 = vst [vmem:[%s464 + $0x68] sm:$0xff] %v484
        %501 = vst [vmem:[%s464 + $0x70] sm:$0xff] %v485
        %502 = vst [vmem:[%s464 + $0x78] sm:$0xff] %v486
      $region56: #{transformer_forward.2} parent=51 // pred_fallthru
        _
      %v503 = vld [vmem:[%s458] ss:$0 sm:$0xff]
      %v504 = vld [vmem:[%s458 + $0x1] ss:$0 sm:$0xff]
      %v505 = vld [vmem:[%s458 + $0x2] ss:$0 sm:$0xff]
      %v506 = vld [vmem:[%s458 + $0x3] ss:$0 sm:$0xff]
      %s507 = scalar_lea.vmem %s458, 4
      %v508 = vld [vmem:[%s507] ss:$8 sm:$0x3]
      %v509 = vld [vmem:[%s458 + $0x5] ss:$0 sm:$0xff]
      %v510 = vld [vmem:[%s458 + $0x6] ss:$0 sm:$0xff]
      %v511 = vld [vmem:[%s458 + $0x7] ss:$0 sm:$0xff]
      %v512 = vld [vmem:[%s458 + $0x10] ss:$0 sm:$0xff]
      %v513 = vld [vmem:[%s458 + $0x11] ss:$0 sm:$0xff]
      %v514 = vld [vmem:[%s464] sm:$0xff]
      %v515 = vld [vmem:[%s464 + $0x8] sm:$0xff]
      %v516 = vld [vmem:[%s464 + $0x10] sm:$0xff]
      %v517 = vld [vmem:[%s464 + $0x18] sm:$0xff]
      %v518 = vld [vmem:[%s464 + $0x20] sm:$0xff]
      %v519 = vld [vmem:[%s464 + $0x28] sm:$0xff]
      %v520 = vld [vmem:[%s464 + $0x30] sm:$0xff]
      %v521 = vld [vmem:[%s464 + $0x38] sm:$0xff]
      %v522 = vld [vmem:[%s464 + $0x40] sm:$0xff]
      %v523 = vld [vmem:[%s464 + $0x48] sm:$0xff]
      %v524 = vld [vmem:[%s464 + $0x50] sm:$0xff]
      %v525 = vld [vmem:[%s464 + $0x58] sm:$0xff]
      %v526 = vld [vmem:[%s464 + $0x60] sm:$0xff]
      %v527 = vld [vmem:[%s464 + $0x68] sm:$0xff]
      %v528 = vld [vmem:[%s464 + $0x70] sm:$0xff]
      %v529 = vld [vmem:[%s464 + $0x78] sm:$0xff]
      %v530 = vpack.c.bf16 %v515, %v514
      %v531 = vpack.c.bf16 %v517, %v516
      %v532 = vpack.c.bf16 %v519, %v518
      %v533 = vpack.c.bf16 %v521, %v520
      %v534 = vpack.c.bf16 %v523, %v522
      %v535 = vpack.c.bf16 %v525, %v524
      %v536 = vpack.c.bf16 %v527, %v526
      %v537 = vpack.c.bf16 %v529, %v528
      %v538 = vld [vmem:[%s428] sm:$0xf]
      %v539 = vld [vmem:[%s428 + $0x4] sm:$0xf]
      %v540 = vld [vmem:[%s428 + $0x8] sm:$0xf]
      %v541 = vld [vmem:[%s428 + $0xc] sm:$0xf]
      %v542 = vld [vmem:[%s428 + $0x10] sm:$0xf]
      %v543 = vld [vmem:[%s428 + $0x14] sm:$0xf]
      %v544 = vld [vmem:[%s428 + $0x18] sm:$0xf]
      %v545 = vld [vmem:[%s428 + $0x1c] sm:$0xf]
      %v546 = vld [vmem:[%s428 + $0x20] sm:$0xf]
      %v547 = vld [vmem:[%s428 + $0x24] sm:$0xf]
      %v548 = vld [vmem:[%s428 + $0x28] sm:$0xf]
      %v549 = vld [vmem:[%s428 + $0x2c] sm:$0xf]
      %v550 = vld [vmem:[%s428 + $0x30] sm:$0xf]
      %v551 = vld [vmem:[%s428 + $0x34] sm:$0xf]
      %v552 = vld [vmem:[%s428 + $0x38] sm:$0xf]
      %v553 = vld [vmem:[%s428 + $0x3c] sm:$0xf]
      %v570 = vunpack.c.l.b16 %v538
      %v571 = vunpack.c.l.b16 %v539
      %v572 = vunpack.c.l.b16 %v540
      %v573 = vunpack.c.l.b16 %v541
      %v574 = vunpack.c.l.b16 %v542
      %v575 = vunpack.c.l.b16 %v543
      %v576 = vunpack.c.l.b16 %v544
      %v577 = vunpack.c.l.b16 %v545
      %v578 = vunpack.c.l.b16 %v546
      %v579 = vunpack.c.l.b16 %v547
      %v580 = vunpack.c.l.b16 %v548
      %v581 = vunpack.c.l.b16 %v549
      %v582 = vunpack.c.l.b16 %v550
      %v583 = vunpack.c.l.b16 %v551
      %v584 = vunpack.c.l.b16 %v552
      %v585 = vunpack.c.l.b16 %v553
      %v586 = vpack.c.b16 %v571, %v570
      %v587 = vpack.c.b16 %v573, %v572
      %v588 = vpack.c.b16 %v575, %v574
      %v589 = vpack.c.b16 %v577, %v576
      %v590 = vpack.c.b16 %v579, %v578
      %v591 = vpack.c.b16 %v581, %v580
      %v592 = vpack.c.b16 %v583, %v582
      %v593 = vpack.c.b16 %v585, %v584
      %602 = vmatprep.subr.bf16.mxu0 0
      %603 = vmatpush1.bf16.msra.mxu0 %v586
      %604 = vmatprep.subr.bf16.mxu0 0
      %605 = vmatpush1.bf16.msra.mxu0 %v587
      %606 = vmatprep.subr.bf16.mxu0 0
      %607 = vmatpush1.bf16.msra.mxu0 %v588
      %608 = vmatprep.subr.bf16.mxu0 0
      %609 = vmatpush1.bf16.msra.mxu0 %v589
      %610 = vmatprep.subr.bf16.mxu0 0
      %611 = vmatpush1.bf16.msra.mxu0 %v590
      %612 = vmatprep.subr.bf16.mxu0 0
      %613 = vmatpush1.bf16.msra.mxu0 %v591
      %614 = vmatprep.subr.bf16.mxu0 0
      %615 = vmatpush1.bf16.msra.mxu0 %v592
      %616 = vmatprep.subr.bf16.mxu0 0
      %617 = vmatpush1.bf16.msra.mxu0 %v593
      %618 = vmatprep.subr.bf16.mxu0 0
      %619 = vmatpush1.bf16.msra.mxu0 0
      %620 = vmatprep.subr.bf16.mxu0 0
      %621 = vmatpush1.bf16.msra.mxu0 0
      %622 = vmatprep.subr.bf16.mxu0 0
      %623 = vmatpush1.bf16.msra.mxu0 0
      %624 = vmatprep.subr.bf16.mxu0 0
      %625 = vmatpush1.bf16.msra.mxu0 0
      %626 = vmatprep.subr.bf16.mxu0 0
      %627 = vmatpush1.bf16.msra.mxu0 0
      %628 = vmatprep.subr.bf16.mxu0 0
      %629 = vmatpush1.bf16.msra.mxu0 0
      %630 = vmatprep.subr.bf16.mxu0 0
      %631 = vmatpush1.bf16.msra.mxu0 0
      %632 = vmatprep.subr.bf16.mxu0 0
      %633 = vmatpush1.bf16.msra.mxu0 0
      %634 = vmatprep.mubr.bf16.mxu0 0
      %635 = vmatmul.mubr.bf16.gmra.mrb[0].mxu0 %v530
      %v636 = vpop.f32.mrb[0].mxu0
      %v637 = vadd.f32 %v503, %v636
      %v638 = vpop.f32.mrb[0].mxu0
      %v639 = vpop.f32.mrb[0].mxu0
      %v640 = vadd.f32 %v503, %v639
      %v641 = vpop.f32.mrb[0].mxu0
      %642 = vmatprep.mubr.bf16.mxu0 0
      %643 = vmatmul.mubr.bf16.gmra.mrb[0].mxu0 %v531
      %v644 = vpop.f32.mrb[0].mxu0
      %v645 = vadd.f32 %v503, %v644
      %v646 = vpop.f32.mrb[0].mxu0
      %v647 = vpop.f32.mrb[0].mxu0
      %v648 = vadd.f32 %v503, %v647
      %v649 = vpop.f32.mrb[0].mxu0
      %650 = vmatprep.mubr.bf16.mxu0 0
      %651 = vmatmul.mubr.bf16.gmra.mrb[0].mxu0 %v532
      %v652 = vpop.f32.mrb[0].mxu0
      %v653 = vadd.f32 %v503, %v652
      %v654 = vpop.f32.mrb[0].mxu0
      %v655 = vpop.f32.mrb[0].mxu0
      %v656 = vadd.f32 %v503, %v655
      %v657 = vpop.f32.mrb[0].mxu0
      %658 = vmatprep.mubr.bf16.mxu0 0
      %659 = vmatmul.mubr.bf16.gmra.mrb[0].mxu0 %v533
      %v660 = vpop.f32.mrb[0].mxu0
      %v661 = vadd.f32 %v503, %v660
      %v662 = vpop.f32.mrb[0].mxu0
      %v663 = vpop.f32.mrb[0].mxu0
      %v664 = vadd.f32 %v503, %v663
      %v665 = vpop.f32.mrb[0].mxu0
      %666 = vmatprep.mubr.bf16.mxu0 0
      %667 = vmatmul.mubr.bf16.gmra.mrb[0].mxu0 %v534
      %v668 = vpop.f32.mrb[0].mxu0
      %v669 = vadd.f32 %v503, %v668
      %v670 = vpop.f32.mrb[0].mxu0
      %v671 = vpop.f32.mrb[0].mxu0
      %v672 = vadd.f32 %v503, %v671
      %v673 = vpop.f32.mrb[0].mxu0
      %674 = vmatprep.mubr.bf16.mxu0 0
      %675 = vmatmul.mubr.bf16.gmra.mrb[0].mxu0 %v535
      %v676 = vpop.f32.mrb[0].mxu0
      %v677 = vadd.f32 %v503, %v676
      %v678 = vpop.f32.mrb[0].mxu0
      %v679 = vpop.f32.mrb[0].mxu0
      %v680 = vadd.f32 %v503, %v679
      %v681 = vpop.f32.mrb[0].mxu0
      %682 = vmatprep.mubr.bf16.mxu0 0
      %683 = vmatmul.mubr.bf16.gmra.mrb[0].mxu0 %v536
      %v684 = vpop.f32.mrb[0].mxu0
      %v685 = vadd.f32 %v503, %v684
      %v686 = vpop.f32.mrb[0].mxu0
      %v687 = vpop.f32.mrb[0].mxu0
      %v688 = vadd.f32 %v503, %v687
      %v689 = vpop.f32.mrb[0].mxu0
      %690 = vmatprep.mubr.bf16.mxu0 0
      %691 = vmatmul.mubr.bf16.gmra.mrb[0].mxu0 %v537
      %v692 = vpop.f32.mrb[0].mxu0
      %v693 = vadd.f32 %v503, %v692
      %v694 = vpop.f32.mrb[0].mxu0
      %v695 = vpop.f32.mrb[0].mxu0
      %v696 = vadd.f32 %v503, %v695
      %v697 = vpop.f32.mrb[0].mxu0
      %698 = vdwg.mxu0
      %v699 = vld [vmem:[%s433] sm:$0xf]
      %v700 = vld [vmem:[%s433 + $0x4] sm:$0xf]
      %v701 = vld [vmem:[%s433 + $0x8] sm:$0xf]
      %v702 = vld [vmem:[%s433 + $0xc] sm:$0xf]
      %v703 = vld [vmem:[%s433 + $0x10] sm:$0xf]
      %v704 = vld [vmem:[%s433 + $0x14] sm:$0xf]
      %v705 = vld [vmem:[%s433 + $0x18] sm:$0xf]
      %v706 = vld [vmem:[%s433 + $0x1c] sm:$0xf]
      %v707 = vld [vmem:[%s433 + $0x20] sm:$0xf]
      %v708 = vld [vmem:[%s433 + $0x24] sm:$0xf]
      %v709 = vld [vmem:[%s433 + $0x28] sm:$0xf]
      %v710 = vld [vmem:[%s433 + $0x2c] sm:$0xf]
      %v711 = vld [vmem:[%s433 + $0x30] sm:$0xf]
      %v712 = vld [vmem:[%s433 + $0x34] sm:$0xf]
      %v713 = vld [vmem:[%s433 + $0x38] sm:$0xf]
      %v714 = vld [vmem:[%s433 + $0x3c] sm:$0xf]
      %v731 = vunpack.c.l.b16 %v699
      %v732 = vunpack.c.l.b16 %v700
      %v733 = vunpack.c.l.b16 %v701
      %v734 = vunpack.c.l.b16 %v702
      %v735 = vunpack.c.l.b16 %v703
      %v736 = vunpack.c.l.b16 %v704
      %v737 = vunpack.c.l.b16 %v705
      %v738 = vunpack.c.l.b16 %v706
      %v739 = vunpack.c.l.b16 %v707
      %v740 = vunpack.c.l.b16 %v708
      %v741 = vunpack.c.l.b16 %v709
      %v742 = vunpack.c.l.b16 %v710
      %v743 = vunpack.c.l.b16 %v711
      %v744 = vunpack.c.l.b16 %v712
      %v745 = vunpack.c.l.b16 %v713
      %v746 = vunpack.c.l.b16 %v714
      %v747 = vpack.c.b16 %v732, %v731
      %v748 = vpack.c.b16 %v734, %v733
      %v749 = vpack.c.b16 %v736, %v735
      %v750 = vpack.c.b16 %v738, %v737
      %v751 = vpack.c.b16 %v740, %v739
      %v752 = vpack.c.b16 %v742, %v741
      %v753 = vpack.c.b16 %v744, %v743
      %v754 = vpack.c.b16 %v746, %v745
      %763 = vmatprep.subr.bf16.mxu0 0
      %764 = vmatpush1.bf16.msra.mxu0 %v747
      %765 = vmatprep.subr.bf16.mxu0 0
      %766 = vmatpush1.bf16.msra.mxu0 %v748
      %767 = vmatprep.subr.bf16.mxu0 0
      %768 = vmatpush1.bf16.msra.mxu0 %v749
      %769 = vmatprep.subr.bf16.mxu0 0
      %770 = vmatpush1.bf16.msra.mxu0 %v750
      %771 = vmatprep.subr.bf16.mxu0 0
      %772 = vmatpush1.bf16.msra.mxu0 %v751
      %773 = vmatprep.subr.bf16.mxu0 0
      %774 = vmatpush1.bf16.msra.mxu0 %v752
      %775 = vmatprep.subr.bf16.mxu0 0
      %776 = vmatpush1.bf16.msra.mxu0 %v753
      %777 = vmatprep.subr.bf16.mxu0 0
      %778 = vmatpush1.bf16.msra.mxu0 %v754
      %779 = vmatprep.subr.bf16.mxu0 0
      %780 = vmatpush1.bf16.msra.mxu0 0
      %781 = vmatprep.subr.bf16.mxu0 0
      %782 = vmatpush1.bf16.msra.mxu0 0
      %783 = vmatprep.subr.bf16.mxu0 0
      %784 = vmatpush1.bf16.msra.mxu0 0
      %785 = vmatprep.subr.bf16.mxu0 0
      %786 = vmatpush1.bf16.msra.mxu0 0
      %787 = vmatprep.subr.bf16.mxu0 0
      %788 = vmatpush1.bf16.msra.mxu0 0
      %789 = vmatprep.subr.bf16.mxu0 0
      %790 = vmatpush1.bf16.msra.mxu0 0
      %791 = vmatprep.subr.bf16.mxu0 0
      %792 = vmatpush1.bf16.msra.mxu0 0
      %793 = vmatprep.subr.bf16.mxu0 0
      %794 = vmatpush1.bf16.msra.mxu0 0
      %795 = vmatprep.mubr.bf16.mxu0 0
      %796 = vmatmul.mubr.bf16.gmra.mrb[0].mxu0 %v530
      %v797 = vpop.f32.mrb[0].mxu0
      %v798 = vadd.f32 %v504, %v797
      %v799 = vpop.f32.mrb[0].mxu0
      %v800 = vpop.f32.mrb[0].mxu0
      %v801 = vadd.f32 %v504, %v800
      %v802 = vpop.f32.mrb[0].mxu0
      %803 = vmatprep.mubr.bf16.mxu0 0
      %804 = vmatmul.mubr.bf16.gmra.mrb[0].mxu0 %v531
      %v805 = vpop.f32.mrb[0].mxu0
      %v806 = vadd.f32 %v504, %v805
      %v807 = vpop.f32.mrb[0].mxu0
      %v808 = vpop.f32.mrb[0].mxu0
      %v809 = vadd.f32 %v504, %v808
      %v810 = vpop.f32.mrb[0].mxu0
      %811 = vmatprep.mubr.bf16.mxu0 0
      %812 = vmatmul.mubr.bf16.gmra.mrb[0].mxu0 %v532
      %v813 = vpop.f32.mrb[0].mxu0
      %v814 = vadd.f32 %v504, %v813
      %v815 = vpop.f32.mrb[0].mxu0
      %v816 = vpop.f32.mrb[0].mxu0
      %v817 = vadd.f32 %v504, %v816
      %v818 = vpop.f32.mrb[0].mxu0
      %819 = vmatprep.mubr.bf16.mxu0 0
      %820 = vmatmul.mubr.bf16.gmra.mrb[0].mxu0 %v533
      %v821 = vpop.f32.mrb[0].mxu0
      %v822 = vadd.f32 %v504, %v821
      %v823 = vpop.f32.mrb[0].mxu0
      %v824 = vpop.f32.mrb[0].mxu0
      %v825 = vadd.f32 %v504, %v824
      %v826 = vpop.f32.mrb[0].mxu0
      %827 = vmatprep.mubr.bf16.mxu0 0
      %828 = vmatmul.mubr.bf16.gmra.mrb[0].mxu0 %v534
      %v829 = vpop.f32.mrb[0].mxu0
      %v830 = vadd.f32 %v504, %v829
      %v831 = vpop.f32.mrb[0].mxu0
      %v832 = vpop.f32.mrb[0].mxu0
      %v833 = vadd.f32 %v504, %v832
      %v834 = vpop.f32.mrb[0].mxu0
      %835 = vmatprep.mubr.bf16.mxu0 0
      %836 = vmatmul.mubr.bf16.gmra.mrb[0].mxu0 %v535
      %v837 = vpop.f32.mrb[0].mxu0
      %v838 = vadd.f32 %v504, %v837
      %v839 = vpop.f32.mrb[0].mxu0
      %v840 = vpop.f32.mrb[0].mxu0
      %v841 = vadd.f32 %v504, %v840
      %v842 = vpop.f32.mrb[0].mxu0
      %843 = vmatprep.mubr.bf16.mxu0 0
      %844 = vmatmul.mubr.bf16.gmra.mrb[0].mxu0 %v536
      %v845 = vpop.f32.mrb[0].mxu0
      %v846 = vadd.f32 %v504, %v845
      %v847 = vpop.f32.mrb[0].mxu0
      %v848 = vpop.f32.mrb[0].mxu0
      %v849 = vadd.f32 %v504, %v848
      %v850 = vpop.f32.mrb[0].mxu0
      %851 = vmatprep.mubr.bf16.mxu0 0
      %852 = vmatmul.mubr.bf16.gmra.mrb[0].mxu0 %v537
      %v853 = vpop.f32.mrb[0].mxu0
      %v854 = vadd.f32 %v504, %v853
      %v855 = vpop.f32.mrb[0].mxu0
      %v856 = vpop.f32.mrb[0].mxu0
      %v857 = vadd.f32 %v504, %v856
      %v858 = vpop.f32.mrb[0].mxu0
      %859 = vdwg.mxu0
      %v860 = vld [vmem:[%s438] sm:$0xf]
      %v861 = vld [vmem:[%s438 + $0x4] sm:$0xf]
      %v862 = vld [vmem:[%s438 + $0x8] sm:$0xf]
      %v863 = vld [vmem:[%s438 + $0xc] sm:$0xf]
      %v864 = vld [vmem:[%s438 + $0x10] sm:$0xf]
      %v865 = vld [vmem:[%s438 + $0x14] sm:$0xf]
      %v866 = vld [vmem:[%s438 + $0x18] sm:$0xf]
      %v867 = vld [vmem:[%s438 + $0x1c] sm:$0xf]
      %v868 = vld [vmem:[%s438 + $0x20] sm:$0xf]
      %v869 = vld [vmem:[%s438 + $0x24] sm:$0xf]
      %v870 = vld [vmem:[%s438 + $0x28] sm:$0xf]
      %v871 = vld [vmem:[%s438 + $0x2c] sm:$0xf]
      %v872 = vld [vmem:[%s438 + $0x30] sm:$0xf]
      %v873 = vld [vmem:[%s438 + $0x34] sm:$0xf]
      %v874 = vld [vmem:[%s438 + $0x38] sm:$0xf]
      %v875 = vld [vmem:[%s438 + $0x3c] sm:$0xf]
      %v892 = vunpack.c.l.b16 %v860
      %v893 = vunpack.c.l.b16 %v861
      %v894 = vunpack.c.l.b16 %v862
      %v895 = vunpack.c.l.b16 %v863
      %v896 = vunpack.c.l.b16 %v864
      %v897 = vunpack.c.l.b16 %v865
      %v898 = vunpack.c.l.b16 %v866
      %v899 = vunpack.c.l.b16 %v867
      %v900 = vunpack.c.l.b16 %v868
      %v901 = vunpack.c.l.b16 %v869
      %v902 = vunpack.c.l.b16 %v870
      %v903 = vunpack.c.l.b16 %v871
      %v904 = vunpack.c.l.b16 %v872
      %v905 = vunpack.c.l.b16 %v873
      %v906 = vunpack.c.l.b16 %v874
      %v907 = vunpack.c.l.b16 %v875
      %v908 = vpack.c.b16 %v893, %v892
      %v909 = vpack.c.b16 %v895, %v894
      %v910 = vpack.c.b16 %v897, %v896
      %v911 = vpack.c.b16 %v899, %v898
      %v912 = vpack.c.b16 %v901, %v900
      %v913 = vpack.c.b16 %v903, %v902
      %v914 = vpack.c.b16 %v905, %v904
      %v915 = vpack.c.b16 %v907, %v906
      %924 = vmatprep.subr.bf16.mxu0 0
      %925 = vmatpush1.bf16.msra.mxu0 %v908
      %926 = vmatprep.subr.bf16.mxu0 0
      %927 = vmatpush1.bf16.msra.mxu0 %v909
      %928 = vmatprep.subr.bf16.mxu0 0
      %929 = vmatpush1.bf16.msra.mxu0 %v910
      %930 = vmatprep.subr.bf16.mxu0 0
      %931 = vmatpush1.bf16.msra.mxu0 %v911
      %932 = vmatprep.subr.bf16.mxu0 0
      %933 = vmatpush1.bf16.msra.mxu0 %v912
      %934 = vmatprep.subr.bf16.mxu0 0
      %935 = vmatpush1.bf16.msra.mxu0 %v913
      %936 = vmatprep.subr.bf16.mxu0 0
      %937 = vmatpush1.bf16.msra.mxu0 %v914
      %938 = vmatprep.subr.bf16.mxu0 0
      %939 = vmatpush1.bf16.msra.mxu0 %v915
      %940 = vmatprep.subr.bf16.mxu0 0
      %941 = vmatpush1.bf16.msra.mxu0 0
      %942 = vmatprep.subr.bf16.mxu0 0
      %943 = vmatpush1.bf16.msra.mxu0 0
      %944 = vmatprep.subr.bf16.mxu0 0
      %945 = vmatpush1.bf16.msra.mxu0 0
      %946 = vmatprep.subr.bf16.mxu0 0
      %947 = vmatpush1.bf16.msra.mxu0 0
      %948 = vmatprep.subr.bf16.mxu0 0
      %949 = vmatpush1.bf16.msra.mxu0 0
      %950 = vmatprep.subr.bf16.mxu0 0
      %951 = vmatpush1.bf16.msra.mxu0 0
      %952 = vmatprep.subr.bf16.mxu0 0
      %953 = vmatpush1.bf16.msra.mxu0 0
      %954 = vmatprep.subr.bf16.mxu0 0
      %955 = vmatpush1.bf16.msra.mxu0 0
      %956 = vmatprep.mubr.bf16.mxu0 0
      %957 = vmatmul.mubr.bf16.gmra.mrb[0].mxu0 %v530
      %v958 = vpop.f32.mrb[0].mxu0
      %v959 = vadd.f32 %v505, %v958
      %v960 = vpop.f32.mrb[0].mxu0
      %v961 = vpop.f32.mrb[0].mxu0
      %v962 = vadd.f32 %v505, %v961
      %v963 = vpop.f32.mrb[0].mxu0
      %964 = vmatprep.mubr.bf16.mxu0 0
      %965 = vmatmul.mubr.bf16.gmra.mrb[0].mxu0 %v531
      %v966 = vpop.f32.mrb[0].mxu0
      %v967 = vadd.f32 %v505, %v966
      %v968 = vpop.f32.mrb[0].mxu0
      %v969 = vpop.f32.mrb[0].mxu0
      %v970 = vadd.f32 %v505, %v969
      %v971 = vpop.f32.mrb[0].mxu0
      %972 = vmatprep.mubr.bf16.mxu0 0
      %973 = vmatmul.mubr.bf16.gmra.mrb[0].mxu0 %v532
      %v974 = vpop.f32.mrb[0].mxu0
      %v975 = vadd.f32 %v505, %v974
      %v976 = vpop.f32.mrb[0].mxu0
      %v977 = vpop.f32.mrb[0].mxu0
      %v978 = vadd.f32 %v505, %v977
      %v979 = vpop.f32.mrb[0].mxu0
      %980 = vmatprep.mubr.bf16.mxu0 0
      %981 = vmatmul.mubr.bf16.gmra.mrb[0].mxu0 %v533
      %v982 = vpop.f32.mrb[0].mxu0
      %v983 = vadd.f32 %v505, %v982
      %v984 = vpop.f32.mrb[0].mxu0
      %v985 = vpop.f32.mrb[0].mxu0
      %v986 = vadd.f32 %v505, %v985
      %v987 = vpop.f32.mrb[0].mxu0
      %988 = vmatprep.mubr.bf16.mxu0 0
      %989 = vmatmul.mubr.bf16.gmra.mrb[0].mxu0 %v534
      %v990 = vpop.f32.mrb[0].mxu0
      %v991 = vadd.f32 %v505, %v990
      %v992 = vpop.f32.mrb[0].mxu0
      %v993 = vpop.f32.mrb[0].mxu0
      %v994 = vadd.f32 %v505, %v993
      %v995 = vpop.f32.mrb[0].mxu0
      %996 = vmatprep.mubr.bf16.mxu0 0
      %997 = vmatmul.mubr.bf16.gmra.mrb[0].mxu0 %v535
      %v998 = vpop.f32.mrb[0].mxu0
      %v999 = vadd.f32 %v505, %v998
      %v1000 = vpop.f32.mrb[0].mxu0
      %v1001 = vpop.f32.mrb[0].mxu0
      %v1002 = vadd.f32 %v505, %v1001
      %v1003 = vpop.f32.mrb[0].mxu0
      %1004 = vmatprep.mubr.bf16.mxu0 0
      %1005 = vmatmul.mubr.bf16.gmra.mrb[0].mxu0 %v536
      %v1006 = vpop.f32.mrb[0].mxu0
      %v1007 = vadd.f32 %v505, %v1006
      %v1008 = vpop.f32.mrb[0].mxu0
      %v1009 = vpop.f32.mrb[0].mxu0
      %v1010 = vadd.f32 %v505, %v1009
      %v1011 = vpop.f32.mrb[0].mxu0
      %1012 = vmatprep.mubr.bf16.mxu0 0
      %1013 = vmatmul.mubr.bf16.gmra.mrb[0].mxu0 %v537
      %v1014 = vpop.f32.mrb[0].mxu0
      %v1015 = vadd.f32 %v505, %v1014
      %v1016 = vpop.f32.mrb[0].mxu0
      %v1017 = vpop.f32.mrb[0].mxu0
      %v1018 = vadd.f32 %v505, %v1017
      %v1019 = vpop.f32.mrb[0].mxu0
      %1020 = vdwg.mxu0
      %v1021 = vpack.c.bf16 %v640, %v637
      %v1022 = vpack.c.bf16 %v648, %v645
      %v1023 = vpack.c.bf16 %v656, %v653
      %v1024 = vpack.c.bf16 %v664, %v661
      %v1025 = vpack.c.bf16 %v672, %v669
      %v1026 = vpack.c.bf16 %v680, %v677
      %v1027 = vpack.c.bf16 %v688, %v685
      %v1028 = vpack.c.bf16 %v696, %v693
      %v1029 = vpack.c.bf16 %v801, %v798
      %v1030 = vpack.c.bf16 %v809, %v806
      %v1031 = vpack.c.bf16 %v817, %v814
      %v1032 = vpack.c.bf16 %v825, %v822
      %v1033 = vpack.c.bf16 %v833, %v830
      %v1034 = vpack.c.bf16 %v841, %v838
      %v1035 = vpack.c.bf16 %v849, %v846
      %v1036 = vpack.c.bf16 %v857, %v854
      %v1037 = vpack.c.bf16 %v962, %v959
      %v1038 = vpack.c.bf16 %v970, %v967
      %v1039 = vpack.c.bf16 %v978, %v975
      %v1040 = vpack.c.bf16 %v986, %v983
      %v1041 = vpack.c.bf16 %v994, %v991
      %v1042 = vpack.c.bf16 %v1002, %v999
      %v1043 = vpack.c.bf16 %v1010, %v1007
      %v1044 = vpack.c.bf16 %v1018, %v1015
      %1045 = vmatprep.subr.bf16.mxu0 0
      %1046 = vmatpush1.bf16.xpose.msra.mxu0 %v1029
      %1047 = vmatprep.subr.bf16.mxu0 0
      %1048 = vmatpush1.bf16.xpose.msra.mxu0 %v1030
      %1049 = vmatprep.subr.bf16.mxu0 0
      %1050 = vmatpush1.bf16.xpose.msra.mxu0 0
      %1051 = vmatprep.subr.bf16.mxu0 0
      %1052 = vmatpush1.bf16.xpose.msra.mxu0 0
      %1053 = vmatprep.subr.bf16.mxu0 0
      %1054 = vmatpush1.bf16.xpose.msra.mxu0 0
      %1055 = vmatprep.subr.bf16.mxu0 0
      %1056 = vmatpush1.bf16.xpose.msra.mxu0 0
      %1057 = vmatprep.subr.bf16.mxu0 0
      %1058 = vmatpush1.bf16.xpose.msra.mxu0 0
      %1059 = vmatprep.subr.bf16.mxu0 0
      %1060 = vmatpush1.bf16.xpose.msra.mxu0 0
      %1061 = vmatprep.subr.bf16.mxu0 0
      %1062 = vmatpush1.bf16.xpose.msra.mxu0 0
      %1063 = vmatprep.subr.bf16.mxu0 0
      %1064 = vmatpush1.bf16.xpose.msra.mxu0 0
      %1065 = vmatprep.subr.bf16.mxu0 0
      %1066 = vmatpush1.bf16.xpose.msra.mxu0 0
      %1067 = vmatprep.subr.bf16.mxu0 0
      %1068 = vmatpush1.bf16.xpose.msra.mxu0 0
      %1069 = vmatprep.subr.bf16.mxu0 0
      %1070 = vmatpush1.bf16.xpose.msra.mxu0 0
      %1071 = vmatprep.subr.bf16.mxu0 0
      %1072 = vmatpush1.bf16.xpose.msra.mxu0 0
      %1073 = vmatprep.subr.bf16.mxu0 0
      %1074 = vmatpush1.bf16.xpose.msra.mxu0 0
      %1075 = vmatprep.subr.bf16.mxu0 0
      %1076 = vmatpush1.bf16.xpose.msra.mxu0 0
      %1077 = vmatprep.mubr.bf16.mxu0 0
      %1078 = vmatmul.mubr.bf16.gmra.mrb[0].mxu0 %v1021
      %v1079 = vpop.f32.mrb[0].mxu0
      %v1080 = vadd.f32 0.0, %v1079
      %v1081 = vpop.f32.mrb[0].mxu0
      %v1082 = vpop.f32.mrb[0].mxu0
      %v1083 = vadd.f32 0.0, %v1082
      %v1084 = vpop.f32.mrb[0].mxu0
      %1085 = vmatprep.mubr.bf16.mxu0 0
      %1086 = vmatmul.mubr.bf16.gmra.mrb[0].mxu0 %v1022
      %v1087 = vpop.f32.mrb[0].mxu0
      %v1088 = vadd.f32 0.0, %v1087
      %v1089 = vpop.f32.mrb[0].mxu0
      %v1090 = vpop.f32.mrb[0].mxu0
      %v1091 = vadd.f32 0.0, %v1090
      %v1092 = vpop.f32.mrb[0].mxu0
      %1093 = vdwg.mxu0
      %1094 = vmatprep.subr.bf16.mxu0 0
      %1095 = vmatpush1.bf16.xpose.msra.mxu0 %v1031
      %1096 = vmatprep.subr.bf16.mxu0 0
      %1097 = vmatpush1.bf16.xpose.msra.mxu0 %v1032
      %1098 = vmatprep.subr.bf16.mxu0 0
      %1099 = vmatpush1.bf16.xpose.msra.mxu0 0
      %1100 = vmatprep.subr.bf16.mxu0 0
      %1101 = vmatpush1.bf16.xpose.msra.mxu0 0
      %1102 = vmatprep.subr.bf16.mxu0 0
      %1103 = vmatpush1.bf16.xpose.msra.mxu0 0
      %1104 = vmatprep.subr.bf16.mxu0 0
      %1105 = vmatpush1.bf16.xpose.msra.mxu0 0
      %1106 = vmatprep.subr.bf16.mxu0 0
      %1107 = vmatpush1.bf16.xpose.msra.mxu0 0
      %1108 = vmatprep.subr.bf16.mxu0 0
      %1109 = vmatpush1.bf16.xpose.msra.mxu0 0
      %1110 = vmatprep.subr.bf16.mxu0 0
      %1111 = vmatpush1.bf16.xpose.msra.mxu0 0
      %1112 = vmatprep.subr.bf16.mxu0 0
      %1113 = vmatpush1.bf16.xpose.msra.mxu0 0
      %1114 = vmatprep.subr.bf16.mxu0 0
      %1115 = vmatpush1.bf16.xpose.msra.mxu0 0
      %1116 = vmatprep.subr.bf16.mxu0 0
      %1117 = vmatpush1.bf16.xpose.msra.mxu0 0
      %1118 = vmatprep.subr.bf16.mxu0 0
      %1119 = vmatpush1.bf16.xpose.msra.mxu0 0
      %1120 = vmatprep.subr.bf16.mxu0 0
      %1121 = vmatpush1.bf16.xpose.msra.mxu0 0
      %1122 = vmatprep.subr.bf16.mxu0 0
      %1123 = vmatpush1.bf16.xpose.msra.mxu0 0
      %1124 = vmatprep.subr.bf16.mxu0 0
      %1125 = vmatpush1.bf16.xpose.msra.mxu0 0
      %1126 = vmatprep.mubr.bf16.mxu0 0
      %1127 = vmatmul.mubr.bf16.gmra.mrb[0].mxu0 %v1023
      %v1128 = vpop.f32.mrb[0].mxu0
      %v1129 = vadd.f32 0.0, %v1128
      %v1130 = vpop.f32.mrb[0].mxu0
      %v1131 = vpop.f32.mrb[0].mxu0
      %v1132 = vadd.f32 0.0, %v1131
      %v1133 = vpop.f32.mrb[0].mxu0
      %1134 = vmatprep.mubr.bf16.mxu0 0
      %1135 = vmatmul.mubr.bf16.gmra.mrb[0].mxu0 %v1024
      %v1136 = vpop.f32.mrb[0].mxu0
      %v1137 = vadd.f32 0.0, %v1136
      %v1138 = vpop.f32.mrb[0].mxu0
      %v1139 = vpop.f32.mrb[0].mxu0
      %v1140 = vadd.f32 0.0, %v1139
      %v1141 = vpop.f32.mrb[0].mxu0
      %1142 = vdwg.mxu0
      %1143 = vmatprep.subr.bf16.mxu0 0
      %1144 = vmatpush1.bf16.xpose.msra.mxu0 %v1033
      %1145 = vmatprep.subr.bf16.mxu0 0
      %1146 = vmatpush1.bf16.xpose.msra.mxu0 %v1034
      %1147 = vmatprep.subr.bf16.mxu0 0
      %1148 = vmatpush1.bf16.xpose.msra.mxu0 0
      %1149 = vmatprep.subr.bf16.mxu0 0
      %1150 = vmatpush1.bf16.xpose.msra.mxu0 0
      %1151 = vmatprep.subr.bf16.mxu0 0
      %1152 = vmatpush1.bf16.xpose.msra.mxu0 0
      %1153 = vmatprep.subr.bf16.mxu0 0
      %1154 = vmatpush1.bf16.xpose.msra.mxu0 0
      %1155 = vmatprep.subr.bf16.mxu0 0
      %1156 = vmatpush1.bf16.xpose.msra.mxu0 0
      %1157 = vmatprep.subr.bf16.mxu0 0
      %1158 = vmatpush1.bf16.xpose.msra.mxu0 0
      %1159 = vmatprep.subr.bf16.mxu0 0
      %1160 = vmatpush1.bf16.xpose.msra.mxu0 0
      %1161 = vmatprep.subr.bf16.mxu0 0
      %1162 = vmatpush1.bf16.xpose.msra.mxu0 0
      %1163 = vmatprep.subr.bf16.mxu0 0
      %1164 = vmatpush1.bf16.xpose.msra.mxu0 0
      %1165 = vmatprep.subr.bf16.mxu0 0
      %1166 = vmatpush1.bf16.xpose.msra.mxu0 0
      %1167 = vmatprep.subr.bf16.mxu0 0
      %1168 = vmatpush1.bf16.xpose.msra.mxu0 0
      %1169 = vmatprep.subr.bf16.mxu0 0
      %1170 = vmatpush1.bf16.xpose.msra.mxu0 0
      %1171 = vmatprep.subr.bf16.mxu0 0
      %1172 = vmatpush1.bf16.xpose.msra.mxu0 0
      %1173 = vmatprep.subr.bf16.mxu0 0
      %1174 = vmatpush1.bf16.xpose.msra.mxu0 0
      %1175 = vmatprep.mubr.bf16.mxu0 0
      %1176 = vmatmul.mubr.bf16.gmra.mrb[0].mxu0 %v1025
      %v1177 = vpop.f32.mrb[0].mxu0
      %v1178 = vadd.f32 0.0, %v1177
      %v1179 = vpop.f32.mrb[0].mxu0
      %v1180 = vpop.f32.mrb[0].mxu0
      %v1181 = vadd.f32 0.0, %v1180
      %v1182 = vpop.f32.mrb[0].mxu0
      %1183 = vmatprep.mubr.bf16.mxu0 0
      %1184 = vmatmul.mubr.bf16.gmra.mrb[0].mxu0 %v1026
      %v1185 = vpop.f32.mrb[0].mxu0
      %v1186 = vadd.f32 0.0, %v1185
      %v1187 = vpop.f32.mrb[0].mxu0
      %v1188 = vpop.f32.mrb[0].mxu0
      %v1189 = vadd.f32 0.0, %v1188
      %v1190 = vpop.f32.mrb[0].mxu0
      %1191 = vdwg.mxu0
      %1192 = vmatprep.subr.bf16.mxu0 0
      %1193 = vmatpush1.bf16.xpose.msra.mxu0 %v1035
      %1194 = vmatprep.subr.bf16.mxu0 0
      %1195 = vmatpush1.bf16.xpose.msra.mxu0 %v1036
      %1196 = vmatprep.subr.bf16.mxu0 0
      %1197 = vmatpush1.bf16.xpose.msra.mxu0 0
      %1198 = vmatprep.subr.bf16.mxu0 0
      %1199 = vmatpush1.bf16.xpose.msra.mxu0 0
      %1200 = vmatprep.subr.bf16.mxu0 0
      %1201 = vmatpush1.bf16.xpose.msra.mxu0 0
      %1202 = vmatprep.subr.bf16.mxu0 0
      %1203 = vmatpush1.bf16.xpose.msra.mxu0 0
      %1204 = vmatprep.subr.bf16.mxu0 0
      %1205 = vmatpush1.bf16.xpose.msra.mxu0 0
      %1206 = vmatprep.subr.bf16.mxu0 0
      %1207 = vmatpush1.bf16.xpose.msra.mxu0 0
      %1208 = vmatprep.subr.bf16.mxu0 0
      %1209 = vmatpush1.bf16.xpose.msra.mxu0 0
      %1210 = vmatprep.subr.bf16.mxu0 0
      %1211 = vmatpush1.bf16.xpose.msra.mxu0 0
      %1212 = vmatprep.subr.bf16.mxu0 0
      %1213 = vmatpush1.bf16.xpose.msra.mxu0 0
      %1214 = vmatprep.subr.bf16.mxu0 0
      %1215 = vmatpush1.bf16.xpose.msra.mxu0 0
      %1216 = vmatprep.subr.bf16.mxu0 0
      %1217 = vmatpush1.bf16.xpose.msra.mxu0 0
      %1218 = vmatprep.subr.bf16.mxu0 0
      %1219 = vmatpush1.bf16.xpose.msra.mxu0 0
      %1220 = vmatprep.subr.bf16.mxu0 0
      %1221 = vmatpush1.bf16.xpose.msra.mxu0 0
      %1222 = vmatprep.subr.bf16.mxu0 0
      %1223 = vmatpush1.bf16.xpose.msra.mxu0 0
      %1224 = vmatprep.mubr.bf16.mxu0 0
      %1225 = vmatmul.mubr.bf16.gmra.mrb[0].mxu0 %v1027
      %v1226 = vpop.f32.mrb[0].mxu0
      %v1227 = vadd.f32 0.0, %v1226
      %v1228 = vpop.f32.mrb[0].mxu0
      %v1229 = vpop.f32.mrb[0].mxu0
      %v1230 = vadd.f32 0.0, %v1229
      %v1231 = vpop.f32.mrb[0].mxu0
      %1232 = vmatprep.mubr.bf16.mxu0 0
      %1233 = vmatmul.mubr.bf16.gmra.mrb[0].mxu0 %v1028
      %v1234 = vpop.f32.mrb[0].mxu0
      %v1235 = vadd.f32 0.0, %v1234
      %v1236 = vpop.f32.mrb[0].mxu0
      %v1237 = vpop.f32.mrb[0].mxu0
      %v1238 = vadd.f32 0.0, %v1237
      %v1239 = vpop.f32.mrb[0].mxu0
      %1240 = vdwg.mxu0
      %v1241 = vlaneseq
      %v1242 = vshrl.u32 %v1241, 7
      %v1243 = vadd.s32 %v1242, 8
      %v1244 = vadd.s32 %v1242, 16
      %v1245 = vadd.s32 %v1242, 24
      %v1246 = vlaneseq
      %v1247 = vand.u32 %v1246, 127
      %vm1248 = vcmp.lt.s32.totalorder %v1242, 0
      %v1249 = vsub.s32 0, %v1242
      %v1250 = vsel %vm1248, %v1249, %v1242
      %v1251 = vshrl.u32 %v1250, 2
      %v1252 = vand.u32 %v1250, 3
      %v1253 = vsub.s32 0, %v1252
      %v1254 = vsel %vm1248, %v1253, %v1252
      %vm1255 = vcmp.lt.s32.totalorder %v1243, 0
      %v1256 = vsub.s32 0, %v1243
      %v1257 = vsel %vm1255, %v1256, %v1243
      %v1258 = vshrl.u32 %v1257, 2
      %v1259 = vand.u32 %v1257, 3
      %v1260 = vsub.s32 0, %v1259
      %v1261 = vsel %vm1255, %v1260, %v1259
      %vm1262 = vcmp.lt.s32.totalorder %v1244, 0
      %v1263 = vsub.s32 0, %v1244
      %v1264 = vsel %vm1262, %v1263, %v1244
      %v1265 = vshrl.u32 %v1264, 2
      %v1266 = vand.u32 %v1264, 3
      %v1267 = vsub.s32 0, %v1266
      %v1268 = vsel %vm1262, %v1267, %v1266
      %vm1269 = vcmp.lt.s32.totalorder %v1245, 0
      %v1270 = vsub.s32 0, %v1245
      %v1271 = vsel %vm1269, %v1270, %v1245
      %v1272 = vshrl.u32 %v1271, 2
      %v1273 = vand.u32 %v1271, 3
      %v1274 = vsub.s32 0, %v1273
      %v1275 = vsel %vm1269, %v1274, %v1273
      %vm1276 = vcmp.ne.s32.totalorder %v1254, 0
      %vm1277 = vcmp.ne.s32.totalorder %v1261, 0
      %vm1278 = vcmp.ne.s32.totalorder %v1268, 0
      %vm1279 = vcmp.ne.s32.totalorder %v1275, 0
      %vm1280 = vcmp.lt.s32.totalorder %v1254, 0
      %vm1281 = vcmp.lt.s32.totalorder %v1261, 0
      %vm1282 = vcmp.lt.s32.totalorder %v1268, 0
      %vm1283 = vcmp.lt.s32.totalorder %v1275, 0
      %vm1284 = vmand %vm1280, %vm1276
      %vm1285 = vmand %vm1281, %vm1277
      %vm1286 = vmand %vm1282, %vm1278
      %vm1287 = vmand %vm1283, %vm1279
      %v1288 = vadd.s32 %v1254, 4
      %v1289 = vadd.s32 %v1261, 4
      %v1290 = vadd.s32 %v1268, 4
      %v1291 = vadd.s32 %v1275, 4
      %v1292 = vsel %vm1284, %v1288, %v1254
      %v1293 = vsel %vm1285, %v1289, %v1261
      %v1294 = vsel %vm1286, %v1290, %v1268
      %v1295 = vsel %vm1287, %v1291, %v1275
      %vm1296 = vcmp.lt.s32.totalorder %v1247, 0
      %v1297 = vsub.s32 0, %v1247
      %v1298 = vsel %vm1296, %v1297, %v1247
      %v1299 = vshrl.u32 %v1298, 2
      %v1300 = vand.u32 %v1298, 3
      %v1301 = vsub.s32 0, %v1300
      %v1302 = vsel %vm1296, %v1301, %v1300
      %vm1303 = vcmp.ne.s32.totalorder %v1302, 0
      %vm1304 = vcmp.lt.s32.totalorder %v1302, 0
      %vm1305 = vmand %vm1304, %vm1303
      %v1306 = vadd.s32 %v1302, 4
      %v1307 = vsel %vm1305, %v1306, %v1302
      %vm1308 = vcmp.eq.s32.totalorder %v1292, %v1307
      %vm1309 = vcmp.eq.s32.totalorder %v1293, %v1307
      %vm1310 = vcmp.eq.s32.totalorder %v1294, %v1307
      %vm1311 = vcmp.eq.s32.totalorder %v1295, %v1307
      %v1312 = vsel %vm1308, 1, 0
      %v1313 = vsel %vm1309, 1, 0
      %v1314 = vsel %vm1310, 1, 0
      %v1315 = vsel %vm1311, 1, 0
      %vm1316 = vcmp.eq.s32.totalorder %v1312, 1
      %vm1317 = vcmp.eq.s32.totalorder %v1313, 1
      %vm1318 = vcmp.eq.s32.totalorder %v1314, 1
      %vm1319 = vcmp.eq.s32.totalorder %v1315, 1
      %v1320 = vsel %vm1316, %v1080, -1e+30
      %v1321 = vsel %vm1317, %v1083, -1e+30
      %v1322 = vsel %vm1318, %v1088, -1e+30
      %v1323 = vsel %vm1319, %v1091, -1e+30
      %v1324 = vsel %vm1316, %v1129, -1e+30
      %v1325 = vsel %vm1317, %v1132, -1e+30
      %v1326 = vsel %vm1318, %v1137, -1e+30
      %v1327 = vsel %vm1319, %v1140, -1e+30
      %v1328 = vsel %vm1316, %v1178, -1e+30
      %v1329 = vsel %vm1317, %v1181, -1e+30
      %v1330 = vsel %vm1318, %v1186, -1e+30
      %v1331 = vsel %vm1319, %v1189, -1e+30
      %v1332 = vsel %vm1316, %v1227, -1e+30
      %v1333 = vsel %vm1317, %v1230, -1e+30
      %v1334 = vsel %vm1318, %v1235, -1e+30
      %v1335 = vsel %vm1319, %v1238, -1e+30
      %vm1336 = vcmask 261120
      %v1337 = vsel %vm1336, %v1320, -inf
      %1338 = vmax.xlane.f32.xlu0 %v1337
      %v1339 = vpop.xlane.xlu0 %1338
      %v1340 = vsel %vm1336, %v1321, -inf
      %1341 = vmax.xlane.f32.xlu0 %v1340
      %v1342 = vpop.xlane.xlu0 %1341
      %v1343 = vsel %vm1336, %v1322, -inf
      %1344 = vmax.xlane.f32.xlu0 %v1343
      %v1345 = vpop.xlane.xlu0 %1344
      %v1346 = vsel %vm1336, %v1323, -inf
      %1347 = vmax.xlane.f32.xlu0 %v1346
      %v1348 = vpop.xlane.xlu0 %1347
      %v1349 = vsel %vm1336, %v1324, -inf
      %1350 = vmax.xlane.f32.xlu0 %v1349
      %v1351 = vpop.xlane.xlu0 %1350
      %v1352 = vsel %vm1336, %v1325, -inf
      %1353 = vmax.xlane.f32.xlu0 %v1352
      %v1354 = vpop.xlane.xlu0 %1353
      %v1355 = vsel %vm1336, %v1326, -inf
      %1356 = vmax.xlane.f32.xlu0 %v1355
      %v1357 = vpop.xlane.xlu0 %1356
      %v1358 = vsel %vm1336, %v1327, -inf
      %1359 = vmax.xlane.f32.xlu0 %v1358
      %v1360 = vpop.xlane.xlu0 %1359
      %v1361 = vsel %vm1336, %v1328, -inf
      %1362 = vmax.xlane.f32.xlu0 %v1361
      %v1363 = vpop.xlane.xlu0 %1362
      %v1364 = vsel %vm1336, %v1329, -inf
      %1365 = vmax.xlane.f32.xlu0 %v1364
      %v1366 = vpop.xlane.xlu0 %1365
      %v1367 = vsel %vm1336, %v1330, -inf
      %1368 = vmax.xlane.f32.xlu0 %v1367
      %v1369 = vpop.xlane.xlu0 %1368
      %v1370 = vsel %vm1336, %v1331, -inf
      %1371 = vmax.xlane.f32.xlu0 %v1370
      %v1372 = vpop.xlane.xlu0 %1371
      %v1373 = vsel %vm1336, %v1332, -inf
      %1374 = vmax.xlane.f32.xlu0 %v1373
      %v1375 = vpop.xlane.xlu0 %1374
      %v1376 = vsel %vm1336, %v1333, -inf
      %1377 = vmax.xlane.f32.xlu0 %v1376
      %v1378 = vpop.xlane.xlu0 %1377
      %v1379 = vsel %vm1336, %v1334, -inf
      %1380 = vmax.xlane.f32.xlu0 %v1379
      %v1381 = vpop.xlane.xlu0 %1380
      %v1382 = vsel %vm1336, %v1335, -inf
      %1383 = vmax.xlane.f32.xlu0 %v1382
      %v1384 = vpop.xlane.xlu0 %1383
      %v1385 = vsub.f32 %v1320, %v1339
      %v1386 = vsub.f32 %v1321, %v1342
      %v1387 = vsub.f32 %v1322, %v1345
      %v1388 = vsub.f32 %v1323, %v1348
      %v1389 = vsub.f32 %v1324, %v1351
      %v1390 = vsub.f32 %v1325, %v1354
      %v1391 = vsub.f32 %v1326, %v1357
      %v1392 = vsub.f32 %v1327, %v1360
      %v1393 = vsub.f32 %v1328, %v1363
      %v1394 = vsub.f32 %v1329, %v1366
      %v1395 = vsub.f32 %v1330, %v1369
      %v1396 = vsub.f32 %v1331, %v1372
      %v1397 = vsub.f32 %v1332, %v1375
      %v1398 = vsub.f32 %v1333, %v1378
      %v1399 = vsub.f32 %v1334, %v1381
      %v1400 = vsub.f32 %v1335, %v1384
      %v1401 = vmul.f32 %v1385, 1.442695
      %v1402 = vpow.pop %v1401
      %v1403 = vmul.f32 %v1386, 1.442695
      %v1404 = vpow.pop %v1403
      %v1405 = vmul.f32 %v1387, 1.442695
      %v1406 = vpow.pop %v1405
      %v1407 = vmul.f32 %v1388, 1.442695
      %v1408 = vpow.pop %v1407
      %v1409 = vmul.f32 %v1389, 1.442695
      %v1410 = vpow.pop %v1409
      %v1411 = vmul.f32 %v1390, 1.442695
      %v1412 = vpow.pop %v1411
      %v1413 = vmul.f32 %v1391, 1.442695
      %v1414 = vpow.pop %v1413
      %v1415 = vmul.f32 %v1392, 1.442695
      %v1416 = vpow.pop %v1415
      %v1417 = vmul.f32 %v1393, 1.442695
      %v1418 = vpow.pop %v1417
      %v1419 = vmul.f32 %v1394, 1.442695
      %v1420 = vpow.pop %v1419
      %v1421 = vmul.f32 %v1395, 1.442695
      %v1422 = vpow.pop %v1421
      %v1423 = vmul.f32 %v1396, 1.442695
      %v1424 = vpow.pop %v1423
      %v1425 = vmul.f32 %v1397, 1.442695
      %v1426 = vpow.pop %v1425
      %v1427 = vmul.f32 %v1398, 1.442695
      %v1428 = vpow.pop %v1427
      %v1429 = vmul.f32 %v1399, 1.442695
      %v1430 = vpow.pop %v1429
      %v1431 = vmul.f32 %v1400, 1.442695
      %v1432 = vpow.pop %v1431
      %v1433 = vsel %vm1336, %v1402, 0.0
      %1434 = vadd.xlane.f32.xlu0 %v1433
      %v1435 = vpop.xlane.xlu0 %1434
      %v1436 = vsel %vm1336, %v1404, 0.0
      %1437 = vadd.xlane.f32.xlu0 %v1436
      %v1438 = vpop.xlane.xlu0 %1437
      %v1439 = vsel %vm1336, %v1406, 0.0
      %1440 = vadd.xlane.f32.xlu0 %v1439
      %v1441 = vpop.xlane.xlu0 %1440
      %v1442 = vsel %vm1336, %v1408, 0.0
      %1443 = vadd.xlane.f32.xlu0 %v1442
      %v1444 = vpop.xlane.xlu0 %1443
      %v1445 = vsel %vm1336, %v1410, 0.0
      %1446 = vadd.xlane.f32.xlu0 %v1445
      %v1447 = vpop.xlane.xlu0 %1446
      %v1448 = vsel %vm1336, %v1412, 0.0
      %1449 = vadd.xlane.f32.xlu0 %v1448
      %v1450 = vpop.xlane.xlu0 %1449
      %v1451 = vsel %vm1336, %v1414, 0.0
      %1452 = vadd.xlane.f32.xlu0 %v1451
      %v1453 = vpop.xlane.xlu0 %1452
      %v1454 = vsel %vm1336, %v1416, 0.0
      %1455 = vadd.xlane.f32.xlu0 %v1454
      %v1456 = vpop.xlane.xlu0 %1455
      %v1457 = vsel %vm1336, %v1418, 0.0
      %1458 = vadd.xlane.f32.xlu0 %v1457
      %v1459 = vpop.xlane.xlu0 %1458
      %v1460 = vsel %vm1336, %v1420, 0.0
      %1461 = vadd.xlane.f32.xlu0 %v1460
      %v1462 = vpop.xlane.xlu0 %1461
      %v1463 = vsel %vm1336, %v1422, 0.0
      %1464 = vadd.xlane.f32.xlu0 %v1463
      %v1465 = vpop.xlane.xlu0 %1464
      %v1466 = vsel %vm1336, %v1424, 0.0
      %1467 = vadd.xlane.f32.xlu0 %v1466
      %v1468 = vpop.xlane.xlu0 %1467
      %v1469 = vsel %vm1336, %v1426, 0.0
      %1470 = vadd.xlane.f32.xlu0 %v1469
      %v1471 = vpop.xlane.xlu0 %1470
      %v1472 = vsel %vm1336, %v1428, 0.0
      %1473 = vadd.xlane.f32.xlu0 %v1472
      %v1474 = vpop.xlane.xlu0 %1473
      %v1475 = vsel %vm1336, %v1430, 0.0
      %1476 = vadd.xlane.f32.xlu0 %v1475
      %v1477 = vpop.xlane.xlu0 %1476
      %v1478 = vsel %vm1336, %v1432, 0.0
      %1479 = vadd.xlane.f32.xlu0 %v1478
      %v1480 = vpop.xlane.xlu0 %1479
      %v1481 = vrcp.pop %v1435
      %v1482 = vrcp.pop %v1438
      %v1483 = vrcp.pop %v1441
      %v1484 = vrcp.pop %v1444
      %v1485 = vrcp.pop %v1447
      %v1486 = vrcp.pop %v1450
      %v1487 = vrcp.pop %v1453
      %v1488 = vrcp.pop %v1456
      %v1489 = vrcp.pop %v1459
      %v1490 = vrcp.pop %v1462
      %v1491 = vrcp.pop %v1465
      %v1492 = vrcp.pop %v1468
      %v1493 = vrcp.pop %v1471
      %v1494 = vrcp.pop %v1474
      %v1495 = vrcp.pop %v1477
      %v1496 = vrcp.pop %v1480
      %v1497 = vmul.f32 %v1402, %v1481
      %v1498 = vmul.f32 %v1404, %v1482
      %v1499 = vmul.f32 %v1406, %v1483
      %v1500 = vmul.f32 %v1408, %v1484
      %v1501 = vmul.f32 %v1410, %v1485
      %v1502 = vmul.f32 %v1412, %v1486
      %v1503 = vmul.f32 %v1414, %v1487
      %v1504 = vmul.f32 %v1416, %v1488
      %v1505 = vmul.f32 %v1418, %v1489
      %v1506 = vmul.f32 %v1420, %v1490
      %v1507 = vmul.f32 %v1422, %v1491
      %v1508 = vmul.f32 %v1424, %v1492
      %v1509 = vmul.f32 %v1426, %v1493
      %v1510 = vmul.f32 %v1428, %v1494
      %v1511 = vmul.f32 %v1430, %v1495
      %v1512 = vmul.f32 %v1432, %v1496
      %v1513 = vpack.c.bf16 %v1498, %v1497
      %v1514 = vpack.c.bf16 %v1500, %v1499
      %v1515 = vpack.c.bf16 %v1502, %v1501
      %v1516 = vpack.c.bf16 %v1504, %v1503
      %v1517 = vpack.c.bf16 %v1506, %v1505
      %v1518 = vpack.c.bf16 %v1508, %v1507
      %v1519 = vpack.c.bf16 %v1510, %v1509
      %v1520 = vpack.c.bf16 %v1512, %v1511
      %v1522 = vsel %vm1336, %v1513, 0
      %v1525 = vsel %vm1336, %v1514, 0
      %1527 = vmatprep.subr.bf16.mxu0 0
      %1528 = vmatpush1.bf16.msra.mxu0 %v1037
      %1529 = vmatprep.subr.bf16.mxu0 0
      %1530 = vmatpush1.bf16.msra.mxu0 %v1038
      %1531 = vmatprep.subr.bf16.mxu0 0
      %1532 = vmatpush1.bf16.msra.mxu0 0
      %1533 = vmatprep.subr.bf16.mxu0 0
      %1534 = vmatpush1.bf16.msra.mxu0 0
      %1535 = vmatprep.subr.bf16.mxu0 0
      %1536 = vmatpush1.bf16.msra.mxu0 0
      %1537 = vmatprep.subr.bf16.mxu0 0
      %1538 = vmatpush1.bf16.msra.mxu0 0
      %1539 = vmatprep.subr.bf16.mxu0 0
      %1540 = vmatpush1.bf16.msra.mxu0 0
      %1541 = vmatprep.subr.bf16.mxu0 0
      %1542 = vmatpush1.bf16.msra.mxu0 0
      %1543 = vmatprep.subr.bf16.mxu0 0
      %1544 = vmatpush1.bf16.msra.mxu0 0
      %1545 = vmatprep.subr.bf16.mxu0 0
      %1546 = vmatpush1.bf16.msra.mxu0 0
      %1547 = vmatprep.subr.bf16.mxu0 0
      %1548 = vmatpush1.bf16.msra.mxu0 0
      %1549 = vmatprep.subr.bf16.mxu0 0
      %1550 = vmatpush1.bf16.msra.mxu0 0
      %1551 = vmatprep.subr.bf16.mxu0 0
      %1552 = vmatpush1.bf16.msra.mxu0 0
      %1553 = vmatprep.subr.bf16.mxu0 0
      %1554 = vmatpush1.bf16.msra.mxu0 0
      %1555 = vmatprep.subr.bf16.mxu0 0
      %1556 = vmatpush1.bf16.msra.mxu0 0
      %1557 = vmatprep.subr.bf16.mxu0 0
      %1558 = vmatpush1.bf16.msra.mxu0 0
      %1559 = vmatprep.mubr.bf16.mxu0 0
      %1560 = vmatmul.mubr.bf16.gmra.mrb[0].mxu0 %v1522
      %v1561 = vpop.f32.mrb[0].mxu0
      %v1562 = vadd.f32 0.0, %v1561
      %v1563 = vpop.f32.mrb[0].mxu0
      %v1564 = vpop.f32.mrb[0].mxu0
      %v1565 = vadd.f32 0.0, %v1564
      %v1566 = vpop.f32.mrb[0].mxu0
      %1567 = vmatprep.mubr.bf16.mxu0 0
      %1568 = vmatmul.mubr.bf16.gmra.mrb[0].mxu0 %v1525
      %v1569 = vpop.f32.mrb[0].mxu0
      %v1570 = vadd.f32 0.0, %v1569
      %v1571 = vpop.f32.mrb[0].mxu0
      %v1572 = vpop.f32.mrb[0].mxu0
      %v1573 = vadd.f32 0.0, %v1572
      %v1574 = vpop.f32.mrb[0].mxu0
      %1575 = vdwg.mxu0
      %v1577 = vsel %vm1336, %v1515, 0
      %v1580 = vsel %vm1336, %v1516, 0
      %1582 = vmatprep.subr.bf16.mxu0 0
      %1583 = vmatpush1.bf16.msra.mxu0 %v1039
      %1584 = vmatprep.subr.bf16.mxu0 0
      %1585 = vmatpush1.bf16.msra.mxu0 %v1040
      %1586 = vmatprep.subr.bf16.mxu0 0
      %1587 = vmatpush1.bf16.msra.mxu0 0
      %1588 = vmatprep.subr.bf16.mxu0 0
      %1589 = vmatpush1.bf16.msra.mxu0 0
      %1590 = vmatprep.subr.bf16.mxu0 0
      %1591 = vmatpush1.bf16.msra.mxu0 0
      %1592 = vmatprep.subr.bf16.mxu0 0
      %1593 = vmatpush1.bf16.msra.mxu0 0
      %1594 = vmatprep.subr.bf16.mxu0 0
      %1595 = vmatpush1.bf16.msra.mxu0 0
      %1596 = vmatprep.subr.bf16.mxu0 0
      %1597 = vmatpush1.bf16.msra.mxu0 0
      %1598 = vmatprep.subr.bf16.mxu0 0
      %1599 = vmatpush1.bf16.msra.mxu0 0
      %1600 = vmatprep.subr.bf16.mxu0 0
      %1601 = vmatpush1.bf16.msra.mxu0 0
      %1602 = vmatprep.subr.bf16.mxu0 0
      %1603 = vmatpush1.bf16.msra.mxu0 0
      %1604 = vmatprep.subr.bf16.mxu0 0
      %1605 = vmatpush1.bf16.msra.mxu0 0
      %1606 = vmatprep.subr.bf16.mxu0 0
      %1607 = vmatpush1.bf16.msra.mxu0 0
      %1608 = vmatprep.subr.bf16.mxu0 0
      %1609 = vmatpush1.bf16.msra.mxu0 0
      %1610 = vmatprep.subr.bf16.mxu0 0
      %1611 = vmatpush1.bf16.msra.mxu0 0
      %1612 = vmatprep.subr.bf16.mxu0 0
      %1613 = vmatpush1.bf16.msra.mxu0 0
      %1614 = vmatprep.mubr.bf16.mxu0 0
      %1615 = vmatmul.mubr.bf16.gmra.mrb[0].mxu0 %v1577
      %v1616 = vpop.f32.mrb[0].mxu0
      %v1617 = vadd.f32 0.0, %v1616
      %v1618 = vpop.f32.mrb[0].mxu0
      %v1619 = vpop.f32.mrb[0].mxu0
      %v1620 = vadd.f32 0.0, %v1619
      %v1621 = vpop.f32.mrb[0].mxu0
      %1622 = vmatprep.mubr.bf16.mxu0 0
      %1623 = vmatmul.mubr.bf16.gmra.mrb[0].mxu0 %v1580
      %v1624 = vpop.f32.mrb[0].mxu0
      %v1625 = vadd.f32 0.0, %v1624
      %v1626 = vpop.f32.mrb[0].mxu0
      %v1627 = vpop.f32.mrb[0].mxu0
      %v1628 = vadd.f32 0.0, %v1627
      %v1629 = vpop.f32.mrb[0].mxu0
      %1630 = vdwg.mxu0
      %v1632 = vsel %vm1336, %v1517, 0
      %v1635 = vsel %vm1336, %v1518, 0
      %1637 = vmatprep.subr.bf16.mxu0 0
      %1638 = vmatpush1.bf16.msra.mxu0 %v1041
      %1639 = vmatprep.subr.bf16.mxu0 0
      %1640 = vmatpush1.bf16.msra.mxu0 %v1042
      %1641 = vmatprep.subr.bf16.mxu0 0
      %1642 = vmatpush1.bf16.msra.mxu0 0
      %1643 = vmatprep.subr.bf16.mxu0 0
      %1644 = vmatpush1.bf16.msra.mxu0 0
      %1645 = vmatprep.subr.bf16.mxu0 0
      %1646 = vmatpush1.bf16.msra.mxu0 0
      %1647 = vmatprep.subr.bf16.mxu0 0
      %1648 = vmatpush1.bf16.msra.mxu0 0
      %1649 = vmatprep.subr.bf16.mxu0 0
      %1650 = vmatpush1.bf16.msra.mxu0 0
      %1651 = vmatprep.subr.bf16.mxu0 0
      %1652 = vmatpush1.bf16.msra.mxu0 0
      %1653 = vmatprep.subr.bf16.mxu0 0
      %1654 = vmatpush1.bf16.msra.mxu0 0
      %1655 = vmatprep.subr.bf16.mxu0 0
      %1656 = vmatpush1.bf16.msra.mxu0 0
      %1657 = vmatprep.subr.bf16.mxu0 0
      %1658 = vmatpush1.bf16.msra.mxu0 0
      %1659 = vmatprep.subr.bf16.mxu0 0
      %1660 = vmatpush1.bf16.msra.mxu0 0
      %1661 = vmatprep.subr.bf16.mxu0 0
      %1662 = vmatpush1.bf16.msra.mxu0 0
      %1663 = vmatprep.subr.bf16.mxu0 0
      %1664 = vmatpush1.bf16.msra.mxu0 0
      %1665 = vmatprep.subr.bf16.mxu0 0
      %1666 = vmatpush1.bf16.msra.mxu0 0
      %1667 = vmatprep.subr.bf16.mxu0 0
      %1668 = vmatpush1.bf16.msra.mxu0 0
      %1669 = vmatprep.mubr.bf16.mxu0 0
      %1670 = vmatmul.mubr.bf16.gmra.mrb[0].mxu0 %v1632
      %v1671 = vpop.f32.mrb[0].mxu0
      %v1672 = vadd.f32 0.0, %v1671
      %v1673 = vpop.f32.mrb[0].mxu0
      %v1674 = vpop.f32.mrb[0].mxu0
      %v1675 = vadd.f32 0.0, %v1674
      %v1676 = vpop.f32.mrb[0].mxu0
      %1677 = vmatprep.mubr.bf16.mxu0 0
      %1678 = vmatmul.mubr.bf16.gmra.mrb[0].mxu0 %v1635
      %v1679 = vpop.f32.mrb[0].mxu0
      %v1680 = vadd.f32 0.0, %v1679
      %v1681 = vpop.f32.mrb[0].mxu0
      %v1682 = vpop.f32.mrb[0].mxu0
      %v1683 = vadd.f32 0.0, %v1682
      %v1684 = vpop.f32.mrb[0].mxu0
      %1685 = vdwg.mxu0
      %v1687 = vsel %vm1336, %v1519, 0
      %v1690 = vsel %vm1336, %v1520, 0
      %1692 = vmatprep.subr.bf16.mxu0 0
      %1693 = vmatpush1.bf16.msra.mxu0 %v1043
      %1694 = vmatprep.subr.bf16.mxu0 0
      %1695 = vmatpush1.bf16.msra.mxu0 %v1044
      %1696 = vmatprep.subr.bf16.mxu0 0
      %1697 = vmatpush1.bf16.msra.mxu0 0
      %1698 = vmatprep.subr.bf16.mxu0 0
      %1699 = vmatpush1.bf16.msra.mxu0 0
      %1700 = vmatprep.subr.bf16.mxu0 0
      %1701 = vmatpush1.bf16.msra.mxu0 0
      %1702 = vmatprep.subr.bf16.mxu0 0
      %1703 = vmatpush1.bf16.msra.mxu0 0
      %1704 = vmatprep.subr.bf16.mxu0 0
      %1705 = vmatpush1.bf16.msra.mxu0 0
      %1706 = vmatprep.subr.bf16.mxu0 0
      %1707 = vmatpush1.bf16.msra.mxu0 0
      %1708 = vmatprep.subr.bf16.mxu0 0
      %1709 = vmatpush1.bf16.msra.mxu0 0
      %1710 = vmatprep.subr.bf16.mxu0 0
      %1711 = vmatpush1.bf16.msra.mxu0 0
      %1712 = vmatprep.subr.bf16.mxu0 0
      %1713 = vmatpush1.bf16.msra.mxu0 0
      %1714 = vmatprep.subr.bf16.mxu0 0
      %1715 = vmatpush1.bf16.msra.mxu0 0
      %1716 = vmatprep.subr.bf16.mxu0 0
      %1717 = vmatpush1.bf16.msra.mxu0 0
      %1718 = vmatprep.subr.bf16.mxu0 0
      %1719 = vmatpush1.bf16.msra.mxu0 0
      %1720 = vmatprep.subr.bf16.mxu0 0
      %1721 = vmatpush1.bf16.msra.mxu0 0
      %1722 = vmatprep.subr.bf16.mxu0 0
      %1723 = vmatpush1.bf16.msra.mxu0 0
      %1724 = vmatprep.mubr.bf16.mxu0 0
      %1725 = vmatmul.mubr.bf16.gmra.mrb[0].mxu0 %v1687
      %v1726 = vpop.f32.mrb[0].mxu0
      %v1727 = vadd.f32 0.0, %v1726
      %v1728 = vpop.f32.mrb[0].mxu0
      %v1729 = vpop.f32.mrb[0].mxu0
      %v1730 = vadd.f32 0.0, %v1729
      %v1731 = vpop.f32.mrb[0].mxu0
      %1732 = vmatprep.mubr.bf16.mxu0 0
      %1733 = vmatmul.mubr.bf16.gmra.mrb[0].mxu0 %v1690
      %v1734 = vpop.f32.mrb[0].mxu0
      %v1735 = vadd.f32 0.0, %v1734
      %v1736 = vpop.f32.mrb[0].mxu0
      %v1737 = vpop.f32.mrb[0].mxu0
      %v1738 = vadd.f32 0.0, %v1737
      %v1739 = vpop.f32.mrb[0].mxu0
      %1740 = vdwg.mxu0
      %v1741 = vpack.c.bf16 %v1565, %v1562
      %v1742 = vpack.c.bf16 %v1573, %v1570
      %v1743 = vpack.c.bf16 %v1620, %v1617
      %v1744 = vpack.c.bf16 %v1628, %v1625
      %v1745 = vpack.c.bf16 %v1675, %v1672
      %v1746 = vpack.c.bf16 %v1683, %v1680
      %v1747 = vpack.c.bf16 %v1730, %v1727
      %v1748 = vpack.c.bf16 %v1738, %v1735
      %v1749 = vld [vmem:[%s443] sm:$0xf]
      %v1750 = vld [vmem:[%s443 + $0x4] sm:$0xf]
      %v1751 = vld [vmem:[%s443 + $0x8] sm:$0xf]
      %v1752 = vld [vmem:[%s443 + $0xc] sm:$0xf]
      %v1753 = vld [vmem:[%s443 + $0x10] sm:$0xf]
      %v1754 = vld [vmem:[%s443 + $0x14] sm:$0xf]
      %v1755 = vld [vmem:[%s443 + $0x18] sm:$0xf]
      %v1756 = vld [vmem:[%s443 + $0x1c] sm:$0xf]
      %v1757 = vld [vmem:[%s443 + $0x20] sm:$0xf]
      %v1758 = vld [vmem:[%s443 + $0x24] sm:$0xf]
      %v1759 = vld [vmem:[%s443 + $0x28] sm:$0xf]
      %v1760 = vld [vmem:[%s443 + $0x2c] sm:$0xf]
      %v1761 = vld [vmem:[%s443 + $0x30] sm:$0xf]
      %v1762 = vld [vmem:[%s443 + $0x34] sm:$0xf]
      %v1763 = vld [vmem:[%s443 + $0x38] sm:$0xf]
      %v1764 = vld [vmem:[%s443 + $0x3c] sm:$0xf]
      %v1781 = vunpack.c.l.b16 %v1749
      %v1782 = vunpack.c.l.b16 %v1750
      %v1783 = vunpack.c.l.b16 %v1751
      %v1784 = vunpack.c.l.b16 %v1752
      %v1785 = vunpack.c.l.b16 %v1753
      %v1786 = vunpack.c.l.b16 %v1754
      %v1787 = vunpack.c.l.b16 %v1755
      %v1788 = vunpack.c.l.b16 %v1756
      %v1789 = vunpack.c.l.b16 %v1757
      %v1790 = vunpack.c.l.b16 %v1758
      %v1791 = vunpack.c.l.b16 %v1759
      %v1792 = vunpack.c.l.b16 %v1760
      %v1793 = vunpack.c.l.b16 %v1761
      %v1794 = vunpack.c.l.b16 %v1762
      %v1795 = vunpack.c.l.b16 %v1763
      %v1796 = vunpack.c.l.b16 %v1764
      %v1797 = vpack.c.b16 %v1782, %v1781
      %v1798 = vpack.c.b16 %v1784, %v1783
      %v1799 = vpack.c.b16 %v1786, %v1785
      %v1800 = vpack.c.b16 %v1788, %v1787
      %v1801 = vpack.c.b16 %v1790, %v1789
      %v1802 = vpack.c.b16 %v1792, %v1791
      %v1803 = vpack.c.b16 %v1794, %v1793
      %v1804 = vpack.c.b16 %v1796, %v1795
      %1813 = vmatprep.subr.bf16.mxu0 0
      %1814 = vmatpush1.bf16.msra.mxu0 %v1797
      %1815 = vmatprep.subr.bf16.mxu0 0
      %1816 = vmatpush1.bf16.msra.mxu0 %v1798
      %1817 = vmatprep.subr.bf16.mxu0 0
      %1818 = vmatpush1.bf16.msra.mxu0 %v1799
      %1819 = vmatprep.subr.bf16.mxu0 0
      %1820 = vmatpush1.bf16.msra.mxu0 %v1800
      %1821 = vmatprep.subr.bf16.mxu0 0
      %1822 = vmatpush1.bf16.msra.mxu0 %v1801
      %1823 = vmatprep.subr.bf16.mxu0 0
      %1824 = vmatpush1.bf16.msra.mxu0 %v1802
      %1825 = vmatprep.subr.bf16.mxu0 0
      %1826 = vmatpush1.bf16.msra.mxu0 %v1803
      %1827 = vmatprep.subr.bf16.mxu0 0
      %1828 = vmatpush1.bf16.msra.mxu0 %v1804
      %1829 = vmatprep.subr.bf16.mxu0 0
      %1830 = vmatpush1.bf16.msra.mxu0 0
      %1831 = vmatprep.subr.bf16.mxu0 0
      %1832 = vmatpush1.bf16.msra.mxu0 0
      %1833 = vmatprep.subr.bf16.mxu0 0
      %1834 = vmatpush1.bf16.msra.mxu0 0
      %1835 = vmatprep.subr.bf16.mxu0 0
      %1836 = vmatpush1.bf16.msra.mxu0 0
      %1837 = vmatprep.subr.bf16.mxu0 0
      %1838 = vmatpush1.bf16.msra.mxu0 0
      %1839 = vmatprep.subr.bf16.mxu0 0
      %1840 = vmatpush1.bf16.msra.mxu0 0
      %1841 = vmatprep.subr.bf16.mxu0 0
      %1842 = vmatpush1.bf16.msra.mxu0 0
      %1843 = vmatprep.subr.bf16.mxu0 0
      %1844 = vmatpush1.bf16.msra.mxu0 0
      %1845 = vmatprep.mubr.bf16.mxu0 0
      %1846 = vmatmul.mubr.bf16.gmra.mrb[0].mxu0 %v1741
      %v1847 = vpop.f32.mrb[0].mxu0
      %v1848 = vadd.f32 %v506, %v1847
      %v1849 = vpop.f32.mrb[0].mxu0
      %v1850 = vpop.f32.mrb[0].mxu0
      %v1851 = vadd.f32 %v506, %v1850
      %v1852 = vpop.f32.mrb[0].mxu0
      %1853 = vmatprep.mubr.bf16.mxu0 0
      %1854 = vmatmul.mubr.bf16.gmra.mrb[0].mxu0 %v1742
      %v1855 = vpop.f32.mrb[0].mxu0
      %v1856 = vadd.f32 %v506, %v1855
      %v1857 = vpop.f32.mrb[0].mxu0
      %v1858 = vpop.f32.mrb[0].mxu0
      %v1859 = vadd.f32 %v506, %v1858
      %v1860 = vpop.f32.mrb[0].mxu0
      %1861 = vmatprep.mubr.bf16.mxu0 0
      %1862 = vmatmul.mubr.bf16.gmra.mrb[0].mxu0 %v1743
      %v1863 = vpop.f32.mrb[0].mxu0
      %v1864 = vadd.f32 %v506, %v1863
      %v1865 = vpop.f32.mrb[0].mxu0
      %v1866 = vpop.f32.mrb[0].mxu0
      %v1867 = vadd.f32 %v506, %v1866
      %v1868 = vpop.f32.mrb[0].mxu0
      %1869 = vmatprep.mubr.bf16.mxu0 0
      %1870 = vmatmul.mubr.bf16.gmra.mrb[0].mxu0 %v1744
      %v1871 = vpop.f32.mrb[0].mxu0
      %v1872 = vadd.f32 %v506, %v1871
      %v1873 = vpop.f32.mrb[0].mxu0
      %v1874 = vpop.f32.mrb[0].mxu0
      %v1875 = vadd.f32 %v506, %v1874
      %v1876 = vpop.f32.mrb[0].mxu0
      %1877 = vmatprep.mubr.bf16.mxu0 0
      %1878 = vmatmul.mubr.bf16.gmra.mrb[0].mxu0 %v1745
      %v1879 = vpop.f32.mrb[0].mxu0
      %v1880 = vadd.f32 %v506, %v1879
      %v1881 = vpop.f32.mrb[0].mxu0
      %v1882 = vpop.f32.mrb[0].mxu0
      %v1883 = vadd.f32 %v506, %v1882
      %v1884 = vpop.f32.mrb[0].mxu0
      %1885 = vmatprep.mubr.bf16.mxu0 0
      %1886 = vmatmul.mubr.bf16.gmra.mrb[0].mxu0 %v1746
      %v1887 = vpop.f32.mrb[0].mxu0
      %v1888 = vadd.f32 %v506, %v1887
      %v1889 = vpop.f32.mrb[0].mxu0
      %v1890 = vpop.f32.mrb[0].mxu0
      %v1891 = vadd.f32 %v506, %v1890
      %v1892 = vpop.f32.mrb[0].mxu0
      %1893 = vmatprep.mubr.bf16.mxu0 0
      %1894 = vmatmul.mubr.bf16.gmra.mrb[0].mxu0 %v1747
      %v1895 = vpop.f32.mrb[0].mxu0
      %v1896 = vadd.f32 %v506, %v1895
      %v1897 = vpop.f32.mrb[0].mxu0
      %v1898 = vpop.f32.mrb[0].mxu0
      %v1899 = vadd.f32 %v506, %v1898
      %v1900 = vpop.f32.mrb[0].mxu0
      %1901 = vmatprep.mubr.bf16.mxu0 0
      %1902 = vmatmul.mubr.bf16.gmra.mrb[0].mxu0 %v1748
      %v1903 = vpop.f32.mrb[0].mxu0
      %v1904 = vadd.f32 %v506, %v1903
      %v1905 = vpop.f32.mrb[0].mxu0
      %v1906 = vpop.f32.mrb[0].mxu0
      %v1907 = vadd.f32 %v506, %v1906
      %v1908 = vpop.f32.mrb[0].mxu0
      %1909 = vdwg.mxu0
      %v1910 = vadd.f32 %v514, %v1848
      %v1911 = vadd.f32 %v515, %v1851
      %v1912 = vadd.f32 %v516, %v1856
      %v1913 = vadd.f32 %v517, %v1859
      %v1914 = vadd.f32 %v518, %v1864
      %v1915 = vadd.f32 %v519, %v1867
      %v1916 = vadd.f32 %v520, %v1872
      %v1917 = vadd.f32 %v521, %v1875
      %v1918 = vadd.f32 %v522, %v1880
      %v1919 = vadd.f32 %v523, %v1883
      %v1920 = vadd.f32 %v524, %v1888
      %v1921 = vadd.f32 %v525, %v1891
      %v1922 = vadd.f32 %v526, %v1896
      %v1923 = vadd.f32 %v527, %v1899
      %v1924 = vadd.f32 %v528, %v1904
      %v1925 = vadd.f32 %v529, %v1907
      %1926 = vadd.xlane.f32.xlu0 %v1910
      %v1927 = vpop.xlane.xlu0 %1926
      %1928 = vadd.xlane.f32.xlu0 %v1911
      %v1929 = vpop.xlane.xlu0 %1928
      %1930 = vadd.xlane.f32.xlu0 %v1912
      %v1931 = vpop.xlane.xlu0 %1930
      %1932 = vadd.xlane.f32.xlu0 %v1913
      %v1933 = vpop.xlane.xlu0 %1932
      %1934 = vadd.xlane.f32.xlu0 %v1914
      %v1935 = vpop.xlane.xlu0 %1934
      %1936 = vadd.xlane.f32.xlu0 %v1915
      %v1937 = vpop.xlane.xlu0 %1936
      %1938 = vadd.xlane.f32.xlu0 %v1916
      %v1939 = vpop.xlane.xlu0 %1938
      %1940 = vadd.xlane.f32.xlu0 %v1917
      %v1941 = vpop.xlane.xlu0 %1940
      %1942 = vadd.xlane.f32.xlu0 %v1918
      %v1943 = vpop.xlane.xlu0 %1942
      %1944 = vadd.xlane.f32.xlu0 %v1919
      %v1945 = vpop.xlane.xlu0 %1944
      %1946 = vadd.xlane.f32.xlu0 %v1920
      %v1947 = vpop.xlane.xlu0 %1946
      %1948 = vadd.xlane.f32.xlu0 %v1921
      %v1949 = vpop.xlane.xlu0 %1948
      %1950 = vadd.xlane.f32.xlu0 %v1922
      %v1951 = vpop.xlane.xlu0 %1950
      %1952 = vadd.xlane.f32.xlu0 %v1923
      %v1953 = vpop.xlane.xlu0 %1952
      %1954 = vadd.xlane.f32.xlu0 %v1924
      %v1955 = vpop.xlane.xlu0 %1954
      %1956 = vadd.xlane.f32.xlu0 %v1925
      %v1957 = vpop.xlane.xlu0 %1956
      %v1958 = vrcp.pop 128.0
      %v1959 = vmul.f32 %v1927, %v1958
      %v1960 = vmul.f32 %v1929, %v1958
      %v1961 = vmul.f32 %v1931, %v1958
      %v1962 = vmul.f32 %v1933, %v1958
      %v1963 = vmul.f32 %v1935, %v1958
      %v1964 = vmul.f32 %v1937, %v1958
      %v1965 = vmul.f32 %v1939, %v1958
      %v1966 = vmul.f32 %v1941, %v1958
      %v1967 = vmul.f32 %v1943, %v1958
      %v1968 = vmul.f32 %v1945, %v1958
      %v1969 = vmul.f32 %v1947, %v1958
      %v1970 = vmul.f32 %v1949, %v1958
      %v1971 = vmul.f32 %v1951, %v1958
      %v1972 = vmul.f32 %v1953, %v1958
      %v1973 = vmul.f32 %v1955, %v1958
      %v1974 = vmul.f32 %v1957, %v1958
      %v1975 = vsub.f32 %v1910, %v1959
      %v1976 = vsub.f32 %v1911, %v1960
      %v1977 = vsub.f32 %v1912, %v1961
      %v1978 = vsub.f32 %v1913, %v1962
      %v1979 = vsub.f32 %v1914, %v1963
      %v1980 = vsub.f32 %v1915, %v1964
      %v1981 = vsub.f32 %v1916, %v1965
      %v1982 = vsub.f32 %v1917, %v1966
      %v1983 = vsub.f32 %v1918, %v1967
      %v1984 = vsub.f32 %v1919, %v1968
      %v1985 = vsub.f32 %v1920, %v1969
      %v1986 = vsub.f32 %v1921, %v1970
      %v1987 = vsub.f32 %v1922, %v1971
      %v1988 = vsub.f32 %v1923, %v1972
      %v1989 = vsub.f32 %v1924, %v1973
      %v1990 = vsub.f32 %v1925, %v1974
      %v1991 = vmul.f32 %v1975, %v1975
      %v1992 = vmul.f32 %v1976, %v1976
      %v1993 = vmul.f32 %v1977, %v1977
      %v1994 = vmul.f32 %v1978, %v1978
      %v1995 = vmul.f32 %v1979, %v1979
      %v1996 = vmul.f32 %v1980, %v1980
      %v1997 = vmul.f32 %v1981, %v1981
      %v1998 = vmul.f32 %v1982, %v1982
      %v1999 = vmul.f32 %v1983, %v1983
      %v2000 = vmul.f32 %v1984, %v1984
      %v2001 = vmul.f32 %v1985, %v1985
      %v2002 = vmul.f32 %v1986, %v1986
      %v2003 = vmul.f32 %v1987, %v1987
      %v2004 = vmul.f32 %v1988, %v1988
      %v2005 = vmul.f32 %v1989, %v1989
      %v2006 = vmul.f32 %v1990, %v1990
      %2007 = vadd.xlane.f32.xlu0 %v1991
      %v2008 = vpop.xlane.xlu0 %2007
      %2009 = vadd.xlane.f32.xlu0 %v1992
      %v2010 = vpop.xlane.xlu0 %2009
      %2011 = vadd.xlane.f32.xlu0 %v1993
      %v2012 = vpop.xlane.xlu0 %2011
      %2013 = vadd.xlane.f32.xlu0 %v1994
      %v2014 = vpop.xlane.xlu0 %2013
      %2015 = vadd.xlane.f32.xlu0 %v1995
      %v2016 = vpop.xlane.xlu0 %2015
      %2017 = vadd.xlane.f32.xlu0 %v1996
      %v2018 = vpop.xlane.xlu0 %2017
      %2019 = vadd.xlane.f32.xlu0 %v1997
      %v2020 = vpop.xlane.xlu0 %2019
      %2021 = vadd.xlane.f32.xlu0 %v1998
      %v2022 = vpop.xlane.xlu0 %2021
      %2023 = vadd.xlane.f32.xlu0 %v1999
      %v2024 = vpop.xlane.xlu0 %2023
      %2025 = vadd.xlane.f32.xlu0 %v2000
      %v2026 = vpop.xlane.xlu0 %2025
      %2027 = vadd.xlane.f32.xlu0 %v2001
      %v2028 = vpop.xlane.xlu0 %2027
      %2029 = vadd.xlane.f32.xlu0 %v2002
      %v2030 = vpop.xlane.xlu0 %2029
      %2031 = vadd.xlane.f32.xlu0 %v2003
      %v2032 = vpop.xlane.xlu0 %2031
      %2033 = vadd.xlane.f32.xlu0 %v2004
      %v2034 = vpop.xlane.xlu0 %2033
      %2035 = vadd.xlane.f32.xlu0 %v2005
      %v2036 = vpop.xlane.xlu0 %2035
      %2037 = vadd.xlane.f32.xlu0 %v2006
      %v2038 = vpop.xlane.xlu0 %2037
      %v2039 = vmul.f32 %v2008, %v1958
      %v2040 = vmul.f32 %v2010, %v1958
      %v2041 = vmul.f32 %v2012, %v1958
      %v2042 = vmul.f32 %v2014, %v1958
      %v2043 = vmul.f32 %v2016, %v1958
      %v2044 = vmul.f32 %v2018, %v1958
      %v2045 = vmul.f32 %v2020, %v1958
      %v2046 = vmul.f32 %v2022, %v1958
      %v2047 = vmul.f32 %v2024, %v1958
      %v2048 = vmul.f32 %v2026, %v1958
      %v2049 = vmul.f32 %v2028, %v1958
      %v2050 = vmul.f32 %v2030, %v1958
      %v2051 = vmul.f32 %v2032, %v1958
      %v2052 = vmul.f32 %v2034, %v1958
      %v2053 = vmul.f32 %v2036, %v1958
      %v2054 = vmul.f32 %v2038, %v1958
      %v2055 = vadd.f32 %v2039, 1e-05
      %v2056 = vadd.f32 %v2040, 1e-05
      %v2057 = vadd.f32 %v2041, 1e-05
      %v2058 = vadd.f32 %v2042, 1e-05
      %v2059 = vadd.f32 %v2043, 1e-05
      %v2060 = vadd.f32 %v2044, 1e-05
      %v2061 = vadd.f32 %v2045, 1e-05
      %v2062 = vadd.f32 %v2046, 1e-05
      %v2063 = vadd.f32 %v2047, 1e-05
      %v2064 = vadd.f32 %v2048, 1e-05
      %v2065 = vadd.f32 %v2049, 1e-05
      %v2066 = vadd.f32 %v2050, 1e-05
      %v2067 = vadd.f32 %v2051, 1e-05
      %v2068 = vadd.f32 %v2052, 1e-05
      %v2069 = vadd.f32 %v2053, 1e-05
      %v2070 = vadd.f32 %v2054, 1e-05
      %v2071 = vrsqrt.pop %v2055
      %v2072 = vrsqrt.pop %v2056
      %v2073 = vrsqrt.pop %v2057
      %v2074 = vrsqrt.pop %v2058
      %v2075 = vrsqrt.pop %v2059
      %v2076 = vrsqrt.pop %v2060
      %v2077 = vrsqrt.pop %v2061
      %v2078 = vrsqrt.pop %v2062
      %v2079 = vrsqrt.pop %v2063
      %v2080 = vrsqrt.pop %v2064
      %v2081 = vrsqrt.pop %v2065
      %v2082 = vrsqrt.pop %v2066
      %v2083 = vrsqrt.pop %v2067
      %v2084 = vrsqrt.pop %v2068
      %v2085 = vrsqrt.pop %v2069
      %v2086 = vrsqrt.pop %v2070
      %v2087 = vmul.f32 %v1975, %v2071
      %v2088 = vmul.f32 %v1976, %v2072
      %v2089 = vmul.f32 %v1977, %v2073
      %v2090 = vmul.f32 %v1978, %v2074
      %v2091 = vmul.f32 %v1979, %v2075
      %v2092 = vmul.f32 %v1980, %v2076
      %v2093 = vmul.f32 %v1981, %v2077
      %v2094 = vmul.f32 %v1982, %v2078
      %v2095 = vmul.f32 %v1983, %v2079
      %v2096 = vmul.f32 %v1984, %v2080
      %v2097 = vmul.f32 %v1985, %v2081
      %v2098 = vmul.f32 %v1986, %v2082
      %v2099 = vmul.f32 %v1987, %v2083
      %v2100 = vmul.f32 %v1988, %v2084
      %v2101 = vmul.f32 %v1989, %v2085
      %v2102 = vmul.f32 %v1990, %v2086
      %v2103 = vmul.f32 %v2087, %v510
      %v2104 = vmul.f32 %v2088, %v510
      %v2105 = vmul.f32 %v2089, %v510
      %v2106 = vmul.f32 %v2090, %v510
      %v2107 = vmul.f32 %v2091, %v510
      %v2108 = vmul.f32 %v2092, %v510
      %v2109 = vmul.f32 %v2093, %v510
      %v2110 = vmul.f32 %v2094, %v510
      %v2111 = vmul.f32 %v2095, %v510
      %v2112 = vmul.f32 %v2096, %v510
      %v2113 = vmul.f32 %v2097, %v510
      %v2114 = vmul.f32 %v2098, %v510
      %v2115 = vmul.f32 %v2099, %v510
      %v2116 = vmul.f32 %v2100, %v510
      %v2117 = vmul.f32 %v2101, %v510
      %v2118 = vmul.f32 %v2102, %v510
      %v2119 = vadd.f32 %v2103, %v511
      %v2120 = vadd.f32 %v2104, %v511
      %v2121 = vadd.f32 %v2105, %v511
      %v2122 = vadd.f32 %v2106, %v511
      %v2123 = vadd.f32 %v2107, %v511
      %v2124 = vadd.f32 %v2108, %v511
      %v2125 = vadd.f32 %v2109, %v511
      %v2126 = vadd.f32 %v2110, %v511
      %v2127 = vadd.f32 %v2111, %v511
      %v2128 = vadd.f32 %v2112, %v511
      %v2129 = vadd.f32 %v2113, %v511
      %v2130 = vadd.f32 %v2114, %v511
      %v2131 = vadd.f32 %v2115, %v511
      %v2132 = vadd.f32 %v2116, %v511
      %v2133 = vadd.f32 %v2117, %v511
      %v2134 = vadd.f32 %v2118, %v511
      %v2135 = vpack.c.bf16 %v2120, %v2119
      %v2136 = vpack.c.bf16 %v2122, %v2121
      %v2137 = vpack.c.bf16 %v2124, %v2123
      %v2138 = vpack.c.bf16 %v2126, %v2125
      %v2139 = vpack.c.bf16 %v2128, %v2127
      %v2140 = vpack.c.bf16 %v2130, %v2129
      %v2141 = vpack.c.bf16 %v2132, %v2131
      %v2142 = vpack.c.bf16 %v2134, %v2133
      %v2143 = vld [vmem:[%s448] sm:$0xff]
      %v2144 = vld [vmem:[%s448 + $0x8] sm:$0xff]
      %v2145 = vld [vmem:[%s448 + $0x10] sm:$0xff]
      %v2146 = vld [vmem:[%s448 + $0x18] sm:$0xff]
      %v2147 = vld [vmem:[%s448 + $0x20] sm:$0xff]
      %v2148 = vld [vmem:[%s448 + $0x28] sm:$0xff]
      %v2149 = vld [vmem:[%s448 + $0x30] sm:$0xff]
      %v2150 = vld [vmem:[%s448 + $0x38] sm:$0xff]
      %v2151 = vld [vmem:[%s448 + $0x40] sm:$0xff]
      %v2152 = vld [vmem:[%s448 + $0x48] sm:$0xff]
      %v2153 = vld [vmem:[%s448 + $0x50] sm:$0xff]
      %v2154 = vld [vmem:[%s448 + $0x58] sm:$0xff]
      %v2155 = vld [vmem:[%s448 + $0x60] sm:$0xff]
      %v2156 = vld [vmem:[%s448 + $0x68] sm:$0xff]
      %v2157 = vld [vmem:[%s448 + $0x70] sm:$0xff]
      %v2158 = vld [vmem:[%s448 + $0x78] sm:$0xff]
      %v2160 = vlaneseq
      %v2161 = vshrl.u32 %v2160, 7
      %v2162 = vsub.s32 0, %v2161
      %v2163 = vrot.slane %v508, %v2162
      %v2164 = vlaneseq
      %v2165 = vshrl.u32 %v2164, 7
      %v2166 = vsub.s32 1, %v2165
      %v2167 = vrot.slane %v508, %v2166
      %v2186 = vunpack.c.l.b16 %v2143
      %v2187 = vunpack.c.h.b16 %v2143
      %v2188 = vunpack.c.l.b16 %v2144
      %v2189 = vunpack.c.h.b16 %v2144
      %v2190 = vunpack.c.l.b16 %v2145
      %v2191 = vunpack.c.h.b16 %v2145
      %v2192 = vunpack.c.l.b16 %v2146
      %v2193 = vunpack.c.h.b16 %v2146
      %v2194 = vunpack.c.l.b16 %v2147
      %v2195 = vunpack.c.h.b16 %v2147
      %v2196 = vunpack.c.l.b16 %v2148
      %v2197 = vunpack.c.h.b16 %v2148
      %v2198 = vunpack.c.l.b16 %v2149
      %v2199 = vunpack.c.h.b16 %v2149
      %v2200 = vunpack.c.l.b16 %v2150
      %v2201 = vunpack.c.h.b16 %v2150
      %v2202 = vunpack.c.l.b16 %v2151
      %v2203 = vunpack.c.h.b16 %v2151
      %v2204 = vunpack.c.l.b16 %v2152
      %v2205 = vunpack.c.h.b16 %v2152
      %v2206 = vunpack.c.l.b16 %v2153
      %v2207 = vunpack.c.h.b16 %v2153
      %v2208 = vunpack.c.l.b16 %v2154
      %v2209 = vunpack.c.h.b16 %v2154
      %v2210 = vunpack.c.l.b16 %v2155
      %v2211 = vunpack.c.h.b16 %v2155
      %v2212 = vunpack.c.l.b16 %v2156
      %v2213 = vunpack.c.h.b16 %v2156
      %v2214 = vunpack.c.l.b16 %v2157
      %v2215 = vunpack.c.h.b16 %v2157
      %v2216 = vunpack.c.l.b16 %v2158
      %v2217 = vunpack.c.h.b16 %v2158
      %v2218 = vpack.c.b16 %v2188, %v2186
      %v2219 = vpack.c.b16 %v2189, %v2187
      %v2220 = vpack.c.b16 %v2192, %v2190
      %v2221 = vpack.c.b16 %v2193, %v2191
      %v2222 = vpack.c.b16 %v2196, %v2194
      %v2223 = vpack.c.b16 %v2197, %v2195
      %v2224 = vpack.c.b16 %v2200, %v2198
      %v2225 = vpack.c.b16 %v2201, %v2199
      %v2226 = vpack.c.b16 %v2204, %v2202
      %v2227 = vpack.c.b16 %v2205, %v2203
      %v2228 = vpack.c.b16 %v2208, %v2206
      %v2229 = vpack.c.b16 %v2209, %v2207
      %v2230 = vpack.c.b16 %v2212, %v2210
      %v2231 = vpack.c.b16 %v2213, %v2211
      %v2232 = vpack.c.b16 %v2216, %v2214
      %v2233 = vpack.c.b16 %v2217, %v2215
      %2250 = vmatprep.subr.bf16.mxu0 %v2219
      %2251 = vmatpush1.bf16.msra.mxu0 %v2218
      %2252 = vmatprep.subr.bf16.mxu0 %v2221
      %2253 = vmatpush1.bf16.msra.mxu0 %v2220
      %2254 = vmatprep.subr.bf16.mxu0 %v2223
      %2255 = vmatpush1.bf16.msra.mxu0 %v2222
      %2256 = vmatprep.subr.bf16.mxu0 %v2225
      %2257 = vmatpush1.bf16.msra.mxu0 %v2224
      %2258 = vmatprep.subr.bf16.mxu0 %v2227
      %2259 = vmatpush1.bf16.msra.mxu0 %v2226
      %2260 = vmatprep.subr.bf16.mxu0 %v2229
      %2261 = vmatpush1.bf16.msra.mxu0 %v2228
      %2262 = vmatprep.subr.bf16.mxu0 %v2231
      %2263 = vmatpush1.bf16.msra.mxu0 %v2230
      %2264 = vmatprep.subr.bf16.mxu0 %v2233
      %2265 = vmatpush1.bf16.msra.mxu0 %v2232
      %2266 = vmatprep.subr.bf16.mxu0 0
      %2267 = vmatpush1.bf16.msra.mxu0 0
      %2268 = vmatprep.subr.bf16.mxu0 0
      %2269 = vmatpush1.bf16.msra.mxu0 0
      %2270 = vmatprep.subr.bf16.mxu0 0
      %2271 = vmatpush1.bf16.msra.mxu0 0
      %2272 = vmatprep.subr.bf16.mxu0 0
      %2273 = vmatpush1.bf16.msra.mxu0 0
      %2274 = vmatprep.subr.bf16.mxu0 0
      %2275 = vmatpush1.bf16.msra.mxu0 0
      %2276 = vmatprep.subr.bf16.mxu0 0
      %2277 = vmatpush1.bf16.msra.mxu0 0
      %2278 = vmatprep.subr.bf16.mxu0 0
      %2279 = vmatpush1.bf16.msra.mxu0 0
      %2280 = vmatprep.subr.bf16.mxu0 0
      %2281 = vmatpush1.bf16.msra.mxu0 0
      %2282 = vmatprep.mubr.bf16.mxu0 0
      %2283 = vmatmul.mubr.bf16.gmra.mrb[0].mxu0 %v2135
      %v2284 = vpop.f32.mrb[0].mxu0
      %v2285 = vadd.f32 %v2163, %v2284
      %v2286 = vpop.f32.mrb[0].mxu0
      %v2287 = vadd.f32 %v2167, %v2286
      %v2288 = vpop.f32.mrb[0].mxu0
      %v2289 = vadd.f32 %v2163, %v2288
      %v2290 = vpop.f32.mrb[0].mxu0
      %v2291 = vadd.f32 %v2167, %v2290
      %2292 = vmatprep.mubr.bf16.mxu0 0
      %2293 = vmatmul.mubr.bf16.gmra.mrb[0].mxu0 %v2136
      %v2294 = vpop.f32.mrb[0].mxu0
      %v2295 = vadd.f32 %v2163, %v2294
      %v2296 = vpop.f32.mrb[0].mxu0
      %v2297 = vadd.f32 %v2167, %v2296
      %v2298 = vpop.f32.mrb[0].mxu0
      %v2299 = vadd.f32 %v2163, %v2298
      %v2300 = vpop.f32.mrb[0].mxu0
      %v2301 = vadd.f32 %v2167, %v2300
      %2302 = vmatprep.mubr.bf16.mxu0 0
      %2303 = vmatmul.mubr.bf16.gmra.mrb[0].mxu0 %v2137
      %v2304 = vpop.f32.mrb[0].mxu0
      %v2305 = vadd.f32 %v2163, %v2304
      %v2306 = vpop.f32.mrb[0].mxu0
      %v2307 = vadd.f32 %v2167, %v2306
      %v2308 = vpop.f32.mrb[0].mxu0
      %v2309 = vadd.f32 %v2163, %v2308
      %v2310 = vpop.f32.mrb[0].mxu0
      %v2311 = vadd.f32 %v2167, %v2310
      %2312 = vmatprep.mubr.bf16.mxu0 0
      %2313 = vmatmul.mubr.bf16.gmra.mrb[0].mxu0 %v2138
      %v2314 = vpop.f32.mrb[0].mxu0
      %v2315 = vadd.f32 %v2163, %v2314
      %v2316 = vpop.f32.mrb[0].mxu0
      %v2317 = vadd.f32 %v2167, %v2316
      %v2318 = vpop.f32.mrb[0].mxu0
      %v2319 = vadd.f32 %v2163, %v2318
      %v2320 = vpop.f32.mrb[0].mxu0
      %v2321 = vadd.f32 %v2167, %v2320
      %2322 = vmatprep.mubr.bf16.mxu0 0
      %2323 = vmatmul.mubr.bf16.gmra.mrb[0].mxu0 %v2139
      %v2324 = vpop.f32.mrb[0].mxu0
      %v2325 = vadd.f32 %v2163, %v2324
      %v2326 = vpop.f32.mrb[0].mxu0
      %v2327 = vadd.f32 %v2167, %v2326
      %v2328 = vpop.f32.mrb[0].mxu0
      %v2329 = vadd.f32 %v2163, %v2328
      %v2330 = vpop.f32.mrb[0].mxu0
      %v2331 = vadd.f32 %v2167, %v2330
      %2332 = vmatprep.mubr.bf16.mxu0 0
      %2333 = vmatmul.mubr.bf16.gmra.mrb[0].mxu0 %v2140
      %v2334 = vpop.f32.mrb[0].mxu0
      %v2335 = vadd.f32 %v2163, %v2334
      %v2336 = vpop.f32.mrb[0].mxu0
      %v2337 = vadd.f32 %v2167, %v2336
      %v2338 = vpop.f32.mrb[0].mxu0
      %v2339 = vadd.f32 %v2163, %v2338
      %v2340 = vpop.f32.mrb[0].mxu0
      %v2341 = vadd.f32 %v2167, %v2340
      %2342 = vmatprep.mubr.bf16.mxu0 0
      %2343 = vmatmul.mubr.bf16.gmra.mrb[0].mxu0 %v2141
      %v2344 = vpop.f32.mrb[0].mxu0
      %v2345 = vadd.f32 %v2163, %v2344
      %v2346 = vpop.f32.mrb[0].mxu0
      %v2347 = vadd.f32 %v2167, %v2346
      %v2348 = vpop.f32.mrb[0].mxu0
      %v2349 = vadd.f32 %v2163, %v2348
      %v2350 = vpop.f32.mrb[0].mxu0
      %v2351 = vadd.f32 %v2167, %v2350
      %2352 = vmatprep.mubr.bf16.mxu0 0
      %2353 = vmatmul.mubr.bf16.gmra.mrb[0].mxu0 %v2142
      %v2354 = vpop.f32.mrb[0].mxu0
      %v2355 = vadd.f32 %v2163, %v2354
      %v2356 = vpop.f32.mrb[0].mxu0
      %v2357 = vadd.f32 %v2167, %v2356
      %v2358 = vpop.f32.mrb[0].mxu0
      %v2359 = vadd.f32 %v2163, %v2358
      %v2360 = vpop.f32.mrb[0].mxu0
      %v2361 = vadd.f32 %v2167, %v2360
      %2362 = vdwg.mxu0
      %v2363 = vmax.f32 %v2285, 0.0
      %v2364 = vmax.f32 %v2287, 0.0
      %v2365 = vmax.f32 %v2289, 0.0
      %v2366 = vmax.f32 %v2291, 0.0
      %v2367 = vmax.f32 %v2295, 0.0
      %v2368 = vmax.f32 %v2297, 0.0
      %v2369 = vmax.f32 %v2299, 0.0
      %v2370 = vmax.f32 %v2301, 0.0
      %v2371 = vmax.f32 %v2305, 0.0
      %v2372 = vmax.f32 %v2307, 0.0
      %v2373 = vmax.f32 %v2309, 0.0
      %v2374 = vmax.f32 %v2311, 0.0
      %v2375 = vmax.f32 %v2315, 0.0
      %v2376 = vmax.f32 %v2317, 0.0
      %v2377 = vmax.f32 %v2319, 0.0
      %v2378 = vmax.f32 %v2321, 0.0
      %v2379 = vmax.f32 %v2325, 0.0
      %v2380 = vmax.f32 %v2327, 0.0
      %v2381 = vmax.f32 %v2329, 0.0
      %v2382 = vmax.f32 %v2331, 0.0
      %v2383 = vmax.f32 %v2335, 0.0
      %v2384 = vmax.f32 %v2337, 0.0
      %v2385 = vmax.f32 %v2339, 0.0
      %v2386 = vmax.f32 %v2341, 0.0
      %v2387 = vmax.f32 %v2345, 0.0
      %v2388 = vmax.f32 %v2347, 0.0
      %v2389 = vmax.f32 %v2349, 0.0
      %v2390 = vmax.f32 %v2351, 0.0
      %v2391 = vmax.f32 %v2355, 0.0
      %v2392 = vmax.f32 %v2357, 0.0
      %v2393 = vmax.f32 %v2359, 0.0
      %v2394 = vmax.f32 %v2361, 0.0
      %v2395 = vpack.c.bf16 %v2365, %v2363
      %v2396 = vpack.c.bf16 %v2366, %v2364
      %v2397 = vpack.c.bf16 %v2369, %v2367
      %v2398 = vpack.c.bf16 %v2370, %v2368
      %v2399 = vpack.c.bf16 %v2373, %v2371
      %v2400 = vpack.c.bf16 %v2374, %v2372
      %v2401 = vpack.c.bf16 %v2377, %v2375
      %v2402 = vpack.c.bf16 %v2378, %v2376
      %v2403 = vpack.c.bf16 %v2381, %v2379
      %v2404 = vpack.c.bf16 %v2382, %v2380
      %v2405 = vpack.c.bf16 %v2385, %v2383
      %v2406 = vpack.c.bf16 %v2386, %v2384
      %v2407 = vpack.c.bf16 %v2389, %v2387
      %v2408 = vpack.c.bf16 %v2390, %v2388
      %v2409 = vpack.c.bf16 %v2393, %v2391
      %v2410 = vpack.c.bf16 %v2394, %v2392
      %v2411 = vld [vmem:[%s453] sm:$0xf]
      %v2412 = vld [vmem:[%s453 + $0x4] sm:$0xf]
      %v2413 = vld [vmem:[%s453 + $0x8] sm:$0xf]
      %v2414 = vld [vmem:[%s453 + $0xc] sm:$0xf]
      %v2415 = vld [vmem:[%s453 + $0x10] sm:$0xf]
      %v2416 = vld [vmem:[%s453 + $0x14] sm:$0xf]
      %v2417 = vld [vmem:[%s453 + $0x18] sm:$0xf]
      %v2418 = vld [vmem:[%s453 + $0x1c] sm:$0xf]
      %v2419 = vld [vmem:[%s453 + $0x20] sm:$0xf]
      %v2420 = vld [vmem:[%s453 + $0x24] sm:$0xf]
      %v2421 = vld [vmem:[%s453 + $0x28] sm:$0xf]
      %v2422 = vld [vmem:[%s453 + $0x2c] sm:$0xf]
      %v2423 = vld [vmem:[%s453 + $0x30] sm:$0xf]
      %v2424 = vld [vmem:[%s453 + $0x34] sm:$0xf]
      %v2425 = vld [vmem:[%s453 + $0x38] sm:$0xf]
      %v2426 = vld [vmem:[%s453 + $0x3c] sm:$0xf]
      %v2427 = vld [vmem:[%s453 + $0x40] sm:$0xf]
      %v2428 = vld [vmem:[%s453 + $0x44] sm:$0xf]
      %v2429 = vld [vmem:[%s453 + $0x48] sm:$0xf]
      %v2430 = vld [vmem:[%s453 + $0x4c] sm:$0xf]
      %v2431 = vld [vmem:[%s453 + $0x50] sm:$0xf]
      %v2432 = vld [vmem:[%s453 + $0x54] sm:$0xf]
      %v2433 = vld [vmem:[%s453 + $0x58] sm:$0xf]
      %v2434 = vld [vmem:[%s453 + $0x5c] sm:$0xf]
      %v2435 = vld [vmem:[%s453 + $0x60] sm:$0xf]
      %v2436 = vld [vmem:[%s453 + $0x64] sm:$0xf]
      %v2437 = vld [vmem:[%s453 + $0x68] sm:$0xf]
      %v2438 = vld [vmem:[%s453 + $0x6c] sm:$0xf]
      %v2439 = vld [vmem:[%s453 + $0x70] sm:$0xf]
      %v2440 = vld [vmem:[%s453 + $0x74] sm:$0xf]
      %v2441 = vld [vmem:[%s453 + $0x78] sm:$0xf]
      %v2442 = vld [vmem:[%s453 + $0x7c] sm:$0xf]
      %v2475 = vunpack.c.l.b16 %v2411
      %v2476 = vunpack.c.l.b16 %v2412
      %v2477 = vunpack.c.l.b16 %v2413
      %v2478 = vunpack.c.l.b16 %v2414
      %v2479 = vunpack.c.l.b16 %v2415
      %v2480 = vunpack.c.l.b16 %v2416
      %v2481 = vunpack.c.l.b16 %v2417
      %v2482 = vunpack.c.l.b16 %v2418
      %v2483 = vunpack.c.l.b16 %v2419
      %v2484 = vunpack.c.l.b16 %v2420
      %v2485 = vunpack.c.l.b16 %v2421
      %v2486 = vunpack.c.l.b16 %v2422
      %v2487 = vunpack.c.l.b16 %v2423
      %v2488 = vunpack.c.l.b16 %v2424
      %v2489 = vunpack.c.l.b16 %v2425
      %v2490 = vunpack.c.l.b16 %v2426
      %v2491 = vunpack.c.l.b16 %v2427
      %v2492 = vunpack.c.l.b16 %v2428
      %v2493 = vunpack.c.l.b16 %v2429
      %v2494 = vunpack.c.l.b16 %v2430
      %v2495 = vunpack.c.l.b16 %v2431
      %v2496 = vunpack.c.l.b16 %v2432
      %v2497 = vunpack.c.l.b16 %v2433
      %v2498 = vunpack.c.l.b16 %v2434
      %v2499 = vunpack.c.l.b16 %v2435
      %v2500 = vunpack.c.l.b16 %v2436
      %v2501 = vunpack.c.l.b16 %v2437
      %v2502 = vunpack.c.l.b16 %v2438
      %v2503 = vunpack.c.l.b16 %v2439
      %v2504 = vunpack.c.l.b16 %v2440
      %v2505 = vunpack.c.l.b16 %v2441
      %v2506 = vunpack.c.l.b16 %v2442
      %v2507 = vpack.c.b16 %v2476, %v2475
      %v2508 = vpack.c.b16 %v2478, %v2477
      %v2509 = vpack.c.b16 %v2480, %v2479
      %v2510 = vpack.c.b16 %v2482, %v2481
      %v2511 = vpack.c.b16 %v2484, %v2483
      %v2512 = vpack.c.b16 %v2486, %v2485
      %v2513 = vpack.c.b16 %v2488, %v2487
      %v2514 = vpack.c.b16 %v2490, %v2489
      %v2515 = vpack.c.b16 %v2492, %v2491
      %v2516 = vpack.c.b16 %v2494, %v2493
      %v2517 = vpack.c.b16 %v2496, %v2495
      %v2518 = vpack.c.b16 %v2498, %v2497
      %v2519 = vpack.c.b16 %v2500, %v2499
      %v2520 = vpack.c.b16 %v2502, %v2501
      %v2521 = vpack.c.b16 %v2504, %v2503
      %v2522 = vpack.c.b16 %v2506, %v2505
      %2539 = vmatprep.subr.bf16.mxu0 0
      %2540 = vmatpush1.bf16.msra.mxu0 %v2507
      %2541 = vmatprep.subr.bf16.mxu0 0
      %2542 = vmatpush1.bf16.msra.mxu0 %v2508
      %2543 = vmatprep.subr.bf16.mxu0 0
      %2544 = vmatpush1.bf16.msra.mxu0 %v2509
      %2545 = vmatprep.subr.bf16.mxu0 0
      %2546 = vmatpush1.bf16.msra.mxu0 %v2510
      %2547 = vmatprep.subr.bf16.mxu0 0
      %2548 = vmatpush1.bf16.msra.mxu0 %v2511
      %2549 = vmatprep.subr.bf16.mxu0 0
      %2550 = vmatpush1.bf16.msra.mxu0 %v2512
      %2551 = vmatprep.subr.bf16.mxu0 0
      %2552 = vmatpush1.bf16.msra.mxu0 %v2513
      %2553 = vmatprep.subr.bf16.mxu0 0
      %2554 = vmatpush1.bf16.msra.mxu0 %v2514
      %2555 = vmatprep.subr.bf16.mxu0 0
      %2556 = vmatpush1.bf16.msra.mxu0 %v2515
      %2557 = vmatprep.subr.bf16.mxu0 0
      %2558 = vmatpush1.bf16.msra.mxu0 %v2516
      %2559 = vmatprep.subr.bf16.mxu0 0
      %2560 = vmatpush1.bf16.msra.mxu0 %v2517
      %2561 = vmatprep.subr.bf16.mxu0 0
      %2562 = vmatpush1.bf16.msra.mxu0 %v2518
      %2563 = vmatprep.subr.bf16.mxu0 0
      %2564 = vmatpush1.bf16.msra.mxu0 %v2519
      %2565 = vmatprep.subr.bf16.mxu0 0
      %2566 = vmatpush1.bf16.msra.mxu0 %v2520
      %2567 = vmatprep.subr.bf16.mxu0 0
      %2568 = vmatpush1.bf16.msra.mxu0 %v2521
      %2569 = vmatprep.subr.bf16.mxu0 0
      %2570 = vmatpush1.bf16.msra.mxu0 %v2522
      %2571 = vmatprep.mubr.bf16.mxu0 %v2396
      %2572 = vmatmul.mubr.bf16.gmra.mrb[0].mxu0 %v2395
      %v2573 = vpop.f32.mrb[0].mxu0
      %v2574 = vadd.f32 %v509, %v2573
      %v2575 = vpop.f32.mrb[0].mxu0
      %v2576 = vpop.f32.mrb[0].mxu0
      %v2577 = vadd.f32 %v509, %v2576
      %v2578 = vpop.f32.mrb[0].mxu0
      %2579 = vmatprep.mubr.bf16.mxu0 %v2398
      %2580 = vmatmul.mubr.bf16.gmra.mrb[0].mxu0 %v2397
      %v2581 = vpop.f32.mrb[0].mxu0
      %v2582 = vadd.f32 %v509, %v2581
      %v2583 = vpop.f32.mrb[0].mxu0
      %v2584 = vpop.f32.mrb[0].mxu0
      %v2585 = vadd.f32 %v509, %v2584
      %v2586 = vpop.f32.mrb[0].mxu0
      %2587 = vmatprep.mubr.bf16.mxu0 %v2400
      %2588 = vmatmul.mubr.bf16.gmra.mrb[0].mxu0 %v2399
      %v2589 = vpop.f32.mrb[0].mxu0
      %v2590 = vadd.f32 %v509, %v2589
      %v2591 = vpop.f32.mrb[0].mxu0
      %v2592 = vpop.f32.mrb[0].mxu0
      %v2593 = vadd.f32 %v509, %v2592
      %v2594 = vpop.f32.mrb[0].mxu0
      %2595 = vmatprep.mubr.bf16.mxu0 %v2402
      %2596 = vmatmul.mubr.bf16.gmra.mrb[0].mxu0 %v2401
      %v2597 = vpop.f32.mrb[0].mxu0
      %v2598 = vadd.f32 %v509, %v2597
      %v2599 = vpop.f32.mrb[0].mxu0
      %v2600 = vpop.f32.mrb[0].mxu0
      %v2601 = vadd.f32 %v509, %v2600
      %v2602 = vpop.f32.mrb[0].mxu0
      %2603 = vmatprep.mubr.bf16.mxu0 %v2404
      %2604 = vmatmul.mubr.bf16.gmra.mrb[0].mxu0 %v2403
      %v2605 = vpop.f32.mrb[0].mxu0
      %v2606 = vadd.f32 %v509, %v2605
      %v2607 = vpop.f32.mrb[0].mxu0
      %v2608 = vpop.f32.mrb[0].mxu0
      %v2609 = vadd.f32 %v509, %v2608
      %v2610 = vpop.f32.mrb[0].mxu0
      %2611 = vmatprep.mubr.bf16.mxu0 %v2406
      %2612 = vmatmul.mubr.bf16.gmra.mrb[0].mxu0 %v2405
      %v2613 = vpop.f32.mrb[0].mxu0
      %v2614 = vadd.f32 %v509, %v2613
      %v2615 = vpop.f32.mrb[0].mxu0
      %v2616 = vpop.f32.mrb[0].mxu0
      %v2617 = vadd.f32 %v509, %v2616
      %v2618 = vpop.f32.mrb[0].mxu0
      %2619 = vmatprep.mubr.bf16.mxu0 %v2408
      %2620 = vmatmul.mubr.bf16.gmra.mrb[0].mxu0 %v2407
      %v2621 = vpop.f32.mrb[0].mxu0
      %v2622 = vadd.f32 %v509, %v2621
      %v2623 = vpop.f32.mrb[0].mxu0
      %v2624 = vpop.f32.mrb[0].mxu0
      %v2625 = vadd.f32 %v509, %v2624
      %v2626 = vpop.f32.mrb[0].mxu0
      %2627 = vmatprep.mubr.bf16.mxu0 %v2410
      %2628 = vmatmul.mubr.bf16.gmra.mrb[0].mxu0 %v2409
      %v2629 = vpop.f32.mrb[0].mxu0
      %v2630 = vadd.f32 %v509, %v2629
      %v2631 = vpop.f32.mrb[0].mxu0
      %v2632 = vpop.f32.mrb[0].mxu0
      %v2633 = vadd.f32 %v509, %v2632
      %v2634 = vpop.f32.mrb[0].mxu0
      %2635 = vdwg.mxu0
      %v2636 = vadd.f32 %v2119, %v2574
      %v2637 = vadd.f32 %v2120, %v2577
      %v2638 = vadd.f32 %v2121, %v2582
      %v2639 = vadd.f32 %v2122, %v2585
      %v2640 = vadd.f32 %v2123, %v2590
      %v2641 = vadd.f32 %v2124, %v2593
      %v2642 = vadd.f32 %v2125, %v2598
      %v2643 = vadd.f32 %v2126, %v2601
      %v2644 = vadd.f32 %v2127, %v2606
      %v2645 = vadd.f32 %v2128, %v2609
      %v2646 = vadd.f32 %v2129, %v2614
      %v2647 = vadd.f32 %v2130, %v2617
      %v2648 = vadd.f32 %v2131, %v2622
      %v2649 = vadd.f32 %v2132, %v2625
      %v2650 = vadd.f32 %v2133, %v2630
      %v2651 = vadd.f32 %v2134, %v2633
      %2652 = vadd.xlane.f32.xlu0 %v2636
      %v2653 = vpop.xlane.xlu0 %2652
      %2654 = vadd.xlane.f32.xlu0 %v2637
      %v2655 = vpop.xlane.xlu0 %2654
      %2656 = vadd.xlane.f32.xlu0 %v2638
      %v2657 = vpop.xlane.xlu0 %2656
      %2658 = vadd.xlane.f32.xlu0 %v2639
      %v2659 = vpop.xlane.xlu0 %2658
      %2660 = vadd.xlane.f32.xlu0 %v2640
      %v2661 = vpop.xlane.xlu0 %2660
      %2662 = vadd.xlane.f32.xlu0 %v2641
      %v2663 = vpop.xlane.xlu0 %2662
      %2664 = vadd.xlane.f32.xlu0 %v2642
      %v2665 = vpop.xlane.xlu0 %2664
      %2666 = vadd.xlane.f32.xlu0 %v2643
      %v2667 = vpop.xlane.xlu0 %2666
      %2668 = vadd.xlane.f32.xlu0 %v2644
      %v2669 = vpop.xlane.xlu0 %2668
      %2670 = vadd.xlane.f32.xlu0 %v2645
      %v2671 = vpop.xlane.xlu0 %2670
      %2672 = vadd.xlane.f32.xlu0 %v2646
      %v2673 = vpop.xlane.xlu0 %2672
      %2674 = vadd.xlane.f32.xlu0 %v2647
      %v2675 = vpop.xlane.xlu0 %2674
      %2676 = vadd.xlane.f32.xlu0 %v2648
      %v2677 = vpop.xlane.xlu0 %2676
      %2678 = vadd.xlane.f32.xlu0 %v2649
      %v2679 = vpop.xlane.xlu0 %2678
      %2680 = vadd.xlane.f32.xlu0 %v2650
      %v2681 = vpop.xlane.xlu0 %2680
      %2682 = vadd.xlane.f32.xlu0 %v2651
      %v2683 = vpop.xlane.xlu0 %2682
      %v2684 = vmul.f32 %v2653, %v1958
      %v2685 = vmul.f32 %v2655, %v1958
      %v2686 = vmul.f32 %v2657, %v1958
      %v2687 = vmul.f32 %v2659, %v1958
      %v2688 = vmul.f32 %v2661, %v1958
      %v2689 = vmul.f32 %v2663, %v1958
      %v2690 = vmul.f32 %v2665, %v1958
      %v2691 = vmul.f32 %v2667, %v1958
      %v2692 = vmul.f32 %v2669, %v1958
      %v2693 = vmul.f32 %v2671, %v1958
      %v2694 = vmul.f32 %v2673, %v1958
      %v2695 = vmul.f32 %v2675, %v1958
      %v2696 = vmul.f32 %v2677, %v1958
      %v2697 = vmul.f32 %v2679, %v1958
      %v2698 = vmul.f32 %v2681, %v1958
      %v2699 = vmul.f32 %v2683, %v1958
      %v2700 = vsub.f32 %v2636, %v2684
      %v2701 = vsub.f32 %v2637, %v2685
      %v2702 = vsub.f32 %v2638, %v2686
      %v2703 = vsub.f32 %v2639, %v2687
      %v2704 = vsub.f32 %v2640, %v2688
      %v2705 = vsub.f32 %v2641, %v2689
      %v2706 = vsub.f32 %v2642, %v2690
      %v2707 = vsub.f32 %v2643, %v2691
      %v2708 = vsub.f32 %v2644, %v2692
      %v2709 = vsub.f32 %v2645, %v2693
      %v2710 = vsub.f32 %v2646, %v2694
      %v2711 = vsub.f32 %v2647, %v2695
      %v2712 = vsub.f32 %v2648, %v2696
      %v2713 = vsub.f32 %v2649, %v2697
      %v2714 = vsub.f32 %v2650, %v2698
      %v2715 = vsub.f32 %v2651, %v2699
      %v2716 = vmul.f32 %v2700, %v2700
      %v2717 = vmul.f32 %v2701, %v2701
      %v2718 = vmul.f32 %v2702, %v2702
      %v2719 = vmul.f32 %v2703, %v2703
      %v2720 = vmul.f32 %v2704, %v2704
      %v2721 = vmul.f32 %v2705, %v2705
      %v2722 = vmul.f32 %v2706, %v2706
      %v2723 = vmul.f32 %v2707, %v2707
      %v2724 = vmul.f32 %v2708, %v2708
      %v2725 = vmul.f32 %v2709, %v2709
      %v2726 = vmul.f32 %v2710, %v2710
      %v2727 = vmul.f32 %v2711, %v2711
      %v2728 = vmul.f32 %v2712, %v2712
      %v2729 = vmul.f32 %v2713, %v2713
      %v2730 = vmul.f32 %v2714, %v2714
      %v2731 = vmul.f32 %v2715, %v2715
      %2732 = vadd.xlane.f32.xlu0 %v2716
      %v2733 = vpop.xlane.xlu0 %2732
      %2734 = vadd.xlane.f32.xlu0 %v2717
      %v2735 = vpop.xlane.xlu0 %2734
      %2736 = vadd.xlane.f32.xlu0 %v2718
      %v2737 = vpop.xlane.xlu0 %2736
      %2738 = vadd.xlane.f32.xlu0 %v2719
      %v2739 = vpop.xlane.xlu0 %2738
      %2740 = vadd.xlane.f32.xlu0 %v2720
      %v2741 = vpop.xlane.xlu0 %2740
      %2742 = vadd.xlane.f32.xlu0 %v2721
      %v2743 = vpop.xlane.xlu0 %2742
      %2744 = vadd.xlane.f32.xlu0 %v2722
      %v2745 = vpop.xlane.xlu0 %2744
      %2746 = vadd.xlane.f32.xlu0 %v2723
      %v2747 = vpop.xlane.xlu0 %2746
      %2748 = vadd.xlane.f32.xlu0 %v2724
      %v2749 = vpop.xlane.xlu0 %2748
      %2750 = vadd.xlane.f32.xlu0 %v2725
      %v2751 = vpop.xlane.xlu0 %2750
      %2752 = vadd.xlane.f32.xlu0 %v2726
      %v2753 = vpop.xlane.xlu0 %2752
      %2754 = vadd.xlane.f32.xlu0 %v2727
      %v2755 = vpop.xlane.xlu0 %2754
      %2756 = vadd.xlane.f32.xlu0 %v2728
      %v2757 = vpop.xlane.xlu0 %2756
      %2758 = vadd.xlane.f32.xlu0 %v2729
      %v2759 = vpop.xlane.xlu0 %2758
      %2760 = vadd.xlane.f32.xlu0 %v2730
      %v2761 = vpop.xlane.xlu0 %2760
      %2762 = vadd.xlane.f32.xlu0 %v2731
      %v2763 = vpop.xlane.xlu0 %2762
      %v2764 = vmul.f32 %v2733, %v1958
      %v2765 = vmul.f32 %v2735, %v1958
      %v2766 = vmul.f32 %v2737, %v1958
      %v2767 = vmul.f32 %v2739, %v1958
      %v2768 = vmul.f32 %v2741, %v1958
      %v2769 = vmul.f32 %v2743, %v1958
      %v2770 = vmul.f32 %v2745, %v1958
      %v2771 = vmul.f32 %v2747, %v1958
      %v2772 = vmul.f32 %v2749, %v1958
      %v2773 = vmul.f32 %v2751, %v1958
      %v2774 = vmul.f32 %v2753, %v1958
      %v2775 = vmul.f32 %v2755, %v1958
      %v2776 = vmul.f32 %v2757, %v1958
      %v2777 = vmul.f32 %v2759, %v1958
      %v2778 = vmul.f32 %v2761, %v1958
      %v2779 = vmul.f32 %v2763, %v1958
      %v2780 = vadd.f32 %v2764, 1e-05
      %v2781 = vadd.f32 %v2765, 1e-05
      %v2782 = vadd.f32 %v2766, 1e-05
      %v2783 = vadd.f32 %v2767, 1e-05
      %v2784 = vadd.f32 %v2768, 1e-05
      %v2785 = vadd.f32 %v2769, 1e-05
      %v2786 = vadd.f32 %v2770, 1e-05
      %v2787 = vadd.f32 %v2771, 1e-05
      %v2788 = vadd.f32 %v2772, 1e-05
      %v2789 = vadd.f32 %v2773, 1e-05
      %v2790 = vadd.f32 %v2774, 1e-05
      %v2791 = vadd.f32 %v2775, 1e-05
      %v2792 = vadd.f32 %v2776, 1e-05
      %v2793 = vadd.f32 %v2777, 1e-05
      %v2794 = vadd.f32 %v2778, 1e-05
      %v2795 = vadd.f32 %v2779, 1e-05
      %v2796 = vrsqrt.pop %v2780
      %v2797 = vrsqrt.pop %v2781
      %v2798 = vrsqrt.pop %v2782
      %v2799 = vrsqrt.pop %v2783
      %v2800 = vrsqrt.pop %v2784
      %v2801 = vrsqrt.pop %v2785
      %v2802 = vrsqrt.pop %v2786
      %v2803 = vrsqrt.pop %v2787
      %v2804 = vrsqrt.pop %v2788
      %v2805 = vrsqrt.pop %v2789
      %v2806 = vrsqrt.pop %v2790
      %v2807 = vrsqrt.pop %v2791
      %v2808 = vrsqrt.pop %v2792
      %v2809 = vrsqrt.pop %v2793
      %v2810 = vrsqrt.pop %v2794
      %v2811 = vrsqrt.pop %v2795
      %v2812 = vmul.f32 %v2700, %v2796
      %v2813 = vmul.f32 %v2701, %v2797
      %v2814 = vmul.f32 %v2702, %v2798
      %v2815 = vmul.f32 %v2703, %v2799
      %v2816 = vmul.f32 %v2704, %v2800
      %v2817 = vmul.f32 %v2705, %v2801
      %v2818 = vmul.f32 %v2706, %v2802
      %v2819 = vmul.f32 %v2707, %v2803
      %v2820 = vmul.f32 %v2708, %v2804
      %v2821 = vmul.f32 %v2709, %v2805
      %v2822 = vmul.f32 %v2710, %v2806
      %v2823 = vmul.f32 %v2711, %v2807
      %v2824 = vmul.f32 %v2712, %v2808
      %v2825 = vmul.f32 %v2713, %v2809
      %v2826 = vmul.f32 %v2714, %v2810
      %v2827 = vmul.f32 %v2715, %v2811
      %v2828 = vmul.f32 %v2812, %v512
      %v2829 = vmul.f32 %v2813, %v512
      %v2830 = vmul.f32 %v2814, %v512
      %v2831 = vmul.f32 %v2815, %v512
      %v2832 = vmul.f32 %v2816, %v512
      %v2833 = vmul.f32 %v2817, %v512
      %v2834 = vmul.f32 %v2818, %v512
      %v2835 = vmul.f32 %v2819, %v512
      %v2836 = vmul.f32 %v2820, %v512
      %v2837 = vmul.f32 %v2821, %v512
      %v2838 = vmul.f32 %v2822, %v512
      %v2839 = vmul.f32 %v2823, %v512
      %v2840 = vmul.f32 %v2824, %v512
      %v2841 = vmul.f32 %v2825, %v512
      %v2842 = vmul.f32 %v2826, %v512
      %v2843 = vmul.f32 %v2827, %v512
      %v2844 = vadd.f32 %v2828, %v513
      %v2845 = vadd.f32 %v2829, %v513
      %v2846 = vadd.f32 %v2830, %v513
      %v2847 = vadd.f32 %v2831, %v513
      %v2848 = vadd.f32 %v2832, %v513
      %v2849 = vadd.f32 %v2833, %v513
      %v2850 = vadd.f32 %v2834, %v513
      %v2851 = vadd.f32 %v2835, %v513
      %v2852 = vadd.f32 %v2836, %v513
      %v2853 = vadd.f32 %v2837, %v513
      %v2854 = vadd.f32 %v2838, %v513
      %v2855 = vadd.f32 %v2839, %v513
      %v2856 = vadd.f32 %v2840, %v513
      %v2857 = vadd.f32 %v2841, %v513
      %v2858 = vadd.f32 %v2842, %v513
      %v2859 = vadd.f32 %v2843, %v513
      %2860 = vst [vmem:[%s464] sm:$0xff] %v2844
      %2861 = vst [vmem:[%s464 + $0x8] sm:$0xff] %v2845
      %2862 = vst [vmem:[%s464 + $0x10] sm:$0xff] %v2846
      %2863 = vst [vmem:[%s464 + $0x18] sm:$0xff] %v2847
      %2864 = vst [vmem:[%s464 + $0x20] sm:$0xff] %v2848
      %2865 = vst [vmem:[%s464 + $0x28] sm:$0xff] %v2849
      %2866 = vst [vmem:[%s464 + $0x30] sm:$0xff] %v2850
      %2867 = vst [vmem:[%s464 + $0x38] sm:$0xff] %v2851
      %2868 = vst [vmem:[%s464 + $0x40] sm:$0xff] %v2852
      %2869 = vst [vmem:[%s464 + $0x48] sm:$0xff] %v2853
      %2870 = vst [vmem:[%s464 + $0x50] sm:$0xff] %v2854
      %2871 = vst [vmem:[%s464 + $0x58] sm:$0xff] %v2855
      %2872 = vst [vmem:[%s464 + $0x60] sm:$0xff] %v2856
      %2873 = vst [vmem:[%s464 + $0x68] sm:$0xff] %v2857
      %2874 = vst [vmem:[%s464 + $0x70] sm:$0xff] %v2858
      %2875 = vst [vmem:[%s464 + $0x78] sm:$0xff] %v2859
      %s2876 = smul.u32 4, %s23
      %p2877 = scmp.lt.s32.totalorder %s2876, 7
      %s2878 = scalar_select %p2877, %s2876, 7
      %s2879 = smul.addr %s2878, 4
      %s2880 = smul.addr %s2879, 8
      %s2881 = scalar_lea.vmem %s8, %s2880
      // Predicated region
      $region57: #{transformer_forward.2} parent=51 // pred_check
        %p2882 = pneg %p257
      $region58: #{transformer_forward.2} parent=51 // pred_check_branch
        %2884 = sbr.rel (%p2882) target = $region60
      $region59: #{transformer_forward.2} parent=51 // pred_region
        %s2885 = smul.u32 4, %s23
      $region60: #{transformer_forward.2} parent=51 // pred_fallthru
        _
    $region52: #{transformer_forward.2} parent=5 // pred_fallthru
      _
    %p2886 = scmp.le.s32.totalorder 2, %s14
    // Predicated region
    $region61: #{transformer_forward.2} parent=5 // pred_check
      %p2887 = pneg %p2886
    $region62: #{transformer_forward.2} parent=5 // pred_check_branch
      %2889 = sbr.rel (%p2887) target = $region64
    $region63: #{transformer_forward.2} parent=5 // pred_region
      %s2890 = ssub.s32 %s14, 2
      // Predicated region
      $region65: #{transformer_forward.2} parent=63 // pred_check
        %p2891 = pneg %p263
      $region66: #{transformer_forward.2} parent=63 // pred_check_branch
        %2893 = sbr.rel (%p2891) target = $region68
      $region67: #{transformer_forward.2} parent=63 // pred_region
        %s2894 = smul.u32 4, %s25
        %p2895 = scmp.lt.s32.totalorder %s2894, 7
        %s2896 = scalar_select %p2895, %s2894, 7
        %s2897 = smul.addr %s2896, 4
        %s2898 = smul.addr %s2897, 8
        %s2899 = scalar_lea.vmem %s8, %s2898
      $region68: #{transformer_forward.2} parent=63 // pred_fallthru
        _
    $region64: #{transformer_forward.2} parent=5 // pred_fallthru
      _
  $region6: #{transformer_forward.2} parent=0 // loop_footer
    %s18 = sadd.s32 1, %s14
  $region7: #{transformer_forward.2} parent=0 // loop_footer_branch
    %13 = sbr.rel target = $region3
  $region8: #{transformer_forward.2} parent=0 // loop_exit
    _

</llo_original>
